<compile_context>
chip_gen: v5e
topology: v5e:2x2
jax: 0.10.0
libtpu: 0.0.40
codegen_flags: <defaults>
</compile_context>

<pallas_src>
import math
import functools

import jax
import jax.numpy as jnp
from jax import lax
from jax.experimental import pallas as pl
from jax.experimental.pallas import tpu as pltpu

NUM_GROUPS = 32
EPS = 1e-6


# ---------------------------------------------------------------------------
# Pass 1: GroupNorm statistics -> per-batch per-channel affine (scale, shift)
# ---------------------------------------------------------------------------
def _gn_stats_kernel(
    memb_ref,    # (C, G)  channel->group one-hot
    membt_ref,   # (G, C)  its transpose (passed in; no in-kernel transpose)
    gamma_ref,   # (1, C)
    beta_ref,    # (1, C)
    x_ref,       # (TS, C) token tile for this (batch, tile)
    scale_ref,   # (1, C)  out: gamma * inv_std   (broadcast to channels)
    shift_ref,   # (1, C)  out: beta - mean * scale
    sum_sc,      # (1, C)  VMEM scratch accumulator
    sq_sc,       # (1, C)  VMEM scratch accumulator
    *,
    n_per_group: float,
):
    t = pl.program_id(1)

    @pl.when(t == 0)
    def _():
        sum_sc[...] = jnp.zeros_like(sum_sc)
        sq_sc[...] = jnp.zeros_like(sq_sc)

    x = x_ref[...].astype(jnp.float32)                       # (TS, C)
    sum_sc[...] += jnp.sum(x, axis=0, keepdims=True)
    sq_sc[...] += jnp.sum(x * x, axis=0, keepdims=True)

    @pl.when(t == pl.num_programs(1) - 1)
    def _():
        m = memb_ref[...]                                     # (C, G)
        inv_n = 1.0 / n_per_group
        gsum = jnp.dot(sum_sc[...], m, preferred_element_type=jnp.float32)   # (1, G)
        gsq = jnp.dot(sq_sc[...], m, preferred_element_type=jnp.float32)     # (1, G)
        mean_g = gsum * inv_n
        # clamp: E[x^2]-E[x]^2 can go slightly negative from cancellation
        var_g = jnp.maximum(gsq * inv_n - mean_g * mean_g, 0.0)
        inv_g = lax.rsqrt(var_g + EPS)
        mean_c = jnp.dot(mean_g, membt_ref[...], preferred_element_type=jnp.float32)  # (1, C)
        inv_c = jnp.dot(inv_g, membt_ref[...], preferred_element_type=jnp.float32)    # (1, C)
        sc = inv_c * gamma_ref[...]
        scale_ref[...] = sc
        shift_ref[...] = beta_ref[...] - mean_c * sc


# ---------------------------------------------------------------------------
# Pass 2: q/k/v projections + SDPA + proj_out + residual, tiled over Q
# ---------------------------------------------------------------------------
def _attn_kernel(
    xf_ref,      # (HW, C) full token block for this batch (f32) -- K/V source
    x_ref,       # (TQ, C) query-tile token block (f32)
    scale_ref,   # (1, C)  GroupNorm affine scale (f32)
    shift_ref,   # (1, C)  GroupNorm affine shift (f32)
    wq_ref, bq_ref,   # (C, C) bf16 (pre-scaled by 1/sqrt(C)), (1, C) f32 (pre-scaled)
    wk_ref, bk_ref,   # (C, C) bf16, (1, C) f32
    wv_ref, bv_ref,   # (C, C) bf16, (1, C) f32
    wo_ref, bo_ref,   # (C, C) bf16, (1, C) f32
    o_ref,       # (TQ, C) output
    k_sc,        # (HW, C) bf16 VMEM scratch (resident across query tiles)
    v_sc,        # (HW, C) bf16 VMEM scratch
):
    scale = scale_ref[...]
    shift = shift_ref[...]

    # Build full K / V once per batch element (first query tile), keep resident.
    @pl.when(pl.program_id(1) == 0)
    def _():
        hf = (xf_ref[...].astype(jnp.float32) * scale + shift).astype(jnp.bfloat16)
        k = jnp.dot(hf, wk_ref[...], preferred_element_type=jnp.float32) + bk_ref[...]
        v = jnp.dot(hf, wv_ref[...], preferred_element_type=jnp.float32) + bv_ref[...]
        k_sc[...] = k.astype(jnp.bfloat16)
        v_sc[...] = v.astype(jnp.bfloat16)

    # Query tile.
    x = x_ref[...].astype(jnp.float32)                        # (TQ, C)
    hq = (x * scale + shift).astype(jnp.bfloat16)
    # wq/bq already folded with 1/sqrt(C) in the wrapper.
    q = jnp.dot(hq, wq_ref[...], preferred_element_type=jnp.float32) + bq_ref[...]

    # scores: contract channel dim of q and k directly (no k.T materialization)
    s = lax.dot_general(
        q.astype(jnp.bfloat16), k_sc[...],
        dimension_numbers=(((1,), (1,)), ((), ())),
        preferred_element_type=jnp.float32,
    )                                                         # (TQ, HW), f32

    # softmax in f32
    s_max = jnp.max(s, axis=-1, keepdims=True)
    p = jnp.exp(s - s_max)
    denom = jnp.sum(p, axis=-1, keepdims=True)
    attn = (p * pl.reciprocal(denom, approx=True)).astype(jnp.bfloat16)

    o = jnp.dot(attn, v_sc[...], preferred_element_type=jnp.float32)      # (TQ, C)
    y = jnp.dot(o.astype(jnp.bfloat16), wo_ref[...],
                preferred_element_type=jnp.float32) + bo_ref[...]
    o_ref[...] = (x + y).astype(o_ref.dtype)


# ---------------------------------------------------------------------------
# Wrapper
# ---------------------------------------------------------------------------
def attn_block_pallas(x_nchw, params, *, tq=128, ts=256):
    """x_nchw: (B, C, H, W) float32. Returns (B, C, H, W)."""
    b, c, h, w = x_nchw.shape
    hw = h * w
    g = NUM_GROUPS
    assert c % g == 0, "GroupNorm requires C % 32 == 0"
    assert c % 128 == 0, "keep C lane-dense (pad in production otherwise)"

    tq = min(tq, hw)
    ts = min(ts, hw)
    assert hw % tq == 0 and hw % ts == 0 and tq % 8 == 0 and ts % 8 == 0

    # NCHW -> (B, HW, C)   (matches the `b c h w -> b (h w) c` rearrange)
    x_tok = jnp.transpose(x_nchw.reshape(b, c, hw), (0, 2, 1)).astype(jnp.float32)

    # Channel -> group one-hot membership (and its transpose, precomputed).
    memb = (jnp.arange(c)[:, None] // (c // g) == jnp.arange(g)[None, :]).astype(
        jnp.float32
    )
    memb_t = jnp.transpose(memb)

    gamma = params["norm_w"].reshape(1, c).astype(jnp.float32)
    beta = params["norm_b"].reshape(1, c).astype(jnp.float32)

    # ---- pass 1: GroupNorm affine (per batch, per channel) ----------------
    n_per_group = float(hw * (c // g))
    stats_kernel = functools.partial(_gn_stats_kernel, n_per_group=n_per_group)

    scale_c, shift_c = pl.pallas_call(
        stats_kernel,
        out_shape=(
            jax.ShapeDtypeStruct((b, 1, c), jnp.float32),
            jax.ShapeDtypeStruct((b, 1, c), jnp.float32),
        ),
        grid_spec=pltpu.PrefetchScalarGridSpec(
            num_scalar_prefetch=0,
            grid=(b, hw // ts),
            in_specs=[
                pl.BlockSpec((c, g), lambda i, t: (0, 0)),
                pl.BlockSpec((g, c), lambda i, t: (0, 0)),
                pl.BlockSpec((1, c), lambda i, t: (0, 0)),
                pl.BlockSpec((1, c), lambda i, t: (0, 0)),
                pl.BlockSpec((pl.Squeezed(), ts, c), lambda i, t: (i, t, 0)),
            ],
            out_specs=[
                pl.BlockSpec((pl.Squeezed(), 1, c), lambda i, t: (i, 0, 0)),
                pl.BlockSpec((pl.Squeezed(), 1, c), lambda i, t: (i, 0, 0)),
            ],
            scratch_shapes=[
                pltpu.VMEM((1, c), jnp.float32),
                pltpu.VMEM((1, c), jnp.float32),
            ],
        ),
        compiler_params=pltpu.CompilerParams(
            dimension_semantics=("parallel", "arbitrary"),
        ),
    )(memb, memb_t, gamma, beta, x_tok)

    # ---- weight prep: transpose to (C_in, C_out), bf16 for the MXU ---------
    def wmat(key):
        return jnp.transpose(params[key].reshape(c, c), (1, 0))

    inv_sqrt_c = 1.0 / math.sqrt(c)
    wq = (wmat("q_w") * inv_sqrt_c).astype(jnp.bfloat16)       # fold 1/sqrt(C)
    bq = (params["q_b"].reshape(1, c) * inv_sqrt_c).astype(jnp.float32)
    wk = wmat("k_w").astype(jnp.bfloat16)
    bk = params["k_b"].reshape(1, c).astype(jnp.float32)
    wv = wmat("v_w").astype(jnp.bfloat16)
    bv = params["v_b"].reshape(1, c).astype(jnp.float32)
    wo = wmat("proj_w").astype(jnp.bfloat16)
    bo = params["proj_b"].reshape(1, c).astype(jnp.float32)

    # Grid-invariant operands: single-buffered (never re-fetched).
    weight_spec = pl.BlockSpec((c, c), lambda i, qi: (0, 0),
                               pipeline_mode=pl.Buffered(1))
    bias_spec = pl.BlockSpec((1, c), lambda i, qi: (0, 0),
                             pipeline_mode=pl.Buffered(1))
    bvec_spec = pl.BlockSpec((pl.Squeezed(), 1, c), lambda i, qi: (i, 0, 0))

    # ---- pass 2: attention, tiled over query tiles -------------------------
    out_tok = pl.pallas_call(
        _attn_kernel,
        out_shape=jax.ShapeDtypeStruct((b, hw, c), x_nchw.dtype),
        grid_spec=pltpu.PrefetchScalarGridSpec(
            num_scalar_prefetch=0,
            grid=(b, hw // tq),
            in_specs=[
                # full per-batch token block (K/V source) -- constant across qi,
                # so it is DMA'd only when the batch index changes.
                pl.BlockSpec((pl.Squeezed(), hw, c), lambda i, qi: (i, 0, 0)),
                # query tile
                pl.BlockSpec((pl.Squeezed(), tq, c), lambda i, qi: (i, qi, 0)),
                bvec_spec, bvec_spec,                          # scale, shift
                weight_spec, bias_spec,                        # wq, bq
                weight_spec, bias_spec,                        # wk, bk
                weight_spec, bias_spec,                        # wv, bv
                weight_spec, bias_spec,                        # wo, bo
            ],
            out_specs=pl.BlockSpec((pl.Squeezed(), tq, c), lambda i, qi: (i, qi, 0)),
            scratch_shapes=[
                pltpu.VMEM((hw, c), jnp.bfloat16),             # K (resident)
                pltpu.VMEM((hw, c), jnp.bfloat16),             # V (resident)
            ],
        ),
        compiler_params=pltpu.CompilerParams(
            # batch axis parallel (v7x megacore); query-tile axis carries the
            # resident K/V scratch dependency -> must stay "arbitrary".
            dimension_semantics=("parallel", "arbitrary"),
            vmem_limit_bytes=64 * 1024 * 1024,
        ),
    )(x_tok, x_tok, scale_c, shift_c, wq, bq, wk, bk, wv, bv, wo, bo)

    # (B, HW, C) -> NCHW
    return jnp.transpose(out_tok, (0, 2, 1)).reshape(b, c, h, w)


# ---------------------------------------------------------------------------
# Pure-JAX (f32) reference matching the PyTorch forward
# ---------------------------------------------------------------------------
def attn_block_ref(x_nchw, params):
    b, c, h, w = x_nchw.shape
    g = NUM_GROUPS
    xr = x_nchw.reshape(b, g, c // g, h, w)
    mean = jnp.mean(xr, axis=(2, 3, 4), keepdims=True)
    var = jnp.mean((xr - mean) ** 2, axis=(2, 3, 4), keepdims=True)
    hn = ((xr - mean) / jnp.sqrt(var + EPS)).reshape(b, c, h, w)
    hn = hn * params["norm_w"][None, :, None, None] + params["norm_b"][None, :, None, None]

    def conv1x1(t, wkey, bkey):
        wm = params[wkey].reshape(c, c)
        tk = jnp.transpose(t.reshape(b, c, h * w), (0, 2, 1))     # (B, HW, C_in)
        return jnp.einsum("btc,oc->bto", tk, wm) + params[bkey][None, None, :]

    q = conv1x1(hn, "q_w", "q_b")
    k = conv1x1(hn, "k_w", "k_b")
    v = conv1x1(hn, "v_w", "v_b")
    s = jnp.einsum("bqc,bkc->bqk", q, k) / math.sqrt(c)
    p = jax.nn.softmax(s, axis=-1)
    o = jnp.einsum("bqk,bkc->bqc", p, v)
    o_nchw = jnp.transpose(o, (0, 2, 1)).reshape(b, c, h, w)
    wm = params["proj_w"].reshape(c, c)
    proj = jnp.einsum("bchw,oc->bohw", o_nchw, wm) + params["proj_b"][None, :, None, None]
    return x_nchw + proj


if __name__ == "__main__":
    # C multiple of 32 (GroupNorm) and of 128 (lane-dense MXU tiles).
    B, C, H, W = 2, 128, 16, 16
    key = jax.random.PRNGKey(0)
    keys = jax.random.split(key, 12)

    x = jax.random.normal(keys[0], (B, C, H, W), dtype=jnp.float32)

    params = {
        "norm_w": 1.0 + 0.1 * jax.random.normal(keys[1], (C,), jnp.float32),
        "norm_b": 0.1 * jax.random.normal(keys[2], (C,), jnp.float32),
        "q_w": 0.1 * jax.random.normal(keys[3], (C, C, 1, 1), jnp.float32),
        "q_b": 0.1 * jax.random.normal(keys[4], (C,), jnp.float32),
        "k_w": 0.1 * jax.random.normal(keys[5], (C, C, 1, 1), jnp.float32),
        "k_b": 0.1 * jax.random.normal(keys[6], (C,), jnp.float32),
        "v_w": 0.1 * jax.random.normal(keys[7], (C, C, 1, 1), jnp.float32),
        "v_b": 0.1 * jax.random.normal(keys[8], (C,), jnp.float32),
        "proj_w": 0.1 * jax.random.normal(keys[9], (C, C, 1, 1), jnp.float32),
        "proj_b": 0.1 * jax.random.normal(keys[10], (C,), jnp.float32),
    }

    out = jax.jit(attn_block_pallas)(x, params)
    out = jax.block_until_ready(out)

    ref = attn_block_ref(x, params)
    assert out.shape == (B, C, H, W)
    # bf16 MXU operands (f32 accumulation) -> ~1e-2-level agreement vs f32 ref.
    max_err = float(jnp.max(jnp.abs(out - ref)))
    assert jnp.allclose(out, ref, atol=5e-2, rtol=5e-2), max_err
    print("KERNEL_OK")
</pallas_src>

<mosaic_0001>
module attributes {stable_mosaic.version = 11 : i64} {
  func.func @_gn_stats_kernel(%arg0: i32, %arg1: i32, %arg2: memref<128x32xf32, #tpu.memory_space<vmem>>, %arg3: memref<32x128xf32, #tpu.memory_space<vmem>>, %arg4: memref<1x128xf32, #tpu.memory_space<vmem>>, %arg5: memref<1x128xf32, #tpu.memory_space<vmem>>, %arg6: memref<1x256x128xf32, #tpu.memory_space<vmem>>, %arg7: memref<1x1x128xf32, #tpu.memory_space<vmem>>, %arg8: memref<1x1x128xf32, #tpu.memory_space<vmem>>, %arg9: memref<1x128xf32, #tpu.memory_space<vmem>>, %arg10: memref<1x128xf32, #tpu.memory_space<vmem>>) attributes {dimension_semantics = [#tpu.dimension_semantics<parallel>, #tpu.dimension_semantics<arbitrary>], iteration_bounds = array<i64: 2, 1>, scalar_prefetch = 0 : i64, scratch_operands = 2 : i64, tpu.core_type = #tpu.core_type<tc>, window_params = [{pipeline_mode = #tpu.pipeline_mode<synchronous>, transform_indices = @transform_0, window_bounds = array<i64: 128, 32>}, {pipeline_mode = #tpu.pipeline_mode<synchronous>, transform_indices = @transform_1, window_bounds = array<i64: 32, 128>}, {pipeline_mode = #tpu.pipeline_mode<synchronous>, transform_indices = @transform_2, window_bounds = array<i64: 1, 128>}, {pipeline_mode = #tpu.pipeline_mode<synchronous>, transform_indices = @transform_3, window_bounds = array<i64: 1, 128>}, {transform_indices = @transform_4, window_bounds = array<i64: 1, 256, 128>}, {transform_indices = @transform_5, window_bounds = array<i64: 1, 1, 128>}, {transform_indices = @transform_6, window_bounds = array<i64: 1, 1, 128>}]} {
    %c0_i32 = arith.constant 0 : i32
    %0 = arith.cmpi eq, %arg1, %c0_i32 : i32
    %1 = arith.extui %0 : i1 to i32
    %c0_i32_0 = arith.constant 0 : i32
    %2 = arith.cmpi ne, %1, %c0_i32_0 : i32
    scf.if %2 {
      %cst_14 = arith.constant 0.000000e+00 : f32
      %19 = vector.broadcast %cst_14 : f32 to vector<1x128xf32>
      %c0_15 = arith.constant 0 : index
      %c0_16 = arith.constant 0 : index
      %20 = vector.load %arg9[%c0_15, %c0_16] : memref<1x128xf32, #tpu.memory_space<vmem>>, vector<1x128xf32>
      tpu.vector_store %arg9[%c0_15, %c0_16], %19 {strides = array<i32>} : memref<1x128xf32, #tpu.memory_space<vmem>>, vector<1x128xf32>,
      %cst_17 = arith.constant 0.000000e+00 : f32
      %21 = vector.broadcast %cst_17 : f32 to vector<1x128xf32>
      %c0_18 = arith.constant 0 : index
      %c0_19 = arith.constant 0 : index
      %22 = vector.load %arg10[%c0_18, %c0_19] : memref<1x128xf32, #tpu.memory_space<vmem>>, vector<1x128xf32>
      tpu.vector_store %arg10[%c0_18, %c0_19], %21 {strides = array<i32>} : memref<1x128xf32, #tpu.memory_space<vmem>>, vector<1x128xf32>,
    } else {
    }
    %c0 = arith.constant 0 : index
    %c0_1 = arith.constant 0 : index
    %c0_2 = arith.constant 0 : index
    %3 = vector.load %arg6[%c0, %c0_1, %c0_2] : memref<1x256x128xf32, #tpu.memory_space<vmem>>, vector<1x256x128xf32>
    %4 = vector.shape_cast %3 : vector<1x256x128xf32> to vector<256x128xf32>
    %c0_3 = arith.constant 0 : index
    %c0_4 = arith.constant 0 : index
    %5 = vector.load %arg9[%c0_3, %c0_4] : memref<1x128xf32, #tpu.memory_space<vmem>>, vector<1x128xf32>
    %cst = arith.constant dense<0.000000e+00> : vector<128xf32>
    %6 = vector.multi_reduction <add>, %4, %cst [0] : vector<256x128xf32> to vector<128xf32>
    %7 = vector.shape_cast %6 : vector<128xf32> to vector<1x128xf32>
    %8 = arith.addf %5, %7 : vector<1x128xf32>
    %c0_5 = arith.constant 0 : index
    %c0_6 = arith.constant 0 : index
    %9 = vector.load %arg9[%c0_5, %c0_6] : memref<1x128xf32, #tpu.memory_space<vmem>>, vector<1x128xf32>
    tpu.vector_store %arg9[%c0_5, %c0_6], %8 {strides = array<i32>} : memref<1x128xf32, #tpu.memory_space<vmem>>, vector<1x128xf32>,
    %c0_7 = arith.constant 0 : index
    %c0_8 = arith.constant 0 : index
    %10 = vector.load %arg10[%c0_7, %c0_8] : memref<1x128xf32, #tpu.memory_space<vmem>>, vector<1x128xf32>
    %11 = arith.mulf %4, %4 : vector<256x128xf32>
    %cst_9 = arith.constant dense<0.000000e+00> : vector<128xf32>
    %12 = vector.multi_reduction <add>, %11, %cst_9 [0] : vector<256x128xf32> to vector<128xf32>
    %13 = vector.shape_cast %12 : vector<128xf32> to vector<1x128xf32>
    %14 = arith.addf %10, %13 : vector<1x128xf32>
    %c0_10 = arith.constant 0 : index
    %c0_11 = arith.constant 0 : index
    %15 = vector.load %arg10[%c0_10, %c0_11] : memref<1x128xf32, #tpu.memory_space<vmem>>, vector<1x128xf32>
    tpu.vector_store %arg10[%c0_10, %c0_11], %14 {strides = array<i32>} : memref<1x128xf32, #tpu.memory_space<vmem>>, vector<1x128xf32>,
    %c0_i32_12 = arith.constant 0 : i32
    %16 = arith.cmpi eq, %arg1, %c0_i32_12 : i32
    %17 = arith.extui %16 : i1 to i32
    %c0_i32_13 = arith.constant 0 : i32
    %18 = arith.cmpi ne, %17, %c0_i32_13 : i32
    scf.if %18 {
      %c0_14 = arith.constant 0 : index
      %c0_15 = arith.constant 0 : index
      %19 = vector.load %arg2[%c0_14, %c0_15] : memref<128x32xf32, #tpu.memory_space<vmem>>, vector<128x32xf32>
      %c0_16 = arith.constant 0 : index
      %c0_17 = arith.constant 0 : index
      %20 = vector.load %arg9[%c0_16, %c0_17] : memref<1x128xf32, #tpu.memory_space<vmem>>, vector<1x128xf32>
      %cst_18 = arith.constant dense<0.000000e+00> : vector<1x32xf32>
      %21 = tpu.matmul %20, %19, %cst_18 {dimension_numbers = #tpu.dot_dimension_numbers<[1], [0], [0], [1], [0, 0, 1, 1], [], []>} : vector<1x128xf32>, vector<128x32xf32>, vector<1x32xf32> -> vector<1x32xf32>
      %c0_19 = arith.constant 0 : index
      %c0_20 = arith.constant 0 : index
      %22 = vector.load %arg10[%c0_19, %c0_20] : memref<1x128xf32, #tpu.memory_space<vmem>>, vector<1x128xf32>
      %cst_21 = arith.constant dense<0.000000e+00> : vector<1x32xf32>
      %23 = tpu.matmul %22, %19, %cst_21 {dimension_numbers = #tpu.dot_dimension_numbers<[1], [0], [0], [1], [0, 0, 1, 1], [], []>} : vector<1x128xf32>, vector<128x32xf32>, vector<1x32xf32> -> vector<1x32xf32>
      %cst_22 = arith.constant 9.765625E-4 : f32
      %24 = vector.broadcast %cst_22 : f32 to vector<1x32xf32>
      %25 = arith.mulf %21, %24 : vector<1x32xf32>
      %cst_23 = arith.constant 9.765625E-4 : f32
      %26 = vector.broadcast %cst_23 : f32 to vector<1x32xf32>
      %27 = arith.mulf %23, %26 : vector<1x32xf32>
      %28 = arith.mulf %25, %25 : vector<1x32xf32>
      %29 = arith.subf %27, %28 : vector<1x32xf32>
      %cst_24 = arith.constant 0.000000e+00 : f32
      %30 = vector.broadcast %cst_24 : f32 to vector<1x32xf32>
      %31 = arith.maximumf %29, %30 : vector<1x32xf32>
      %cst_25 = arith.constant 9.99999997E-7 : f32
      %32 = vector.broadcast %cst_25 : f32 to vector<1x32xf32>
      %33 = arith.addf %31, %32 : vector<1x32xf32>
      %34 = math.rsqrt %33 : vector<1x32xf32>
      %c0_26 = arith.constant 0 : index
      %c0_27 = arith.constant 0 : index
      %35 = vector.load %arg3[%c0_26, %c0_27] : memref<32x128xf32, #tpu.memory_space<vmem>>, vector<32x128xf32>
      %cst_28 = arith.constant dense<0.000000e+00> : vector<1x128xf32>
      %36 = tpu.matmul %25, %35, %cst_28 {dimension_numbers = #tpu.dot_dimension_numbers<[1], [0], [0], [1], [0, 0, 1, 1], [], []>} : vector<1x32xf32>, vector<32x128xf32>, vector<1x128xf32> -> vector<1x128xf32>
      %c0_29 = arith.constant 0 : index
      %c0_30 = arith.constant 0 : index
      %37 = vector.load %arg3[%c0_29, %c0_30] : memref<32x128xf32, #tpu.memory_space<vmem>>, vector<32x128xf32>
      %cst_31 = arith.constant dense<0.000000e+00> : vector<1x128xf32>
      %38 = tpu.matmul %34, %37, %cst_31 {dimension_numbers = #tpu.dot_dimension_numbers<[1], [0], [0], [1], [0, 0, 1, 1], [], []>} : vector<1x32xf32>, vector<32x128xf32>, vector<1x128xf32> -> vector<1x128xf32>
      %c0_32 = arith.constant 0 : index
      %c0_33 = arith.constant 0 : index
      %39 = vector.load %arg4[%c0_32, %c0_33] : memref<1x128xf32, #tpu.memory_space<vmem>>, vector<1x128xf32>
      %40 = arith.mulf %38, %39 : vector<1x128xf32>
      %c0_34 = arith.constant 0 : index
      %c0_35 = arith.constant 0 : index
      %c0_36 = arith.constant 0 : index
      %41 = vector.load %arg7[%c0_34, %c0_35, %c0_36] : memref<1x1x128xf32, #tpu.memory_space<vmem>>, vector<1x1x128xf32>
      %42 = vector.shape_cast %41 : vector<1x1x128xf32> to vector<1x128xf32>
      %43 = vector.shape_cast %40 : vector<1x128xf32> to vector<1x1x128xf32>
      tpu.vector_store %arg7[%c0_34, %c0_35, %c0_36], %43 {strides = array<i32>} : memref<1x1x128xf32, #tpu.memory_space<vmem>>, vector<1x1x128xf32>,
      %c0_37 = arith.constant 0 : index
      %c0_38 = arith.constant 0 : index
      %44 = vector.load %arg5[%c0_37, %c0_38] : memref<1x128xf32, #tpu.memory_space<vmem>>, vector<1x128xf32>
      %45 = arith.mulf %36, %40 : vector<1x128xf32>
      %46 = arith.subf %44, %45 : vector<1x128xf32>
      %c0_39 = arith.constant 0 : index
      %c0_40 = arith.constant 0 : index
      %c0_41 = arith.constant 0 : index
      %47 = vector.load %arg8[%c0_39, %c0_40, %c0_41] : memref<1x1x128xf32, #tpu.memory_space<vmem>>, vector<1x1x128xf32>
      %48 = vector.shape_cast %47 : vector<1x1x128xf32> to vector<1x128xf32>
      %49 = vector.shape_cast %46 : vector<1x128xf32> to vector<1x1x128xf32>
      tpu.vector_store %arg8[%c0_39, %c0_40, %c0_41], %49 {strides = array<i32>} : memref<1x1x128xf32, #tpu.memory_space<vmem>>, vector<1x1x128xf32>,
    } else {
    }
    return
  }
  func.func @transform_0(%arg0: i32, %arg1: i32) -> (i32, i32) {
    %c0_i32 = arith.constant 0 : i32
    %c0_i32_0 = arith.constant 0 : i32
    %c0_i32_1 = arith.constant 0 : i32
    return %c0_i32, %c0_i32_0 : i32, i32
  }
  func.func @transform_1(%arg0: i32, %arg1: i32) -> (i32, i32) {
    %c0_i32 = arith.constant 0 : i32
    %c0_i32_0 = arith.constant 0 : i32
    %c0_i32_1 = arith.constant 0 : i32
    return %c0_i32, %c0_i32_0 : i32, i32
  }
  func.func @transform_2(%arg0: i32, %arg1: i32) -> (i32, i32) {
    %c0_i32 = arith.constant 0 : i32
    %c0_i32_0 = arith.constant 0 : i32
    %c0_i32_1 = arith.constant 0 : i32
    return %c0_i32, %c0_i32_0 : i32, i32
  }
  func.func @transform_3(%arg0: i32, %arg1: i32) -> (i32, i32) {
    %c0_i32 = arith.constant 0 : i32
    %c0_i32_0 = arith.constant 0 : i32
    %c0_i32_1 = arith.constant 0 : i32
    return %c0_i32, %c0_i32_0 : i32, i32
  }
  func.func @transform_4(%arg0: i32, %arg1: i32) -> (i32, i32, i32) {
    %c0_i32 = arith.constant 0 : i32
    %c0_i32_0 = arith.constant 0 : i32
    return %arg0, %arg1, %c0_i32 : i32, i32, i32
  }
  func.func @transform_5(%arg0: i32, %arg1: i32) -> (i32, i32, i32) {
    %c0_i32 = arith.constant 0 : i32
    %c0_i32_0 = arith.constant 0 : i32
    %c0_i32_1 = arith.constant 0 : i32
    return %arg0, %c0_i32, %c0_i32_0 : i32, i32, i32
  }
  func.func @transform_6(%arg0: i32, %arg1: i32) -> (i32, i32, i32) {
    %c0_i32 = arith.constant 0 : i32
    %c0_i32_0 = arith.constant 0 : i32
    %c0_i32_1 = arith.constant 0 : i32
    return %arg0, %c0_i32, %c0_i32_0 : i32, i32, i32
  }
}

module attributes {stable_mosaic.version = 11 : i64} {
  func.func @_attn_kernel(%arg0: i32, %arg1: i32, %arg2: memref<1x256x128xf32, #tpu.memory_space<vmem>>, %arg3: memref<1x128x128xf32, #tpu.memory_space<vmem>>, %arg4: memref<1x1x128xf32, #tpu.memory_space<vmem>>, %arg5: memref<1x1x128xf32, #tpu.memory_space<vmem>>, %arg6: memref<128x128xbf16, #tpu.memory_space<vmem>>, %arg7: memref<1x128xf32, #tpu.memory_space<vmem>>, %arg8: memref<128x128xbf16, #tpu.memory_space<vmem>>, %arg9: memref<1x128xf32, #tpu.memory_space<vmem>>, %arg10: memref<128x128xbf16, #tpu.memory_space<vmem>>, %arg11: memref<1x128xf32, #tpu.memory_space<vmem>>, %arg12: memref<128x128xbf16, #tpu.memory_space<vmem>>, %arg13: memref<1x128xf32, #tpu.memory_space<vmem>>, %arg14: memref<1x128x128xf32, #tpu.memory_space<vmem>>, %arg15: memref<256x128xbf16, #tpu.memory_space<vmem>>, %arg16: memref<256x128xbf16, #tpu.memory_space<vmem>>) attributes {dimension_semantics = [#tpu.dimension_semantics<parallel>, #tpu.dimension_semantics<arbitrary>], iteration_bounds = array<i64: 2, 2>, scalar_prefetch = 0 : i64, scratch_operands = 2 : i64, tpu.core_type = #tpu.core_type<tc>, window_params = [{transform_indices = @transform_0, window_bounds = array<i64: 1, 256, 128>}, {transform_indices = @transform_1, window_bounds = array<i64: 1, 128, 128>}, {transform_indices = @transform_2, window_bounds = array<i64: 1, 1, 128>}, {transform_indices = @transform_3, window_bounds = array<i64: 1, 1, 128>}, {pipeline_mode = #tpu.pipeline_mode<synchronous>, transform_indices = @transform_4, window_bounds = array<i64: 128, 128>}, {pipeline_mode = #tpu.pipeline_mode<synchronous>, transform_indices = @transform_5, window_bounds = array<i64: 1, 128>}, {pipeline_mode = #tpu.pipeline_mode<synchronous>, transform_indices = @transform_6, window_bounds = array<i64: 128, 128>}, {pipeline_mode = #tpu.pipeline_mode<synchronous>, transform_indices = @transform_7, window_bounds = array<i64: 1, 128>}, {pipeline_mode = #tpu.pipeline_mode<synchronous>, transform_indices = @transform_8, window_bounds = array<i64: 128, 128>}, {pipeline_mode = #tpu.pipeline_mode<synchronous>, transform_indices = @transform_9, window_bounds = array<i64: 1, 128>}, {pipeline_mode = #tpu.pipeline_mode<synchronous>, transform_indices = @transform_10, window_bounds = array<i64: 128, 128>}, {pipeline_mode = #tpu.pipeline_mode<synchronous>, transform_indices = @transform_11, window_bounds = array<i64: 1, 128>}, {transform_indices = @transform_12, window_bounds = array<i64: 1, 128, 128>}]} {
    %c0 = arith.constant 0 : index
    %c0_0 = arith.constant 0 : index
    %c0_1 = arith.constant 0 : index
    %0 = vector.load %arg4[%c0, %c0_0, %c0_1] : memref<1x1x128xf32, #tpu.memory_space<vmem>>, vector<1x1x128xf32>
    %1 = vector.shape_cast %0 : vector<1x1x128xf32> to vector<1x128xf32>
    %c0_2 = arith.constant 0 : index
    %c0_3 = arith.constant 0 : index
    %c0_4 = arith.constant 0 : index
    %2 = vector.load %arg5[%c0_2, %c0_3, %c0_4] : memref<1x1x128xf32, #tpu.memory_space<vmem>>, vector<1x1x128xf32>
    %3 = vector.shape_cast %2 : vector<1x1x128xf32> to vector<1x128xf32>
    %c0_i32 = arith.constant 0 : i32
    %4 = arith.cmpi eq, %arg1, %c0_i32 : i32
    %5 = arith.extui %4 : i1 to i32
    %c0_i32_5 = arith.constant 0 : i32
    %6 = arith.cmpi ne, %5, %c0_i32_5 : i32
    scf.if %6 {
      %c0_29 = arith.constant 0 : index
      %c0_30 = arith.constant 0 : index
      %c0_31 = arith.constant 0 : index
      %45 = vector.load %arg2[%c0_29, %c0_30, %c0_31] : memref<1x256x128xf32, #tpu.memory_space<vmem>>, vector<1x256x128xf32>
      %46 = vector.shape_cast %45 : vector<1x256x128xf32> to vector<256x128xf32>
      %47 = vector.broadcast %1 : vector<1x128xf32> to vector<256x128xf32>
      %48 = arith.mulf %46, %47 : vector<256x128xf32>
      %49 = vector.broadcast %3 : vector<1x128xf32> to vector<256x128xf32>
      %50 = arith.addf %48, %49 : vector<256x128xf32>
      %51 = arith.truncf %50 : vector<256x128xf32> to vector<256x128xbf16>
      %c0_32 = arith.constant 0 : index
      %c0_33 = arith.constant 0 : index
      %52 = vector.load %arg8[%c0_32, %c0_33] : memref<128x128xbf16, #tpu.memory_space<vmem>>, vector<128x128xbf16>
      %cst_34 = arith.constant dense<0.000000e+00> : vector<256x128xf32>
      %53 = tpu.matmul %51, %52, %cst_34 {dimension_numbers = #tpu.dot_dimension_numbers<[1], [0], [0], [1], [0, 0, 1, 1], [], []>} : vector<256x128xbf16>, vector<128x128xbf16>, vector<256x128xf32> -> vector<256x128xf32>
      %c0_35 = arith.constant 0 : index
      %c0_36 = arith.constant 0 : index
      %54 = vector.load %arg9[%c0_35, %c0_36] : memref<1x128xf32, #tpu.memory_space<vmem>>, vector<1x128xf32>
      %55 = vector.broadcast %54 : vector<1x128xf32> to vector<256x128xf32>
      %56 = arith.addf %53, %55 : vector<256x128xf32>
      %c0_37 = arith.constant 0 : index
      %c0_38 = arith.constant 0 : index
      %57 = vector.load %arg10[%c0_37, %c0_38] : memref<128x128xbf16, #tpu.memory_space<vmem>>, vector<128x128xbf16>
      %cst_39 = arith.constant dense<0.000000e+00> : vector<256x128xf32>
      %58 = tpu.matmul %51, %57, %cst_39 {dimension_numbers = #tpu.dot_dimension_numbers<[1], [0], [0], [1], [0, 0, 1, 1], [], []>} : vector<256x128xbf16>, vector<128x128xbf16>, vector<256x128xf32> -> vector<256x128xf32>
      %c0_40 = arith.constant 0 : index
      %c0_41 = arith.constant 0 : index
      %59 = vector.load %arg11[%c0_40, %c0_41] : memref<1x128xf32, #tpu.memory_space<vmem>>, vector<1x128xf32>
      %60 = vector.broadcast %59 : vector<1x128xf32> to vector<256x128xf32>
      %61 = arith.addf %58, %60 : vector<256x128xf32>
      %62 = arith.truncf %56 : vector<256x128xf32> to vector<256x128xbf16>
      %c0_42 = arith.constant 0 : index
      %c0_43 = arith.constant 0 : index
      %63 = vector.load %arg15[%c0_42, %c0_43] : memref<256x128xbf16, #tpu.memory_space<vmem>>, vector<256x128xbf16>
      tpu.vector_store %arg15[%c0_42, %c0_43], %62 {strides = array<i32>} : memref<256x128xbf16, #tpu.memory_space<vmem>>, vector<256x128xbf16>,
      %64 = arith.truncf %61 : vector<256x128xf32> to vector<256x128xbf16>
      %c0_44 = arith.constant 0 : index
      %c0_45 = arith.constant 0 : index
      %65 = vector.load %arg16[%c0_44, %c0_45] : memref<256x128xbf16, #tpu.memory_space<vmem>>, vector<256x128xbf16>
      tpu.vector_store %arg16[%c0_44, %c0_45], %64 {strides = array<i32>} : memref<256x128xbf16, #tpu.memory_space<vmem>>, vector<256x128xbf16>,
    } else {
    }
    %c0_6 = arith.constant 0 : index
    %c0_7 = arith.constant 0 : index
    %c0_8 = arith.constant 0 : index
    %7 = vector.load %arg3[%c0_6, %c0_7, %c0_8] : memref<1x128x128xf32, #tpu.memory_space<vmem>>, vector<1x128x128xf32>
    %8 = vector.shape_cast %7 : vector<1x128x128xf32> to vector<128x128xf32>
    %9 = vector.broadcast %1 : vector<1x128xf32> to vector<128x128xf32>
    %10 = arith.mulf %8, %9 : vector<128x128xf32>
    %11 = vector.broadcast %3 : vector<1x128xf32> to vector<128x128xf32>
    %12 = arith.addf %10, %11 : vector<128x128xf32>
    %13 = arith.truncf %12 : vector<128x128xf32> to vector<128x128xbf16>
    %c0_9 = arith.constant 0 : index
    %c0_10 = arith.constant 0 : index
    %14 = vector.load %arg6[%c0_9, %c0_10] : memref<128x128xbf16, #tpu.memory_space<vmem>>, vector<128x128xbf16>
    %cst = arith.constant dense<0.000000e+00> : vector<128x128xf32>
    %15 = tpu.matmul %13, %14, %cst {dimension_numbers = #tpu.dot_dimension_numbers<[1], [0], [0], [1], [0, 0, 1, 1], [], []>} : vector<128x128xbf16>, vector<128x128xbf16>, vector<128x128xf32> -> vector<128x128xf32>
    %c0_11 = arith.constant 0 : index
    %c0_12 = arith.constant 0 : index
    %16 = vector.load %arg7[%c0_11, %c0_12] : memref<1x128xf32, #tpu.memory_space<vmem>>, vector<1x128xf32>
    %17 = vector.broadcast %16 : vector<1x128xf32> to vector<128x128xf32>
    %18 = arith.addf %15, %17 : vector<128x128xf32>
    %19 = arith.truncf %18 : vector<128x128xf32> to vector<128x128xbf16>
    %c0_13 = arith.constant 0 : index
    %c0_14 = arith.constant 0 : index
    %20 = vector.load %arg15[%c0_13, %c0_14] : memref<256x128xbf16, #tpu.memory_space<vmem>>, vector<256x128xbf16>
    %cst_15 = arith.constant dense<0.000000e+00> : vector<128x256xf32>
    %21 = tpu.matmul %19, %20, %cst_15 {dimension_numbers = #tpu.dot_dimension_numbers<[1], [1], [0], [0], [0, 0, 1, 0], [], []>} : vector<128x128xbf16>, vector<256x128xbf16>, vector<128x256xf32> -> vector<128x256xf32>
    %cst_16 = arith.constant dense<0xFF800000> : vector<128xf32>
    %22 = vector.multi_reduction <maximumf>, %21, %cst_16 [1] : vector<128x256xf32> to vector<128xf32>
    %23 = vector.shape_cast %22 : vector<128xf32> to vector<128x1xf32>
    %24 = vector.broadcast %23 : vector<128x1xf32> to vector<128x256xf32>
    %25 = arith.subf %21, %24 : vector<128x256xf32>
    %26 = math.exp %25 : vector<128x256xf32>
    %cst_17 = arith.constant dense<0.000000e+00> : vector<128xf32>
    %27 = vector.multi_reduction <add>, %26, %cst_17 [1] : vector<128x256xf32> to vector<128xf32>
    %28 = vector.shape_cast %27 : vector<128xf32> to vector<128x1xf32>
    %29 = tpu.reciprocal %28 {approx = true} : vector<128x1xf32> -> vector<128x1xf32>
    %30 = vector.broadcast %29 : vector<128x1xf32> to vector<128x256xf32>
    %31 = arith.mulf %26, %30 : vector<128x256xf32>
    %32 = arith.truncf %31 : vector<128x256xf32> to vector<128x256xbf16>
    %c0_18 = arith.constant 0 : index
    %c0_19 = arith.constant 0 : index
    %33 = vector.load %arg16[%c0_18, %c0_19] : memref<256x128xbf16, #tpu.memory_space<vmem>>, vector<256x128xbf16>
    %cst_20 = arith.constant dense<0.000000e+00> : vector<128x128xf32>
    %34 = tpu.matmul %32, %33, %cst_20 {dimension_numbers = #tpu.dot_dimension_numbers<[1], [0], [0], [1], [0, 0, 1, 1], [], []>} : vector<128x256xbf16>, vector<256x128xbf16>, vector<128x128xf32> -> vector<128x128xf32>
    %35 = arith.truncf %34 : vector<128x128xf32> to vector<128x128xbf16>
    %c0_21 = arith.constant 0 : index
    %c0_22 = arith.constant 0 : index
    %36 = vector.load %arg12[%c0_21, %c0_22] : memref<128x128xbf16, #tpu.memory_space<vmem>>, vector<128x128xbf16>
    %cst_23 = arith.constant dense<0.000000e+00> : vector<128x128xf32>
    %37 = tpu.matmul %35, %36, %cst_23 {dimension_numbers = #tpu.dot_dimension_numbers<[1], [0], [0], [1], [0, 0, 1, 1], [], []>} : vector<128x128xbf16>, vector<128x128xbf16>, vector<128x128xf32> -> vector<128x128xf32>
    %c0_24 = arith.constant 0 : index
    %c0_25 = arith.constant 0 : index
    %38 = vector.load %arg13[%c0_24, %c0_25] : memref<1x128xf32, #tpu.memory_space<vmem>>, vector<1x128xf32>
    %39 = vector.broadcast %38 : vector<1x128xf32> to vector<128x128xf32>
    %40 = arith.addf %37, %39 : vector<128x128xf32>
    %41 = arith.addf %8, %40 : vector<128x128xf32>
    %c0_26 = arith.constant 0 : index
    %c0_27 = arith.constant 0 : index
    %c0_28 = arith.constant 0 : index
    %42 = vector.load %arg14[%c0_26, %c0_27, %c0_28] : memref<1x128x128xf32, #tpu.memory_space<vmem>>, vector<1x128x128xf32>
    %43 = vector.shape_cast %42 : vector<1x128x128xf32> to vector<128x128xf32>
    %44 = vector.shape_cast %41 : vector<128x128xf32> to vector<1x128x128xf32>
    tpu.vector_store %arg14[%c0_26, %c0_27, %c0_28], %44 {strides = array<i32>} : memref<1x128x128xf32, #tpu.memory_space<vmem>>, vector<1x128x128xf32>,
    return
  }
  func.func @transform_0(%arg0: i32, %arg1: i32) -> (i32, i32, i32) {
    %c0_i32 = arith.constant 0 : i32
    %c0_i32_0 = arith.constant 0 : i32
    %c0_i32_1 = arith.constant 0 : i32
    return %arg0, %c0_i32, %c0_i32_0 : i32, i32, i32
  }
  func.func @transform_1(%arg0: i32, %arg1: i32) -> (i32, i32, i32) {
    %c0_i32 = arith.constant 0 : i32
    %c0_i32_0 = arith.constant 0 : i32
    return %arg0, %arg1, %c0_i32 : i32, i32, i32
  }
  func.func @transform_2(%arg0: i32, %arg1: i32) -> (i32, i32, i32) {
    %c0_i32 = arith.constant 0 : i32
    %c0_i32_0 = arith.constant 0 : i32
    %c0_i32_1 = arith.constant 0 : i32
    return %arg0, %c0_i32, %c0_i32_0 : i32, i32, i32
  }
  func.func @transform_3(%arg0: i32, %arg1: i32) -> (i32, i32, i32) {
    %c0_i32 = arith.constant 0 : i32
    %c0_i32_0 = arith.constant 0 : i32
    %c0_i32_1 = arith.constant 0 : i32
    return %arg0, %c0_i32, %c0_i32_0 : i32, i32, i32
  }
  func.func @transform_4(%arg0: i32, %arg1: i32) -> (i32, i32) {
    %c0_i32 = arith.constant 0 : i32
    %c0_i32_0 = arith.constant 0 : i32
    %c0_i32_1 = arith.constant 0 : i32
    return %c0_i32, %c0_i32_0 : i32, i32
  }
  func.func @transform_5(%arg0: i32, %arg1: i32) -> (i32, i32) {
    %c0_i32 = arith.constant 0 : i32
    %c0_i32_0 = arith.constant 0 : i32
    %c0_i32_1 = arith.constant 0 : i32
    return %c0_i32, %c0_i32_0 : i32, i32
  }
  func.func @transform_6(%arg0: i32, %arg1: i32) -> (i32, i32) {
    %c0_i32 = arith.constant 0 : i32
    %c0_i32_0 = arith.constant 0 : i32
    %c0_i32_1 = arith.constant 0 : i32
    return %c0_i32, %c0_i32_0 : i32, i32
  }
  func.func @transform_7(%arg0: i32, %arg1: i32) -> (i32, i32) {
    %c0_i32 = arith.constant 0 : i32
    %c0_i32_0 = arith.constant 0 : i32
    %c0_i32_1 = arith.constant 0 : i32
    return %c0_i32, %c0_i32_0 : i32, i32
  }
  func.func @transform_8(%arg0: i32, %arg1: i32) -> (i32, i32) {
    %c0_i32 = arith.constant 0 : i32
    %c0_i32_0 = arith.constant 0 : i32
    %c0_i32_1 = arith.constant 0 : i32
    return %c0_i32, %c0_i32_0 : i32, i32
  }
  func.func @transform_9(%arg0: i32, %arg1: i32) -> (i32, i32) {
    %c0_i32 = arith.constant 0 : i32
    %c0_i32_0 = arith.constant 0 : i32
    %c0_i32_1 = arith.constant 0 : i32
    return %c0_i32, %c0_i32_0 : i32, i32
  }
  func.func @transform_10(%arg0: i32, %arg1: i32) -> (i32, i32) {
    %c0_i32 = arith.constant 0 : i32
    %c0_i32_0 = arith.constant 0 : i32
    %c0_i32_1 = arith.constant 0 : i32
    return %c0_i32, %c0_i32_0 : i32, i32
  }
  func.func @transform_11(%arg0: i32, %arg1: i32) -> (i32, i32) {
    %c0_i32 = arith.constant 0 : i32
    %c0_i32_0 = arith.constant 0 : i32
    %c0_i32_1 = arith.constant 0 : i32
    return %c0_i32, %c0_i32_0 : i32, i32
  }
  func.func @transform_12(%arg0: i32, %arg1: i32) -> (i32, i32, i32) {
    %c0_i32 = arith.constant 0 : i32
    %c0_i32_0 = arith.constant 0 : i32
    return %arg0, %arg1, %c0_i32 : i32, i32, i32
  }
}

</mosaic_0001>

<llo_original>
// kernel: attn_block_pallas.2
$region0: #{attn_block_pallas.2}
  #allocation0 [shape = 'u32[]', space=smem, size = 0x4, offset = 0x4, fixed_abs, tag = 'smem constant byte address 0x4 - core index']
  #allocation1 [shape = 'u32[72,128]{1,0:T(1,128)}', space=vmem, size = 0x9000, scoped, tag = 'internal scratch']
  #allocation2 [shape = 'f32[1,128]{1,0:T(1,128)}', space=vmem, size = 0x200, scoped, tag = 'scratch operand']
  #allocation3 [shape = 'f32[1,128]{1,0:T(1,128)}', space=vmem, size = 0x200, scoped, tag = 'scratch operand']
  %s0 = inlined_call_operand.vmem [shape: f32[128,32], index: 0, kind: input, shape index: {}]
  %s1 = inlined_call_operand.vmem [shape: f32[32,128], index: 1, kind: input, shape index: {}]
  %s2 = inlined_call_operand.vmem [shape: f32[1,128], index: 2, kind: input, shape index: {}]
  %s3 = inlined_call_operand.vmem [shape: f32[1,128], index: 3, kind: input, shape index: {}]
  %s4 = inlined_call_operand.hbm [shape: f32[2,256,128], index: 4, kind: input, shape index: {}]
  %s5 = inlined_call_operand.vmem [shape: f32[2,1,128], index: 5, kind: output, shape index: {0}]
  %s6 = inlined_call_operand.vmem [shape: f32[2,1,128], index: 6, kind: output, shape index: {1}]
  %7 = xla_tuple %s5, %s6
  %s8 = sld [smem:[#allocation0]]
  $region73: #{attn_block_pallas.2} parent=0
    _
  %s10 = ssub.s32 1, %s8
  %s11 = scalar_select 0, %s10, %s8
  $region1: #{attn_block_pallas.2} parent=0
    #allocation4 [shape = 'u8[262144]{0}', space=vmem, size = 0x40000, scoped, tag = 'input window, operand 4']
    #allocation5 [shape = 's32[2]{0}', space=sflag, size = 0x8, scoped, tag = 'scoped memory for attn_block_pallas.2']
    %12 = vsyncpa [#allocation5], 0
    %s13 = scalar_lea.sflag [#allocation5], 1
    %14 = vsyncpa %s13, 0
    loop: start=0, step=1, limit=4
    $region2: #{attn_block_pallas.2} parent=1 // loop_pre_header
      _
    $region3: #{attn_block_pallas.2} parent=1 // loop_header
      %s16 = sphi 0, %s20
      %p17 = scmp.ge.s32.totalorder %s16, 4
      %s23 = sphi 0, %s35
      %s24 = sphi 0, %s31
      %s25 = sphi 0, %s23
      %s26 = sphi 0, %s24
      %s27 = sphi 0, %s25
      %s28 = sphi 0, %s26
      %s36 = sphi 0, %s36
      %s38 = sphi 0, %s36
      %s39 = sphi 0, %s38
      %s53 = sphi 0, %s39
      %s57 = sphi 0, %s57
      %s59 = sphi 0, %s57
      %s60 = sphi 0, %s59
      %s74 = sphi 0, %s60
      %s78 = sphi 0, %s78
      %s80 = sphi 0, %s78
      %s81 = sphi 0, %s80
      %s95 = sphi 0, %s81
      %s99 = sphi 0, %s99
      %s101 = sphi 0, %s99
      %s102 = sphi 0, %s101
      %s116 = sphi 0, %s102
      %s124 = sphi 0, %s126
      %s127 = sphi 0, %s124
      %s128 = sphi 0, %s127
      %s144 = sphi 0, %s128
      %s150 = sphi 0, %s152
      %s153 = sphi 0, %s150
      %s154 = sphi 0, %s153
      %s170 = sphi 0, %s154
      %s176 = sphi 0, %s178
      %s179 = sphi 0, %s176
      %s180 = sphi 0, %s179
      %s196 = sphi 0, %s180
    $region4: #{attn_block_pallas.2} parent=1 // loop_header_branch
      %19 = sbr.rel (%p17) target = $region8
    $region5: #{attn_block_pallas.2} parent=1 // loop_body
      %s21 = ssub.s32 %s16, 1
      %s22 = ssub.s32 %s16, 2
      %s29 = sadd.s32 1, %s24
      %p30 = scmp.ge.s32.totalorder %s29, 1
      %s31 = scalar_select %p30, 0, %s29
      %s32 = sadd.s32 1, %s23
      %s33 = scalar_select %p30, %s32, %s23
      %p34 = scmp.ge.s32.totalorder %s33, 2
      %s35 = scalar_select %p34, 0, %s33
      %s37 = sadd.s32 %s36, 1
      %p40 = scmp.eq.s32.totalorder %s16, 1
      %p41 = scmp.ne.s32.totalorder %s36, %s38
      %p42 = scmp.eq.s32.totalorder %s16, 0
      %p43 = por %p41, %p42
      %p44 = scmp.ne.s32.totalorder %s36, %s38
      %p45 = scmp.eq.s32.totalorder %s21, 1
      %p46 = por %p44, %p45
      %p47 = scmp.ne.s32.totalorder %s38, %s39
      %p48 = scmp.eq.s32.totalorder %s21, 0
      %p49 = por %p47, %p48
      %p50 = scmp.ne.s32.totalorder %s38, %s39
      %p51 = scmp.eq.s32.totalorder %s22, 1
      %p52 = por %p50, %p51
      %p54 = scmp.ne.s32.totalorder %s39, %s53
      %p55 = scmp.eq.s32.totalorder %s22, 0
      %p56 = por %p54, %p55
      %s58 = sadd.s32 %s57, 1
      %p61 = scmp.eq.s32.totalorder %s16, 1
      %p62 = scmp.ne.s32.totalorder %s57, %s59
      %p63 = scmp.eq.s32.totalorder %s16, 0
      %p64 = por %p62, %p63
      %p65 = scmp.ne.s32.totalorder %s57, %s59
      %p66 = scmp.eq.s32.totalorder %s21, 1
      %p67 = por %p65, %p66
      %p68 = scmp.ne.s32.totalorder %s59, %s60
      %p69 = scmp.eq.s32.totalorder %s21, 0
      %p70 = por %p68, %p69
      %p71 = scmp.ne.s32.totalorder %s59, %s60
      %p72 = scmp.eq.s32.totalorder %s22, 1
      %p73 = por %p71, %p72
      %p75 = scmp.ne.s32.totalorder %s60, %s74
      %p76 = scmp.eq.s32.totalorder %s22, 0
      %p77 = por %p75, %p76
      %s79 = sadd.s32 %s78, 1
      %p82 = scmp.eq.s32.totalorder %s16, 1
      %p83 = scmp.ne.s32.totalorder %s78, %s80
      %p84 = scmp.eq.s32.totalorder %s16, 0
      %p85 = por %p83, %p84
      %p86 = scmp.ne.s32.totalorder %s78, %s80
      %p87 = scmp.eq.s32.totalorder %s21, 1
      %p88 = por %p86, %p87
      %p89 = scmp.ne.s32.totalorder %s80, %s81
      %p90 = scmp.eq.s32.totalorder %s21, 0
      %p91 = por %p89, %p90
      %p92 = scmp.ne.s32.totalorder %s80, %s81
      %p93 = scmp.eq.s32.totalorder %s22, 1
      %p94 = por %p92, %p93
      %p96 = scmp.ne.s32.totalorder %s81, %s95
      %p97 = scmp.eq.s32.totalorder %s22, 0
      %p98 = por %p96, %p97
      %s100 = sadd.s32 %s99, 1
      %p103 = scmp.eq.s32.totalorder %s16, 1
      %p104 = scmp.ne.s32.totalorder %s99, %s101
      %p105 = scmp.eq.s32.totalorder %s16, 0
      %p106 = por %p104, %p105
      %p107 = scmp.ne.s32.totalorder %s99, %s101
      %p108 = scmp.eq.s32.totalorder %s21, 1
      %p109 = por %p107, %p108
      %p110 = scmp.ne.s32.totalorder %s101, %s102
      %p111 = scmp.eq.s32.totalorder %s21, 0
      %p112 = por %p110, %p111
      %p113 = scmp.ne.s32.totalorder %s101, %s102
      %p114 = scmp.eq.s32.totalorder %s22, 1
      %p115 = por %p113, %p114
      %p117 = scmp.ne.s32.totalorder %s102, %s116
      %p118 = scmp.eq.s32.totalorder %s22, 0
      %p119 = por %p117, %p118
      %s120 = ssub.s32 %s23, %s35
      %s121 = ssub.s32 %s24, %s31
      %s122 = sor.u32 %s120, %s121
      %p123 = scmp.eq.s32.totalorder %s122, 0
      %s125 = sadd.s32 %s124, 1
      %s126 = scalar_select %p123, %s124, %s125
      %p129 = pneg %p123
      %p130 = scmp.eq.s32.totalorder %s16, 1
      %p131 = por %p129, %p130
      %p132 = scmp.ne.s32.totalorder %s124, %s127
      %p133 = scmp.eq.s32.totalorder %s16, 0
      %p134 = por %p132, %p133
      %p135 = scmp.ne.s32.totalorder %s124, %s127
      %p136 = scmp.eq.s32.totalorder %s21, 1
      %p137 = por %p135, %p136
      %p138 = scmp.ne.s32.totalorder %s127, %s128
      %p139 = scmp.eq.s32.totalorder %s21, 0
      %p140 = por %p138, %p139
      %p141 = scmp.ne.s32.totalorder %s127, %s128
      %p142 = scmp.eq.s32.totalorder %s22, 1
      %p143 = por %p141, %p142
      %p145 = scmp.ne.s32.totalorder %s128, %s144
      %p146 = scmp.eq.s32.totalorder %s22, 0
      %p147 = por %p145, %p146
      %s148 = ssub.s32 %s23, %s35
      %p149 = scmp.eq.s32.totalorder %s148, 0
      %s151 = sadd.s32 %s150, 1
      %s152 = scalar_select %p149, %s150, %s151
      %p155 = pneg %p149
      %p156 = scmp.eq.s32.totalorder %s16, 1
      %p157 = por %p155, %p156
      %p158 = scmp.ne.s32.totalorder %s150, %s153
      %p159 = scmp.eq.s32.totalorder %s16, 0
      %p160 = por %p158, %p159
      %p161 = scmp.ne.s32.totalorder %s150, %s153
      %p162 = scmp.eq.s32.totalorder %s21, 1
      %p163 = por %p161, %p162
      %p164 = scmp.ne.s32.totalorder %s153, %s154
      %p165 = scmp.eq.s32.totalorder %s21, 0
      %p166 = por %p164, %p165
      %p167 = scmp.ne.s32.totalorder %s153, %s154
      %p168 = scmp.eq.s32.totalorder %s22, 1
      %p169 = por %p167, %p168
      %p171 = scmp.ne.s32.totalorder %s154, %s170
      %p172 = scmp.eq.s32.totalorder %s22, 0
      %p173 = por %p171, %p172
      %s174 = ssub.s32 %s23, %s35
      %p175 = scmp.eq.s32.totalorder %s174, 0
      %s177 = sadd.s32 %s176, 1
      %s178 = scalar_select %p175, %s176, %s177
      %p181 = pneg %p175
      %p182 = scmp.eq.s32.totalorder %s16, 1
      %p183 = por %p181, %p182
      %p184 = scmp.ne.s32.totalorder %s176, %s179
      %p185 = scmp.eq.s32.totalorder %s16, 0
      %p186 = por %p184, %p185
      %p187 = scmp.ne.s32.totalorder %s176, %s179
      %p188 = scmp.eq.s32.totalorder %s21, 1
      %p189 = por %p187, %p188
      %p190 = scmp.ne.s32.totalorder %s179, %s180
      %p191 = scmp.eq.s32.totalorder %s21, 0
      %p192 = por %p190, %p191
      %p193 = scmp.ne.s32.totalorder %s179, %s180
      %p194 = scmp.eq.s32.totalorder %s22, 1
      %p195 = por %p193, %p194
      %p197 = scmp.ne.s32.totalorder %s180, %s196
      %p198 = scmp.eq.s32.totalorder %s22, 0
      %p199 = por %p197, %p198
      %p200 = scmp.le.s32.totalorder 1, %s16
      %p201 = scmp.lt.s32.totalorder %s16, 3
      %p202 = pnand %p200, %p201
      %p203 = pneg %p202
      // Predicated region
      $region9: #{attn_block_pallas.2} parent=5 // pred_check
        _
      $region10: #{attn_block_pallas.2} parent=5 // pred_check_branch
        %205 = sbr.rel (%p202) target = $region12
      $region11: #{attn_block_pallas.2} parent=5 // pred_region
        %s206 = ssub.s32 %s16, 1
        // Predicated region
        $region13: #{attn_block_pallas.2} parent=11 // pred_check
          %p207 = pneg %p49
        $region14: #{attn_block_pallas.2} parent=11 // pred_check_branch
          %209 = sbr.rel (%p207) target = $region16
        $region15: #{attn_block_pallas.2} parent=11 // pred_region
          _
        $region16: #{attn_block_pallas.2} parent=11 // pred_fallthru
          _
        // Predicated region
        $region17: #{attn_block_pallas.2} parent=11 // pred_check
          %p210 = pneg %p70
        $region18: #{attn_block_pallas.2} parent=11 // pred_check_branch
          %212 = sbr.rel (%p210) target = $region20
        $region19: #{attn_block_pallas.2} parent=11 // pred_region
          _
        $region20: #{attn_block_pallas.2} parent=11 // pred_fallthru
          _
        // Predicated region
        $region21: #{attn_block_pallas.2} parent=11 // pred_check
          %p213 = pneg %p91
        $region22: #{attn_block_pallas.2} parent=11 // pred_check_branch
          %215 = sbr.rel (%p213) target = $region24
        $region23: #{attn_block_pallas.2} parent=11 // pred_region
          _
        $region24: #{attn_block_pallas.2} parent=11 // pred_fallthru
          _
        // Predicated region
        $region25: #{attn_block_pallas.2} parent=11 // pred_check
          %p216 = pneg %p112
        $region26: #{attn_block_pallas.2} parent=11 // pred_check_branch
          %218 = sbr.rel (%p216) target = $region28
        $region27: #{attn_block_pallas.2} parent=11 // pred_region
          _
        $region28: #{attn_block_pallas.2} parent=11 // pred_fallthru
          _
      $region12: #{attn_block_pallas.2} parent=5 // pred_fallthru
        _
      %p219 = scmp.lt.s32.totalorder %s16, 2
      // Predicated region
      $region29: #{attn_block_pallas.2} parent=5 // pred_check
        %p220 = pneg %p219
      $region30: #{attn_block_pallas.2} parent=5 // pred_check_branch
        %222 = sbr.rel (%p220) target = $region32
      $region31: #{attn_block_pallas.2} parent=5 // pred_region
        // Predicated region
        $region33: #{attn_block_pallas.2} parent=31 // pred_check
          %p223 = pneg %p134
        $region34: #{attn_block_pallas.2} parent=31 // pred_check_branch
          %225 = sbr.rel (%p223) target = $region36
        $region35: #{attn_block_pallas.2} parent=31 // pred_region
          %s226 = sand.u32 %s124, 1
          %s227 = scalar_lea.sflag [#allocation5], %s226
          %s228 = sand.u32 %s124, 1
          %s229 = smul.addr %s228, 256
          %s230 = scalar_lea.vmem [#allocation4], %s229
          %s231 = smul.u32 32, %s24
          %233 = vsyncadd %s227, 0
          %s234 = smul.addr %s23, 32
          %s235 = sadd.s32 %s231, %s234
          %s236 = smul.addr %s235, 8
          %s237 = scalar_lea.hbm %s4, %s236
          %s238 = sshll.u32 %s237, 4
          %s239 = int_to_ptr.hbm [resolvable:$true] %s238
          %s240 = sshll.u32 %s230, 4
          %s241 = int_to_ptr.vmem [resolvable:$true] %s240
          %246 = dma.hbm_to_vmem [thread:$0]  %s239, 4096, %s241, %s227, 128, 128, 8
        $region36: #{attn_block_pallas.2} parent=31 // pred_fallthru
          _
      $region32: #{attn_block_pallas.2} parent=5 // pred_fallthru
        _
      %p247 = scmp.le.s32.totalorder 1, %s16
      %p248 = scmp.lt.s32.totalorder %s16, 3
      %p249 = pnand %p247, %p248
      %p250 = pneg %p249
      // Predicated region
      $region37: #{attn_block_pallas.2} parent=5 // pred_check
        _
      $region38: #{attn_block_pallas.2} parent=5 // pred_check_branch
        %252 = sbr.rel (%p249) target = $region40
      $region39: #{attn_block_pallas.2} parent=5 // pred_region
        %s253 = ssub.s32 %s16, 1
        %s254 = sand.u32 %s127, 1
        %s255 = scalar_lea.sflag [#allocation5], %s254
        %s256 = sand.u32 %s127, 1
        %s257 = smul.addr %s256, 256
        %s258 = scalar_lea.vmem [#allocation4], %s257
        // Predicated region
        $region41: #{attn_block_pallas.2} parent=39 // pred_check
          %p259 = pneg %p140
        $region42: #{attn_block_pallas.2} parent=39 // pred_check_branch
          %261 = sbr.rel (%p259) target = $region44
        $region43: #{attn_block_pallas.2} parent=39 // pred_region
          %263 = dma.done %s255, 4096
        $region44: #{attn_block_pallas.2} parent=39 // pred_fallthru
          _
        %p264 = pneg %p49
        %p265 = pneg %p46
        %p266 = pneg %p70
        %p267 = pneg %p67
        %p268 = pneg %p91
        %p269 = pneg %p88
        %p270 = pneg %p112
        %p271 = pneg %p109
        %s272 = sand.u32 %s127, 1
        %s273 = scalar_lea.sflag [#allocation5], %s272
        %s274 = sand.u32 %s127, 1
        %s275 = smul.addr %s274, 256
        %s276 = scalar_lea.vmem [#allocation4], %s275
        %p277 = pneg %p140
        %p278 = pneg %p137
        %p279 = pneg %p166
        %p280 = pneg %p163
        %p281 = scmp.lt.s32.totalorder %s25, 1
        %s282 = scalar_select %p281, %s25, 1
        %s283 = scalar_lea.vmem %s5, %s282
        %p284 = pneg %p192
        %p285 = pneg %p189
        %p286 = scmp.lt.s32.totalorder %s25, 1
        %s287 = scalar_select %p286, %s25, 1
        %s288 = scalar_lea.vmem %s6, %s287
        %s289 = smul.u32 32, %s26
        %p290 = scmp.lt.s32.totalorder %s25, 1
        %s291 = scalar_select %p290, %s25, 1
        %s292 = scalar_lea.vmem %s5, %s291
        %p293 = scmp.lt.s32.totalorder %s25, 1
        %s294 = scalar_select %p293, %s25, 1
        %s295 = scalar_lea.vmem %s6, %s294
        %p296 = scmp.eq.s32.totalorder %s26, 0
        // Predicated region
        $region45: #{attn_block_pallas.2} parent=39 // pred_check
          %p297 = pneg %p296
        $region46: #{attn_block_pallas.2} parent=39 // pred_check_branch
          %299 = sbr.rel (%p297) target = $region48
        $region47: #{attn_block_pallas.2} parent=39 // pred_region
          %300 = vst [vmem:[#allocation2] sm:$0x1] 0.0
          %301 = vst [vmem:[#allocation3] sm:$0x1] 0.0
        $region48: #{attn_block_pallas.2} parent=39 // pred_fallthru
          _
        %v302 = vld [vmem:[%s258] sm:$0xff]
        %v303 = vld [vmem:[%s258 + $0x8] sm:$0xff]
        %v304 = vld [vmem:[%s258 + $0x10] sm:$0xff]
        %v305 = vld [vmem:[%s258 + $0x18] sm:$0xff]
        %v306 = vld [vmem:[%s258 + $0x20] sm:$0xff]
        %v307 = vld [vmem:[%s258 + $0x28] sm:$0xff]
        %v308 = vld [vmem:[%s258 + $0x30] sm:$0xff]
        %v309 = vld [vmem:[%s258 + $0x38] sm:$0xff]
        %v310 = vld [vmem:[%s258 + $0x40] sm:$0xff]
        %v311 = vld [vmem:[%s258 + $0x48] sm:$0xff]
        %v312 = vld [vmem:[%s258 + $0x50] sm:$0xff]
        %v313 = vld [vmem:[%s258 + $0x58] sm:$0xff]
        %v314 = vld [vmem:[%s258 + $0x60] sm:$0xff]
        %v315 = vld [vmem:[%s258 + $0x68] sm:$0xff]
        %v316 = vld [vmem:[%s258 + $0x70] sm:$0xff]
        %v317 = vld [vmem:[%s258 + $0x78] sm:$0xff]
        %v318 = vld [vmem:[%s258 + $0x80] sm:$0xff]
        %v319 = vld [vmem:[%s258 + $0x88] sm:$0xff]
        %v320 = vld [vmem:[%s258 + $0x90] sm:$0xff]
        %v321 = vld [vmem:[%s258 + $0x98] sm:$0xff]
        %v322 = vld [vmem:[%s258 + $0xa0] sm:$0xff]
        %v323 = vld [vmem:[%s258 + $0xa8] sm:$0xff]
        %v324 = vld [vmem:[%s258 + $0xb0] sm:$0xff]
        %v325 = vld [vmem:[%s258 + $0xb8] sm:$0xff]
        %v326 = vld [vmem:[%s258 + $0xc0] sm:$0xff]
        %v327 = vld [vmem:[%s258 + $0xc8] sm:$0xff]
        %v328 = vld [vmem:[%s258 + $0xd0] sm:$0xff]
        %v329 = vld [vmem:[%s258 + $0xd8] sm:$0xff]
        %v330 = vld [vmem:[%s258 + $0xe0] sm:$0xff]
        %v331 = vld [vmem:[%s258 + $0xe8] sm:$0xff]
        %v332 = vld [vmem:[%s258 + $0xf0] sm:$0xff]
        %v333 = vld [vmem:[%s258 + $0xf8] sm:$0xff]
        %v334 = vld [vmem:[#allocation2] sm:$0x1]
        %v335 = vadd.f32 %v302, %v303
        %v336 = vadd.f32 %v335, %v304
        %v337 = vadd.f32 %v336, %v305
        %v338 = vadd.f32 %v337, %v306
        %v339 = vadd.f32 %v338, %v307
        %v340 = vadd.f32 %v339, %v308
        %v341 = vadd.f32 %v340, %v309
        %v342 = vadd.f32 %v341, %v310
        %v343 = vadd.f32 %v342, %v311
        %v344 = vadd.f32 %v343, %v312
        %v345 = vadd.f32 %v344, %v313
        %v346 = vadd.f32 %v345, %v314
        %v347 = vadd.f32 %v346, %v315
        %v348 = vadd.f32 %v347, %v316
        %v349 = vadd.f32 %v348, %v317
        %v350 = vadd.f32 %v349, %v318
        %v351 = vadd.f32 %v350, %v319
        %v352 = vadd.f32 %v351, %v320
        %v353 = vadd.f32 %v352, %v321
        %v354 = vadd.f32 %v353, %v322
        %v355 = vadd.f32 %v354, %v323
        %v356 = vadd.f32 %v355, %v324
        %v357 = vadd.f32 %v356, %v325
        %v358 = vadd.f32 %v357, %v326
        %v359 = vadd.f32 %v358, %v327
        %v360 = vadd.f32 %v359, %v328
        %v361 = vadd.f32 %v360, %v329
        %v362 = vadd.f32 %v361, %v330
        %v363 = vadd.f32 %v362, %v331
        %v364 = vadd.f32 %v363, %v332
        %v365 = vadd.f32 %v364, %v333
        %v366 = vrot.slane %v365, 4
        %v367 = vadd.f32 %v365, %v366
        %v368 = vrot.slane %v367, 2
        %v369 = vadd.f32 %v367, %v368
        %v370 = vrot.slane %v369, 1
        %v371 = vadd.f32 %v369, %v370
        %v372 = vadd.f32 %v334, %v371
        %373 = vst [vmem:[#allocation2] sm:$0x1] %v372
        %v374 = vld [vmem:[#allocation3] sm:$0x1]
        %v375 = vmul.f32 %v302, %v302
        %v376 = vmul.f32 %v303, %v303
        %v377 = vmul.f32 %v304, %v304
        %v378 = vmul.f32 %v305, %v305
        %v379 = vmul.f32 %v306, %v306
        %v380 = vmul.f32 %v307, %v307
        %v381 = vmul.f32 %v308, %v308
        %v382 = vmul.f32 %v309, %v309
        %v383 = vmul.f32 %v310, %v310
        %v384 = vmul.f32 %v311, %v311
        %v385 = vmul.f32 %v312, %v312
        %v386 = vmul.f32 %v313, %v313
        %v387 = vmul.f32 %v314, %v314
        %v388 = vmul.f32 %v315, %v315
        %v389 = vmul.f32 %v316, %v316
        %v390 = vmul.f32 %v317, %v317
        %v391 = vmul.f32 %v318, %v318
        %v392 = vmul.f32 %v319, %v319
        %v393 = vmul.f32 %v320, %v320
        %v394 = vmul.f32 %v321, %v321
        %v395 = vmul.f32 %v322, %v322
        %v396 = vmul.f32 %v323, %v323
        %v397 = vmul.f32 %v324, %v324
        %v398 = vmul.f32 %v325, %v325
        %v399 = vmul.f32 %v326, %v326
        %v400 = vmul.f32 %v327, %v327
        %v401 = vmul.f32 %v328, %v328
        %v402 = vmul.f32 %v329, %v329
        %v403 = vmul.f32 %v330, %v330
        %v404 = vmul.f32 %v331, %v331
        %v405 = vmul.f32 %v332, %v332
        %v406 = vmul.f32 %v333, %v333
        %v407 = vadd.f32 %v375, %v376
        %v408 = vadd.f32 %v407, %v377
        %v409 = vadd.f32 %v408, %v378
        %v410 = vadd.f32 %v409, %v379
        %v411 = vadd.f32 %v410, %v380
        %v412 = vadd.f32 %v411, %v381
        %v413 = vadd.f32 %v412, %v382
        %v414 = vadd.f32 %v413, %v383
        %v415 = vadd.f32 %v414, %v384
        %v416 = vadd.f32 %v415, %v385
        %v417 = vadd.f32 %v416, %v386
        %v418 = vadd.f32 %v417, %v387
        %v419 = vadd.f32 %v418, %v388
        %v420 = vadd.f32 %v419, %v389
        %v421 = vadd.f32 %v420, %v390
        %v422 = vadd.f32 %v421, %v391
        %v423 = vadd.f32 %v422, %v392
        %v424 = vadd.f32 %v423, %v393
        %v425 = vadd.f32 %v424, %v394
        %v426 = vadd.f32 %v425, %v395
        %v427 = vadd.f32 %v426, %v396
        %v428 = vadd.f32 %v427, %v397
        %v429 = vadd.f32 %v428, %v398
        %v430 = vadd.f32 %v429, %v399
        %v431 = vadd.f32 %v430, %v400
        %v432 = vadd.f32 %v431, %v401
        %v433 = vadd.f32 %v432, %v402
        %v434 = vadd.f32 %v433, %v403
        %v435 = vadd.f32 %v434, %v404
        %v436 = vadd.f32 %v435, %v405
        %v437 = vadd.f32 %v436, %v406
        %v438 = vrot.slane %v437, 4
        %v439 = vadd.f32 %v437, %v438
        %v440 = vrot.slane %v439, 2
        %v441 = vadd.f32 %v439, %v440
        %v442 = vrot.slane %v441, 1
        %v443 = vadd.f32 %v441, %v442
        %v444 = vadd.f32 %v374, %v443
        %445 = vst [vmem:[#allocation3] sm:$0x1] %v444
        // Predicated region
        $region49: #{attn_block_pallas.2} parent=39 // pred_check
          %p446 = pneg %p296
        $region50: #{attn_block_pallas.2} parent=39 // pred_check_branch
          %448 = sbr.rel (%p446) target = $region52
        $region51: #{attn_block_pallas.2} parent=39 // pred_region
          %v449 = vld [vmem:[%s0] sm:$0xff]
          %v450 = vld [vmem:[%s0 + $0x8] sm:$0xff]
          %v451 = vld [vmem:[%s0 + $0x10] sm:$0xff]
          %v452 = vld [vmem:[%s0 + $0x18] sm:$0xff]
          %v453 = vld [vmem:[%s0 + $0x20] sm:$0xff]
          %v454 = vld [vmem:[%s0 + $0x28] sm:$0xff]
          %v455 = vld [vmem:[%s0 + $0x30] sm:$0xff]
          %v456 = vld [vmem:[%s0 + $0x38] sm:$0xff]
          %v457 = vld [vmem:[%s0 + $0x40] sm:$0xff]
          %v458 = vld [vmem:[%s0 + $0x48] sm:$0xff]
          %v459 = vld [vmem:[%s0 + $0x50] sm:$0xff]
          %v460 = vld [vmem:[%s0 + $0x58] sm:$0xff]
          %v461 = vld [vmem:[%s0 + $0x60] sm:$0xff]
          %v462 = vld [vmem:[%s0 + $0x68] sm:$0xff]
          %v463 = vld [vmem:[%s0 + $0x70] sm:$0xff]
          %v464 = vld [vmem:[%s0 + $0x78] sm:$0xff]
          %v465 = vld [vmem:[#allocation2] sm:$0x1]
          %466 = vmatpush.msra.mxu0 %v464
          %467 = vmatpush.msra.mxu0 %v463
          %468 = vmatpush.msra.mxu0 %v462
          %469 = vmatpush.msra.mxu0 %v461
          %470 = vmatpush.msra.mxu0 %v460
          %471 = vmatpush.msra.mxu0 %v459
          %472 = vmatpush.msra.mxu0 %v458
          %473 = vmatpush.msra.mxu0 %v457
          %474 = vmatpush.msra.mxu0 %v456
          %475 = vmatpush.msra.mxu0 %v455
          %476 = vmatpush.msra.mxu0 %v454
          %477 = vmatpush.msra.mxu0 %v453
          %478 = vmatpush.msra.mxu0 %v452
          %479 = vmatpush.msra.mxu0 %v451
          %480 = vmatpush.msra.mxu0 %v450
          %481 = vmatpush.msra.mxu0 %v449
          %482 = vmatmul.f32.gmra.mxu0 %v465
          %v483 = vpop.f32.mrf.mxu0
          %v484 = vadd.f32 0.0, %v483
          %485 = vdwg.mxu0
          %v486 = vld [vmem:[#allocation3] sm:$0x1]
          %487 = vmatpush.msra.mxu0 %v464
          %488 = vmatpush.msra.mxu0 %v463
          %489 = vmatpush.msra.mxu0 %v462
          %490 = vmatpush.msra.mxu0 %v461
          %491 = vmatpush.msra.mxu0 %v460
          %492 = vmatpush.msra.mxu0 %v459
          %493 = vmatpush.msra.mxu0 %v458
          %494 = vmatpush.msra.mxu0 %v457
          %495 = vmatpush.msra.mxu0 %v456
          %496 = vmatpush.msra.mxu0 %v455
          %497 = vmatpush.msra.mxu0 %v454
          %498 = vmatpush.msra.mxu0 %v453
          %499 = vmatpush.msra.mxu0 %v452
          %500 = vmatpush.msra.mxu0 %v451
          %501 = vmatpush.msra.mxu0 %v450
          %502 = vmatpush.msra.mxu0 %v449
          %503 = vmatmul.f32.gmra.mxu0 %v486
          %v504 = vpop.f32.mrf.mxu0
          %v505 = vadd.f32 0.0, %v504
          %506 = vdwg.mxu0
          %v507 = vmul.f32 %v484, 0.0009765625
          %v508 = vmul.f32 %v505, 0.0009765625
          %v509 = vmul.f32 %v507, %v507
          %v510 = vsub.f32 %v508, %v509
          %v511 = vmax.f32 %v510, 0.0
          %v512 = vadd.f32 %v511, 1e-06
          %v513 = vrsqrt.pop %v512
          %v514 = vmul.f32 %v513, %v512
          %v515 = vmul.f32 %v514, %v513
          %v516 = vmul.f32 0.5, %v515
          %v517 = vsub.f32 1.5, %v516
          %v518 = vmul.f32 %v513, %v517
          %vm519 = vweird.f32 %v512
          %vm520 = vweird.f32 %v513
          %vm521 = vmor %vm519, %vm520
          %v522 = vsel %vm521, %v513, %v518
          %v523 = vld [vmem:[%s1] sm:$0xff]
          %v524 = vld [vmem:[%s1 + $0x8] sm:$0xff]
          %v525 = vld [vmem:[%s1 + $0x10] sm:$0xff]
          %v526 = vld [vmem:[%s1 + $0x18] sm:$0xff]
          %vm527 = vcmask 261120
          %v529 = vsel %vm527, %v507, 0
          %531 = vmatpush.msra.mxu0 0.0
          %532 = vmatpush.msra.mxu0 0.0
          %533 = vmatpush.msra.mxu0 0.0
          %534 = vmatpush.msra.mxu0 0.0
          %535 = vmatpush.msra.mxu0 0.0
          %536 = vmatpush.msra.mxu0 0.0
          %537 = vmatpush.msra.mxu0 0.0
          %538 = vmatpush.msra.mxu0 0.0
          %539 = vmatpush.msra.mxu0 0.0
          %540 = vmatpush.msra.mxu0 0.0
          %541 = vmatpush.msra.mxu0 0.0
          %542 = vmatpush.msra.mxu0 0.0
          %543 = vmatpush.msra.mxu0 %v526
          %544 = vmatpush.msra.mxu0 %v525
          %545 = vmatpush.msra.mxu0 %v524
          %546 = vmatpush.msra.mxu0 %v523
          %547 = vmatmul.f32.gmra.mxu0 %v529
          %v548 = vpop.f32.mrf.mxu0
          %v549 = vadd.f32 0.0, %v548
          %550 = vdwg.mxu0
          %v552 = vsel %vm527, %v522, 0
          %554 = vmatpush.msra.mxu0 0.0
          %555 = vmatpush.msra.mxu0 0.0
          %556 = vmatpush.msra.mxu0 0.0
          %557 = vmatpush.msra.mxu0 0.0
          %558 = vmatpush.msra.mxu0 0.0
          %559 = vmatpush.msra.mxu0 0.0
          %560 = vmatpush.msra.mxu0 0.0
          %561 = vmatpush.msra.mxu0 0.0
          %562 = vmatpush.msra.mxu0 0.0
          %563 = vmatpush.msra.mxu0 0.0
          %564 = vmatpush.msra.mxu0 0.0
          %565 = vmatpush.msra.mxu0 0.0
          %566 = vmatpush.msra.mxu0 %v526
          %567 = vmatpush.msra.mxu0 %v525
          %568 = vmatpush.msra.mxu0 %v524
          %569 = vmatpush.msra.mxu0 %v523
          %570 = vmatmul.f32.gmra.mxu0 %v552
          %v571 = vpop.f32.mrf.mxu0
          %v572 = vadd.f32 0.0, %v571
          %573 = vdwg.mxu0
          %v574 = vld [vmem:[%s2] sm:$0x1]
          %v575 = vmul.f32 %v572, %v574
          %576 = vst [vmem:[%s292] sm:$0x1] %v575
          %v577 = vld [vmem:[%s3] sm:$0x1]
          %v578 = vmul.f32 %v549, %v575
          %v579 = vsub.f32 %v577, %v578
          %580 = vst [vmem:[%s295] sm:$0x1] %v579
        $region52: #{attn_block_pallas.2} parent=39 // pred_fallthru
          _
        %p581 = scmp.lt.s32.totalorder %s25, 1
        %s582 = scalar_select %p581, %s25, 1
        %s583 = scalar_lea.vmem %s5, %s582
        %p584 = scmp.lt.s32.totalorder %s25, 1
        %s585 = scalar_select %p584, %s25, 1
        %s586 = scalar_lea.vmem %s6, %s585
        // Predicated region
        $region53: #{attn_block_pallas.2} parent=39 // pred_check
          %p587 = pneg %p163
        $region54: #{attn_block_pallas.2} parent=39 // pred_check_branch
          %589 = sbr.rel (%p587) target = $region56
        $region55: #{attn_block_pallas.2} parent=39 // pred_region
          _
        $region56: #{attn_block_pallas.2} parent=39 // pred_fallthru
          _
        // Predicated region
        $region57: #{attn_block_pallas.2} parent=39 // pred_check
          %p590 = pneg %p189
        $region58: #{attn_block_pallas.2} parent=39 // pred_check_branch
          %592 = sbr.rel (%p590) target = $region60
        $region59: #{attn_block_pallas.2} parent=39 // pred_region
          _
        $region60: #{attn_block_pallas.2} parent=39 // pred_fallthru
          _
      $region40: #{attn_block_pallas.2} parent=5 // pred_fallthru
        _
      %p593 = scmp.le.s32.totalorder 2, %s16
      // Predicated region
      $region61: #{attn_block_pallas.2} parent=5 // pred_check
        %p594 = pneg %p593
      $region62: #{attn_block_pallas.2} parent=5 // pred_check_branch
        %596 = sbr.rel (%p594) target = $region64
      $region63: #{attn_block_pallas.2} parent=5 // pred_region
        %s597 = ssub.s32 %s16, 2
        // Predicated region
        $region65: #{attn_block_pallas.2} parent=63 // pred_check
          %p598 = pneg %p169
        $region66: #{attn_block_pallas.2} parent=63 // pred_check_branch
          %600 = sbr.rel (%p598) target = $region68
        $region67: #{attn_block_pallas.2} parent=63 // pred_region
          %p601 = scmp.lt.s32.totalorder %s27, 1
          %s602 = scalar_select %p601, %s27, 1
          %s603 = scalar_lea.vmem %s5, %s602
        $region68: #{attn_block_pallas.2} parent=63 // pred_fallthru
          _
        // Predicated region
        $region69: #{attn_block_pallas.2} parent=63 // pred_check
          %p604 = pneg %p195
        $region70: #{attn_block_pallas.2} parent=63 // pred_check_branch
          %606 = sbr.rel (%p604) target = $region72
        $region71: #{attn_block_pallas.2} parent=63 // pred_region
          %p607 = scmp.lt.s32.totalorder %s27, 1
          %s608 = scalar_select %p607, %s27, 1
          %s609 = scalar_lea.vmem %s6, %s608
        $region72: #{attn_block_pallas.2} parent=63 // pred_fallthru
          _
      $region64: #{attn_block_pallas.2} parent=5 // pred_fallthru
        _
    $region6: #{attn_block_pallas.2} parent=1 // loop_footer
      %s20 = sadd.s32 1, %s16
    $region7: #{attn_block_pallas.2} parent=1 // loop_footer_branch
      %15 = sbr.rel target = $region3
    $region8: #{attn_block_pallas.2} parent=1 // loop_exit
      _
    %610 = vsyncpa [#allocation5], 1
    %s611 = scalar_lea.sflag [#allocation5], 1
    %612 = vsyncpa %s611, 1

// kernel: attn_block_pallas.3
$region0: #{attn_block_pallas.3}
  #allocation0 [shape = 'u32[]', space=smem, size = 0x4, offset = 0x4, fixed_abs, tag = 'smem constant byte address 0x4 - core index']
  #allocation1 [shape = 'u32[72,128]{1,0:T(1,128)}', space=vmem, size = 0x9000, scoped, tag = 'internal scratch']
  #allocation2 [shape = 'bf16[256,128]{1,0:T(8,128)(2,1)}', space=vmem, size = 0x10000, scoped, tag = 'scratch operand']
  #allocation3 [shape = 'bf16[256,128]{1,0:T(8,128)(2,1)}', space=vmem, size = 0x10000, scoped, tag = 'scratch operand']
  %s0 = inlined_call_operand.vmem [shape: f32[2,256,128], index: 0, kind: input, shape index: {}, may-alias: {0,1}]
  %s1 = inlined_call_operand.vmem [shape: f32[2,256,128], index: 1, kind: input, shape index: {}, may-alias: {0,1}]
  %s2 = inlined_call_operand.vmem [shape: f32[2,1,128], index: 2, kind: input, shape index: {}]
  %s3 = inlined_call_operand.vmem [shape: f32[2,1,128], index: 3, kind: input, shape index: {}]
  %s4 = inlined_call_operand.vmem [shape: bf16[128,128], index: 4, kind: input, shape index: {}]
  %s5 = inlined_call_operand.vmem [shape: f32[1,128], index: 5, kind: input, shape index: {}]
  %s6 = inlined_call_operand.vmem [shape: bf16[128,128], index: 6, kind: input, shape index: {}]
  %s7 = inlined_call_operand.vmem [shape: f32[1,128], index: 7, kind: input, shape index: {}]
  %s8 = inlined_call_operand.vmem [shape: bf16[128,128], index: 8, kind: input, shape index: {}]
  %s9 = inlined_call_operand.vmem [shape: f32[1,128], index: 9, kind: input, shape index: {}]
  %s10 = inlined_call_operand.vmem [shape: bf16[128,128], index: 10, kind: input, shape index: {}]
  %s11 = inlined_call_operand.vmem [shape: f32[1,128], index: 11, kind: input, shape index: {}]
  %s12 = inlined_call_operand.hbm [shape: f32[2,256,128], index: 12, kind: output, shape index: {}]
  %s13 = sld [smem:[#allocation0]]
  $region85: #{attn_block_pallas.3} parent=0
    _
  %s15 = ssub.s32 1, %s13
  %s16 = scalar_select 0, %s15, %s13
  $region1: #{attn_block_pallas.3} parent=0
    #allocation4 [shape = 'u8[131072]{0}', space=vmem, size = 0x20000, scoped, tag = 'output window, operand 0']
    #allocation5 [shape = 's32[2]{0}', space=sflag, size = 0x8, scoped, tag = 'scoped memory for attn_block_pallas.3']
    %17 = vsyncpa [#allocation5], 0
    %s18 = scalar_lea.sflag [#allocation5], 1
    %19 = vsyncpa %s18, 0
    loop: start=0, step=1, limit=6
    $region2: #{attn_block_pallas.3} parent=1 // loop_pre_header
      _
    $region3: #{attn_block_pallas.3} parent=1 // loop_header
      %s21 = sphi 0, %s25
      %p22 = scmp.ge.s32.totalorder %s21, 6
      %s28 = sphi 0, %s40
      %s29 = sphi 0, %s36
      %s30 = sphi 0, %s28
      %s31 = sphi 0, %s29
      %s32 = sphi 0, %s30
      %s33 = sphi 0, %s31
      %s43 = sphi 0, %s45
      %s46 = sphi 0, %s43
      %s47 = sphi 0, %s46
      %s63 = sphi 0, %s47
      %s71 = sphi 0, %s73
      %s74 = sphi 0, %s71
      %s75 = sphi 0, %s74
      %s91 = sphi 0, %s75
      %s97 = sphi 0, %s99
      %s100 = sphi 0, %s97
      %s101 = sphi 0, %s100
      %s117 = sphi 0, %s101
      %s123 = sphi 0, %s125
      %s126 = sphi 0, %s123
      %s127 = sphi 0, %s126
      %s143 = sphi 0, %s127
      %s147 = sphi 0, %s147
      %s149 = sphi 0, %s147
      %s150 = sphi 0, %s149
      %s164 = sphi 0, %s150
      %s168 = sphi 0, %s168
      %s170 = sphi 0, %s168
      %s171 = sphi 0, %s170
      %s185 = sphi 0, %s171
      %s189 = sphi 0, %s189
      %s191 = sphi 0, %s189
      %s192 = sphi 0, %s191
      %s206 = sphi 0, %s192
      %s210 = sphi 0, %s210
      %s212 = sphi 0, %s210
      %s213 = sphi 0, %s212
      %s227 = sphi 0, %s213
      %s231 = sphi 0, %s231
      %s233 = sphi 0, %s231
      %s234 = sphi 0, %s233
      %s248 = sphi 0, %s234
      %s252 = sphi 0, %s252
      %s254 = sphi 0, %s252
      %s255 = sphi 0, %s254
      %s269 = sphi 0, %s255
      %s273 = sphi 0, %s273
      %s275 = sphi 0, %s273
      %s276 = sphi 0, %s275
      %s290 = sphi 0, %s276
      %s294 = sphi 0, %s294
      %s296 = sphi 0, %s294
      %s297 = sphi 0, %s296
      %s311 = sphi 0, %s297
      %s319 = sphi 0, %s321
      %s322 = sphi 0, %s319
      %s323 = sphi 0, %s322
      %s339 = sphi 0, %s323
    $region4: #{attn_block_pallas.3} parent=1 // loop_header_branch
      %24 = sbr.rel (%p22) target = $region8
    $region5: #{attn_block_pallas.3} parent=1 // loop_body
      %s26 = ssub.s32 %s21, 1
      %s27 = ssub.s32 %s21, 2
      %s34 = sadd.s32 1, %s29
      %p35 = scmp.ge.s32.totalorder %s34, 2
      %s36 = scalar_select %p35, 0, %s34
      %s37 = sadd.s32 1, %s28
      %s38 = scalar_select %p35, %s37, %s28
      %p39 = scmp.ge.s32.totalorder %s38, 2
      %s40 = scalar_select %p39, 0, %s38
      %s41 = ssub.s32 %s28, %s40
      %p42 = scmp.eq.s32.totalorder %s41, 0
      %s44 = sadd.s32 %s43, 1
      %s45 = scalar_select %p42, %s43, %s44
      %p48 = pneg %p42
      %p49 = scmp.eq.s32.totalorder %s21, 3
      %p50 = por %p48, %p49
      %p51 = scmp.ne.s32.totalorder %s43, %s46
      %p52 = scmp.eq.s32.totalorder %s21, 0
      %p53 = por %p51, %p52
      %p54 = scmp.ne.s32.totalorder %s43, %s46
      %p55 = scmp.eq.s32.totalorder %s26, 3
      %p56 = por %p54, %p55
      %p57 = scmp.ne.s32.totalorder %s46, %s47
      %p58 = scmp.eq.s32.totalorder %s26, 0
      %p59 = por %p57, %p58
      %p60 = scmp.ne.s32.totalorder %s46, %s47
      %p61 = scmp.eq.s32.totalorder %s27, 3
      %p62 = por %p60, %p61
      %p64 = scmp.ne.s32.totalorder %s47, %s63
      %p65 = scmp.eq.s32.totalorder %s27, 0
      %p66 = por %p64, %p65
      %s67 = ssub.s32 %s28, %s40
      %s68 = ssub.s32 %s29, %s36
      %s69 = sor.u32 %s67, %s68
      %p70 = scmp.eq.s32.totalorder %s69, 0
      %s72 = sadd.s32 %s71, 1
      %s73 = scalar_select %p70, %s71, %s72
      %p76 = pneg %p70
      %p77 = scmp.eq.s32.totalorder %s21, 3
      %p78 = por %p76, %p77
      %p79 = scmp.ne.s32.totalorder %s71, %s74
      %p80 = scmp.eq.s32.totalorder %s21, 0
      %p81 = por %p79, %p80
      %p82 = scmp.ne.s32.totalorder %s71, %s74
      %p83 = scmp.eq.s32.totalorder %s26, 3
      %p84 = por %p82, %p83
      %p85 = scmp.ne.s32.totalorder %s74, %s75
      %p86 = scmp.eq.s32.totalorder %s26, 0
      %p87 = por %p85, %p86
      %p88 = scmp.ne.s32.totalorder %s74, %s75
      %p89 = scmp.eq.s32.totalorder %s27, 3
      %p90 = por %p88, %p89
      %p92 = scmp.ne.s32.totalorder %s75, %s91
      %p93 = scmp.eq.s32.totalorder %s27, 0
      %p94 = por %p92, %p93
      %s95 = ssub.s32 %s28, %s40
      %p96 = scmp.eq.s32.totalorder %s95, 0
      %s98 = sadd.s32 %s97, 1
      %s99 = scalar_select %p96, %s97, %s98
      %p102 = pneg %p96
      %p103 = scmp.eq.s32.totalorder %s21, 3
      %p104 = por %p102, %p103
      %p105 = scmp.ne.s32.totalorder %s97, %s100
      %p106 = scmp.eq.s32.totalorder %s21, 0
      %p107 = por %p105, %p106
      %p108 = scmp.ne.s32.totalorder %s97, %s100
      %p109 = scmp.eq.s32.totalorder %s26, 3
      %p110 = por %p108, %p109
      %p111 = scmp.ne.s32.totalorder %s100, %s101
      %p112 = scmp.eq.s32.totalorder %s26, 0
      %p113 = por %p111, %p112
      %p114 = scmp.ne.s32.totalorder %s100, %s101
      %p115 = scmp.eq.s32.totalorder %s27, 3
      %p116 = por %p114, %p115
      %p118 = scmp.ne.s32.totalorder %s101, %s117
      %p119 = scmp.eq.s32.totalorder %s27, 0
      %p120 = por %p118, %p119
      %s121 = ssub.s32 %s28, %s40
      %p122 = scmp.eq.s32.totalorder %s121, 0
      %s124 = sadd.s32 %s123, 1
      %s125 = scalar_select %p122, %s123, %s124
      %p128 = pneg %p122
      %p129 = scmp.eq.s32.totalorder %s21, 3
      %p130 = por %p128, %p129
      %p131 = scmp.ne.s32.totalorder %s123, %s126
      %p132 = scmp.eq.s32.totalorder %s21, 0
      %p133 = por %p131, %p132
      %p134 = scmp.ne.s32.totalorder %s123, %s126
      %p135 = scmp.eq.s32.totalorder %s26, 3
      %p136 = por %p134, %p135
      %p137 = scmp.ne.s32.totalorder %s126, %s127
      %p138 = scmp.eq.s32.totalorder %s26, 0
      %p139 = por %p137, %p138
      %p140 = scmp.ne.s32.totalorder %s126, %s127
      %p141 = scmp.eq.s32.totalorder %s27, 3
      %p142 = por %p140, %p141
      %p144 = scmp.ne.s32.totalorder %s127, %s143
      %p145 = scmp.eq.s32.totalorder %s27, 0
      %p146 = por %p144, %p145
      %s148 = sadd.s32 %s147, 1
      %p151 = scmp.eq.s32.totalorder %s21, 3
      %p152 = scmp.ne.s32.totalorder %s147, %s149
      %p153 = scmp.eq.s32.totalorder %s21, 0
      %p154 = por %p152, %p153
      %p155 = scmp.ne.s32.totalorder %s147, %s149
      %p156 = scmp.eq.s32.totalorder %s26, 3
      %p157 = por %p155, %p156
      %p158 = scmp.ne.s32.totalorder %s149, %s150
      %p159 = scmp.eq.s32.totalorder %s26, 0
      %p160 = por %p158, %p159
      %p161 = scmp.ne.s32.totalorder %s149, %s150
      %p162 = scmp.eq.s32.totalorder %s27, 3
      %p163 = por %p161, %p162
      %p165 = scmp.ne.s32.totalorder %s150, %s164
      %p166 = scmp.eq.s32.totalorder %s27, 0
      %p167 = por %p165, %p166
      %s169 = sadd.s32 %s168, 1
      %p172 = scmp.eq.s32.totalorder %s21, 3
      %p173 = scmp.ne.s32.totalorder %s168, %s170
      %p174 = scmp.eq.s32.totalorder %s21, 0
      %p175 = por %p173, %p174
      %p176 = scmp.ne.s32.totalorder %s168, %s170
      %p177 = scmp.eq.s32.totalorder %s26, 3
      %p178 = por %p176, %p177
      %p179 = scmp.ne.s32.totalorder %s170, %s171
      %p180 = scmp.eq.s32.totalorder %s26, 0
      %p181 = por %p179, %p180
      %p182 = scmp.ne.s32.totalorder %s170, %s171
      %p183 = scmp.eq.s32.totalorder %s27, 3
      %p184 = por %p182, %p183
      %p186 = scmp.ne.s32.totalorder %s171, %s185
      %p187 = scmp.eq.s32.totalorder %s27, 0
      %p188 = por %p186, %p187
      %s190 = sadd.s32 %s189, 1
      %p193 = scmp.eq.s32.totalorder %s21, 3
      %p194 = scmp.ne.s32.totalorder %s189, %s191
      %p195 = scmp.eq.s32.totalorder %s21, 0
      %p196 = por %p194, %p195
      %p197 = scmp.ne.s32.totalorder %s189, %s191
      %p198 = scmp.eq.s32.totalorder %s26, 3
      %p199 = por %p197, %p198
      %p200 = scmp.ne.s32.totalorder %s191, %s192
      %p201 = scmp.eq.s32.totalorder %s26, 0
      %p202 = por %p200, %p201
      %p203 = scmp.ne.s32.totalorder %s191, %s192
      %p204 = scmp.eq.s32.totalorder %s27, 3
      %p205 = por %p203, %p204
      %p207 = scmp.ne.s32.totalorder %s192, %s206
      %p208 = scmp.eq.s32.totalorder %s27, 0
      %p209 = por %p207, %p208
      %s211 = sadd.s32 %s210, 1
      %p214 = scmp.eq.s32.totalorder %s21, 3
      %p215 = scmp.ne.s32.totalorder %s210, %s212
      %p216 = scmp.eq.s32.totalorder %s21, 0
      %p217 = por %p215, %p216
      %p218 = scmp.ne.s32.totalorder %s210, %s212
      %p219 = scmp.eq.s32.totalorder %s26, 3
      %p220 = por %p218, %p219
      %p221 = scmp.ne.s32.totalorder %s212, %s213
      %p222 = scmp.eq.s32.totalorder %s26, 0
      %p223 = por %p221, %p222
      %p224 = scmp.ne.s32.totalorder %s212, %s213
      %p225 = scmp.eq.s32.totalorder %s27, 3
      %p226 = por %p224, %p225
      %p228 = scmp.ne.s32.totalorder %s213, %s227
      %p229 = scmp.eq.s32.totalorder %s27, 0
      %p230 = por %p228, %p229
      %s232 = sadd.s32 %s231, 1
      %p235 = scmp.eq.s32.totalorder %s21, 3
      %p236 = scmp.ne.s32.totalorder %s231, %s233
      %p237 = scmp.eq.s32.totalorder %s21, 0
      %p238 = por %p236, %p237
      %p239 = scmp.ne.s32.totalorder %s231, %s233
      %p240 = scmp.eq.s32.totalorder %s26, 3
      %p241 = por %p239, %p240
      %p242 = scmp.ne.s32.totalorder %s233, %s234
      %p243 = scmp.eq.s32.totalorder %s26, 0
      %p244 = por %p242, %p243
      %p245 = scmp.ne.s32.totalorder %s233, %s234
      %p246 = scmp.eq.s32.totalorder %s27, 3
      %p247 = por %p245, %p246
      %p249 = scmp.ne.s32.totalorder %s234, %s248
      %p250 = scmp.eq.s32.totalorder %s27, 0
      %p251 = por %p249, %p250
      %s253 = sadd.s32 %s252, 1
      %p256 = scmp.eq.s32.totalorder %s21, 3
      %p257 = scmp.ne.s32.totalorder %s252, %s254
      %p258 = scmp.eq.s32.totalorder %s21, 0
      %p259 = por %p257, %p258
      %p260 = scmp.ne.s32.totalorder %s252, %s254
      %p261 = scmp.eq.s32.totalorder %s26, 3
      %p262 = por %p260, %p261
      %p263 = scmp.ne.s32.totalorder %s254, %s255
      %p264 = scmp.eq.s32.totalorder %s26, 0
      %p265 = por %p263, %p264
      %p266 = scmp.ne.s32.totalorder %s254, %s255
      %p267 = scmp.eq.s32.totalorder %s27, 3
      %p268 = por %p266, %p267
      %p270 = scmp.ne.s32.totalorder %s255, %s269
      %p271 = scmp.eq.s32.totalorder %s27, 0
      %p272 = por %p270, %p271
      %s274 = sadd.s32 %s273, 1
      %p277 = scmp.eq.s32.totalorder %s21, 3
      %p278 = scmp.ne.s32.totalorder %s273, %s275
      %p279 = scmp.eq.s32.totalorder %s21, 0
      %p280 = por %p278, %p279
      %p281 = scmp.ne.s32.totalorder %s273, %s275
      %p282 = scmp.eq.s32.totalorder %s26, 3
      %p283 = por %p281, %p282
      %p284 = scmp.ne.s32.totalorder %s275, %s276
      %p285 = scmp.eq.s32.totalorder %s26, 0
      %p286 = por %p284, %p285
      %p287 = scmp.ne.s32.totalorder %s275, %s276
      %p288 = scmp.eq.s32.totalorder %s27, 3
      %p289 = por %p287, %p288
      %p291 = scmp.ne.s32.totalorder %s276, %s290
      %p292 = scmp.eq.s32.totalorder %s27, 0
      %p293 = por %p291, %p292
      %s295 = sadd.s32 %s294, 1
      %p298 = scmp.eq.s32.totalorder %s21, 3
      %p299 = scmp.ne.s32.totalorder %s294, %s296
      %p300 = scmp.eq.s32.totalorder %s21, 0
      %p301 = por %p299, %p300
      %p302 = scmp.ne.s32.totalorder %s294, %s296
      %p303 = scmp.eq.s32.totalorder %s26, 3
      %p304 = por %p302, %p303
      %p305 = scmp.ne.s32.totalorder %s296, %s297
      %p306 = scmp.eq.s32.totalorder %s26, 0
      %p307 = por %p305, %p306
      %p308 = scmp.ne.s32.totalorder %s296, %s297
      %p309 = scmp.eq.s32.totalorder %s27, 3
      %p310 = por %p308, %p309
      %p312 = scmp.ne.s32.totalorder %s297, %s311
      %p313 = scmp.eq.s32.totalorder %s27, 0
      %p314 = por %p312, %p313
      %s315 = ssub.s32 %s28, %s40
      %s316 = ssub.s32 %s29, %s36
      %s317 = sor.u32 %s315, %s316
      %p318 = scmp.eq.s32.totalorder %s317, 0
      %s320 = sadd.s32 %s319, 1
      %s321 = scalar_select %p318, %s319, %s320
      %p324 = pneg %p318
      %p325 = scmp.eq.s32.totalorder %s21, 3
      %p326 = por %p324, %p325
      %p327 = scmp.ne.s32.totalorder %s319, %s322
      %p328 = scmp.eq.s32.totalorder %s21, 0
      %p329 = por %p327, %p328
      %p330 = scmp.ne.s32.totalorder %s319, %s322
      %p331 = scmp.eq.s32.totalorder %s26, 3
      %p332 = por %p330, %p331
      %p333 = scmp.ne.s32.totalorder %s322, %s323
      %p334 = scmp.eq.s32.totalorder %s26, 0
      %p335 = por %p333, %p334
      %p336 = scmp.ne.s32.totalorder %s322, %s323
      %p337 = scmp.eq.s32.totalorder %s27, 3
      %p338 = por %p336, %p337
      %p340 = scmp.ne.s32.totalorder %s323, %s339
      %p341 = scmp.eq.s32.totalorder %s27, 0
      %p342 = por %p340, %p341
      %p343 = scmp.le.s32.totalorder 1, %s21
      %p344 = scmp.lt.s32.totalorder %s21, 5
      %p345 = pnand %p343, %p344
      %p346 = pneg %p345
      // Predicated region
      $region9: #{attn_block_pallas.3} parent=5 // pred_check
        _
      $region10: #{attn_block_pallas.3} parent=5 // pred_check_branch
        %348 = sbr.rel (%p345) target = $region12
      $region11: #{attn_block_pallas.3} parent=5 // pred_region
        %s349 = ssub.s32 %s21, 1
        // Predicated region
        $region13: #{attn_block_pallas.3} parent=11 // pred_check
          %p350 = pneg %p160
        $region14: #{attn_block_pallas.3} parent=11 // pred_check_branch
          %352 = sbr.rel (%p350) target = $region16
        $region15: #{attn_block_pallas.3} parent=11 // pred_region
          _
        $region16: #{attn_block_pallas.3} parent=11 // pred_fallthru
          _
        // Predicated region
        $region17: #{attn_block_pallas.3} parent=11 // pred_check
          %p353 = pneg %p181
        $region18: #{attn_block_pallas.3} parent=11 // pred_check_branch
          %355 = sbr.rel (%p353) target = $region20
        $region19: #{attn_block_pallas.3} parent=11 // pred_region
          _
        $region20: #{attn_block_pallas.3} parent=11 // pred_fallthru
          _
        // Predicated region
        $region21: #{attn_block_pallas.3} parent=11 // pred_check
          %p356 = pneg %p202
        $region22: #{attn_block_pallas.3} parent=11 // pred_check_branch
          %358 = sbr.rel (%p356) target = $region24
        $region23: #{attn_block_pallas.3} parent=11 // pred_region
          _
        $region24: #{attn_block_pallas.3} parent=11 // pred_fallthru
          _
        // Predicated region
        $region25: #{attn_block_pallas.3} parent=11 // pred_check
          %p359 = pneg %p223
        $region26: #{attn_block_pallas.3} parent=11 // pred_check_branch
          %361 = sbr.rel (%p359) target = $region28
        $region27: #{attn_block_pallas.3} parent=11 // pred_region
          _
        $region28: #{attn_block_pallas.3} parent=11 // pred_fallthru
          _
        // Predicated region
        $region29: #{attn_block_pallas.3} parent=11 // pred_check
          %p362 = pneg %p244
        $region30: #{attn_block_pallas.3} parent=11 // pred_check_branch
          %364 = sbr.rel (%p362) target = $region32
        $region31: #{attn_block_pallas.3} parent=11 // pred_region
          _
        $region32: #{attn_block_pallas.3} parent=11 // pred_fallthru
          _
        // Predicated region
        $region33: #{attn_block_pallas.3} parent=11 // pred_check
          %p365 = pneg %p265
        $region34: #{attn_block_pallas.3} parent=11 // pred_check_branch
          %367 = sbr.rel (%p365) target = $region36
        $region35: #{attn_block_pallas.3} parent=11 // pred_region
          _
        $region36: #{attn_block_pallas.3} parent=11 // pred_fallthru
          _
        // Predicated region
        $region37: #{attn_block_pallas.3} parent=11 // pred_check
          %p368 = pneg %p286
        $region38: #{attn_block_pallas.3} parent=11 // pred_check_branch
          %370 = sbr.rel (%p368) target = $region40
        $region39: #{attn_block_pallas.3} parent=11 // pred_region
          _
        $region40: #{attn_block_pallas.3} parent=11 // pred_fallthru
          _
        // Predicated region
        $region41: #{attn_block_pallas.3} parent=11 // pred_check
          %p371 = pneg %p307
        $region42: #{attn_block_pallas.3} parent=11 // pred_check_branch
          %373 = sbr.rel (%p371) target = $region44
        $region43: #{attn_block_pallas.3} parent=11 // pred_region
          _
        $region44: #{attn_block_pallas.3} parent=11 // pred_fallthru
          _
      $region12: #{attn_block_pallas.3} parent=5 // pred_fallthru
        _
      %p374 = scmp.lt.s32.totalorder %s21, 4
      // Predicated region
      $region45: #{attn_block_pallas.3} parent=5 // pred_check
        %p375 = pneg %p374
      $region46: #{attn_block_pallas.3} parent=5 // pred_check_branch
        %377 = sbr.rel (%p375) target = $region48
      $region47: #{attn_block_pallas.3} parent=5 // pred_region
        // Predicated region
        $region49: #{attn_block_pallas.3} parent=47 // pred_check
          %p378 = pneg %p53
        $region50: #{attn_block_pallas.3} parent=47 // pred_check_branch
          %380 = sbr.rel (%p378) target = $region52
        $region51: #{attn_block_pallas.3} parent=47 // pred_region
          %p381 = scmp.lt.s32.totalorder %s28, 1
          %s382 = scalar_select %p381, %s28, 1
          %s383 = smul.addr %s382, 32
          %s384 = smul.addr %s383, 8
          %s385 = scalar_lea.vmem %s0, %s384
        $region52: #{attn_block_pallas.3} parent=47 // pred_fallthru
          _
        // Predicated region
        $region53: #{attn_block_pallas.3} parent=47 // pred_check
          %p386 = pneg %p81
        $region54: #{attn_block_pallas.3} parent=47 // pred_check_branch
          %388 = sbr.rel (%p386) target = $region56
        $region55: #{attn_block_pallas.3} parent=47 // pred_region
          %s389 = smul.u32 16, %s29
          %p390 = scmp.lt.s32.totalorder %s28, 1
          %s391 = scalar_select %p390, %s28, 1
          %p392 = scmp.lt.s32.totalorder %s389, 31
          %s393 = scalar_select %p392, %s389, 31
          %s394 = smul.addr %s391, 32
          %s395 = sadd.s32 %s393, %s394
          %s396 = smul.addr %s395, 8
          %s397 = scalar_lea.vmem %s1, %s396
          %s398 = smul.u32 16, %s29
        $region56: #{attn_block_pallas.3} parent=47 // pred_fallthru
          _
        // Predicated region
        $region57: #{attn_block_pallas.3} parent=47 // pred_check
          %p399 = pneg %p107
        $region58: #{attn_block_pallas.3} parent=47 // pred_check_branch
          %401 = sbr.rel (%p399) target = $region60
        $region59: #{attn_block_pallas.3} parent=47 // pred_region
          %p402 = scmp.lt.s32.totalorder %s28, 1
          %s403 = scalar_select %p402, %s28, 1
          %s404 = scalar_lea.vmem %s2, %s403
        $region60: #{attn_block_pallas.3} parent=47 // pred_fallthru
          _
        // Predicated region
        $region61: #{attn_block_pallas.3} parent=47 // pred_check
          %p405 = pneg %p133
        $region62: #{attn_block_pallas.3} parent=47 // pred_check_branch
          %407 = sbr.rel (%p405) target = $region64
        $region63: #{attn_block_pallas.3} parent=47 // pred_region
          %p408 = scmp.lt.s32.totalorder %s28, 1
          %s409 = scalar_select %p408, %s28, 1
          %s410 = scalar_lea.vmem %s3, %s409
        $region64: #{attn_block_pallas.3} parent=47 // pred_fallthru
          _
      $region48: #{attn_block_pallas.3} parent=5 // pred_fallthru
        _
      %p411 = scmp.le.s32.totalorder 1, %s21
      %p412 = scmp.lt.s32.totalorder %s21, 5
      %p413 = pnand %p411, %p412
      %p414 = pneg %p413
      // Predicated region
      $region65: #{attn_block_pallas.3} parent=5 // pred_check
        _
      $region66: #{attn_block_pallas.3} parent=5 // pred_check_branch
        %416 = sbr.rel (%p413) target = $region68
      $region67: #{attn_block_pallas.3} parent=5 // pred_region
        %s417 = ssub.s32 %s21, 1
        %p418 = scmp.lt.s32.totalorder %s30, 1
        %s419 = scalar_select %p418, %s30, 1
        %s420 = smul.addr %s419, 32
        %s421 = smul.addr %s420, 8
        %s422 = scalar_lea.vmem %s0, %s421
        %p423 = pneg %p59
        %p424 = pneg %p56
        %s425 = smul.u32 16, %s31
        %p426 = scmp.lt.s32.totalorder %s30, 1
        %s427 = scalar_select %p426, %s30, 1
        %p428 = scmp.lt.s32.totalorder %s425, 31
        %s429 = scalar_select %p428, %s425, 31
        %s430 = smul.addr %s427, 32
        %s431 = sadd.s32 %s429, %s430
        %s432 = smul.addr %s431, 8
        %s433 = scalar_lea.vmem %s1, %s432
        %p434 = pneg %p87
        %p435 = pneg %p84
        %p436 = scmp.lt.s32.totalorder %s30, 1
        %s437 = scalar_select %p436, %s30, 1
        %s438 = scalar_lea.vmem %s2, %s437
        %p439 = pneg %p113
        %p440 = pneg %p110
        %p441 = scmp.lt.s32.totalorder %s30, 1
        %s442 = scalar_select %p441, %s30, 1
        %s443 = scalar_lea.vmem %s3, %s442
        %p444 = pneg %p139
        %p445 = pneg %p136
        %p446 = pneg %p160
        %p447 = pneg %p157
        %p448 = pneg %p181
        %p449 = pneg %p178
        %p450 = pneg %p202
        %p451 = pneg %p199
        %p452 = pneg %p223
        %p453 = pneg %p220
        %p454 = pneg %p244
        %p455 = pneg %p241
        %p456 = pneg %p265
        %p457 = pneg %p262
        %p458 = pneg %p286
        %p459 = pneg %p283
        %p460 = pneg %p307
        %p461 = pneg %p304
        %p462 = pneg %p335
        %p463 = pneg %p332
        %s464 = sand.u32 %s322, 1
        %s465 = scalar_lea.sflag [#allocation5], %s464
        %s466 = sand.u32 %s322, 1
        %s467 = smul.addr %s466, 128
        %s468 = scalar_lea.vmem [#allocation4], %s467
        %p469 = scmp.lt.s32.totalorder %s30, 1
        %s470 = scalar_select %p469, %s30, 1
        %s471 = smul.addr %s470, 32
        %s472 = smul.addr %s471, 8
        %s473 = scalar_lea.vmem %s0, %s472
        %s474 = smul.u32 16, %s31
        %p475 = scmp.lt.s32.totalorder %s30, 1
        %s476 = scalar_select %p475, %s30, 1
        %p477 = scmp.lt.s32.totalorder %s474, 31
        %s478 = scalar_select %p477, %s474, 31
        %s479 = smul.addr %s476, 32
        %s480 = sadd.s32 %s478, %s479
        %s481 = smul.addr %s480, 8
        %s482 = scalar_lea.vmem %s1, %s481
        %s483 = smul.u32 16, %s31
        %p484 = scmp.lt.s32.totalorder %s30, 1
        %s485 = scalar_select %p484, %s30, 1
        %s486 = scalar_lea.vmem %s2, %s485
        %p487 = scmp.lt.s32.totalorder %s30, 1
        %s488 = scalar_select %p487, %s30, 1
        %s489 = scalar_lea.vmem %s3, %s488
        %s490 = smul.u32 16, %s31
        %v491 = vld [vmem:[%s486] sm:$0x1]
        %v492 = vld [vmem:[%s489] sm:$0x1]
        %p493 = scmp.eq.s32.totalorder %s31, 0
        // Predicated region
        $region69: #{attn_block_pallas.3} parent=67 // pred_check
          %p494 = pneg %p493
        $region70: #{attn_block_pallas.3} parent=67 // pred_check_branch
          %496 = sbr.rel (%p494) target = $region72
        $region71: #{attn_block_pallas.3} parent=67 // pred_region
          %v497 = vld [vmem:[%s473] sm:$0xff]
          %v498 = vld [vmem:[%s473 + $0x8] sm:$0xff]
          %v499 = vld [vmem:[%s473 + $0x10] sm:$0xff]
          %v500 = vld [vmem:[%s473 + $0x18] sm:$0xff]
          %v501 = vld [vmem:[%s473 + $0x20] sm:$0xff]
          %v502 = vld [vmem:[%s473 + $0x28] sm:$0xff]
          %v503 = vld [vmem:[%s473 + $0x30] sm:$0xff]
          %v504 = vld [vmem:[%s473 + $0x38] sm:$0xff]
          %v505 = vld [vmem:[%s473 + $0x40] sm:$0xff]
          %v506 = vld [vmem:[%s473 + $0x48] sm:$0xff]
          %v507 = vld [vmem:[%s473 + $0x50] sm:$0xff]
          %v508 = vld [vmem:[%s473 + $0x58] sm:$0xff]
          %v509 = vld [vmem:[%s473 + $0x60] sm:$0xff]
          %v510 = vld [vmem:[%s473 + $0x68] sm:$0xff]
          %v511 = vld [vmem:[%s473 + $0x70] sm:$0xff]
          %v512 = vld [vmem:[%s473 + $0x78] sm:$0xff]
          %v513 = vld [vmem:[%s473 + $0x80] sm:$0xff]
          %v514 = vld [vmem:[%s473 + $0x88] sm:$0xff]
          %v515 = vld [vmem:[%s473 + $0x90] sm:$0xff]
          %v516 = vld [vmem:[%s473 + $0x98] sm:$0xff]
          %v517 = vld [vmem:[%s473 + $0xa0] sm:$0xff]
          %v518 = vld [vmem:[%s473 + $0xa8] sm:$0xff]
          %v519 = vld [vmem:[%s473 + $0xb0] sm:$0xff]
          %v520 = vld [vmem:[%s473 + $0xb8] sm:$0xff]
          %v521 = vld [vmem:[%s473 + $0xc0] sm:$0xff]
          %v522 = vld [vmem:[%s473 + $0xc8] sm:$0xff]
          %v523 = vld [vmem:[%s473 + $0xd0] sm:$0xff]
          %v524 = vld [vmem:[%s473 + $0xd8] sm:$0xff]
          %v525 = vld [vmem:[%s473 + $0xe0] sm:$0xff]
          %v526 = vld [vmem:[%s473 + $0xe8] sm:$0xff]
          %v527 = vld [vmem:[%s473 + $0xf0] sm:$0xff]
          %v528 = vld [vmem:[%s473 + $0xf8] sm:$0xff]
          %v530 = vperm.slane %v491, 0
          %v532 = vmul.f32 %v497, %v530
          %v533 = vmul.f32 %v498, %v530
          %v534 = vmul.f32 %v499, %v530
          %v535 = vmul.f32 %v500, %v530
          %v536 = vmul.f32 %v501, %v530
          %v537 = vmul.f32 %v502, %v530
          %v538 = vmul.f32 %v503, %v530
          %v539 = vmul.f32 %v504, %v530
          %v540 = vmul.f32 %v505, %v530
          %v541 = vmul.f32 %v506, %v530
          %v542 = vmul.f32 %v507, %v530
          %v543 = vmul.f32 %v508, %v530
          %v544 = vmul.f32 %v509, %v530
          %v545 = vmul.f32 %v510, %v530
          %v546 = vmul.f32 %v511, %v530
          %v547 = vmul.f32 %v512, %v530
          %v548 = vmul.f32 %v513, %v530
          %v549 = vmul.f32 %v514, %v530
          %v550 = vmul.f32 %v515, %v530
          %v551 = vmul.f32 %v516, %v530
          %v552 = vmul.f32 %v517, %v530
          %v553 = vmul.f32 %v518, %v530
          %v554 = vmul.f32 %v519, %v530
          %v555 = vmul.f32 %v520, %v530
          %v556 = vmul.f32 %v521, %v530
          %v557 = vmul.f32 %v522, %v530
          %v558 = vmul.f32 %v523, %v530
          %v559 = vmul.f32 %v524, %v530
          %v560 = vmul.f32 %v525, %v530
          %v561 = vmul.f32 %v526, %v530
          %v562 = vmul.f32 %v527, %v530
          %v563 = vmul.f32 %v528, %v530
          %v565 = vperm.slane %v492, 0
          %v567 = vadd.f32 %v532, %v565
          %v568 = vadd.f32 %v533, %v565
          %v569 = vadd.f32 %v534, %v565
          %v570 = vadd.f32 %v535, %v565
          %v571 = vadd.f32 %v536, %v565
          %v572 = vadd.f32 %v537, %v565
          %v573 = vadd.f32 %v538, %v565
          %v574 = vadd.f32 %v539, %v565
          %v575 = vadd.f32 %v540, %v565
          %v576 = vadd.f32 %v541, %v565
          %v577 = vadd.f32 %v542, %v565
          %v578 = vadd.f32 %v543, %v565
          %v579 = vadd.f32 %v544, %v565
          %v580 = vadd.f32 %v545, %v565
          %v581 = vadd.f32 %v546, %v565
          %v582 = vadd.f32 %v547, %v565
          %v583 = vadd.f32 %v548, %v565
          %v584 = vadd.f32 %v549, %v565
          %v585 = vadd.f32 %v550, %v565
          %v586 = vadd.f32 %v551, %v565
          %v587 = vadd.f32 %v552, %v565
          %v588 = vadd.f32 %v553, %v565
          %v589 = vadd.f32 %v554, %v565
          %v590 = vadd.f32 %v555, %v565
          %v591 = vadd.f32 %v556, %v565
          %v592 = vadd.f32 %v557, %v565
          %v593 = vadd.f32 %v558, %v565
          %v594 = vadd.f32 %v559, %v565
          %v595 = vadd.f32 %v560, %v565
          %v596 = vadd.f32 %v561, %v565
          %v597 = vadd.f32 %v562, %v565
          %v598 = vadd.f32 %v563, %v565
          %v599 = vpack.c.bf16 %v568, %v567
          %v600 = vpack.c.bf16 %v570, %v569
          %v601 = vpack.c.bf16 %v572, %v571
          %v602 = vpack.c.bf16 %v574, %v573
          %v603 = vpack.c.bf16 %v576, %v575
          %v604 = vpack.c.bf16 %v578, %v577
          %v605 = vpack.c.bf16 %v580, %v579
          %v606 = vpack.c.bf16 %v582, %v581
          %v607 = vpack.c.bf16 %v584, %v583
          %v608 = vpack.c.bf16 %v586, %v585
          %v609 = vpack.c.bf16 %v588, %v587
          %v610 = vpack.c.bf16 %v590, %v589
          %v611 = vpack.c.bf16 %v592, %v591
          %v612 = vpack.c.bf16 %v594, %v593
          %v613 = vpack.c.bf16 %v596, %v595
          %v614 = vpack.c.bf16 %v598, %v597
          %v615 = vld [vmem:[%s6] sm:$0xf]
          %v616 = vld [vmem:[%s6 + $0x4] sm:$0xf]
          %v617 = vld [vmem:[%s6 + $0x8] sm:$0xf]
          %v618 = vld [vmem:[%s6 + $0xc] sm:$0xf]
          %v619 = vld [vmem:[%s6 + $0x10] sm:$0xf]
          %v620 = vld [vmem:[%s6 + $0x14] sm:$0xf]
          %v621 = vld [vmem:[%s6 + $0x18] sm:$0xf]
          %v622 = vld [vmem:[%s6 + $0x1c] sm:$0xf]
          %v623 = vld [vmem:[%s6 + $0x20] sm:$0xf]
          %v624 = vld [vmem:[%s6 + $0x24] sm:$0xf]
          %v625 = vld [vmem:[%s6 + $0x28] sm:$0xf]
          %v626 = vld [vmem:[%s6 + $0x2c] sm:$0xf]
          %v627 = vld [vmem:[%s6 + $0x30] sm:$0xf]
          %v628 = vld [vmem:[%s6 + $0x34] sm:$0xf]
          %v629 = vld [vmem:[%s6 + $0x38] sm:$0xf]
          %v630 = vld [vmem:[%s6 + $0x3c] sm:$0xf]
          %v631 = vld [vmem:[%s7] sm:$0x1]
          %v633 = vperm.slane %v631, 0
          %v651 = vunpack.c.l.b16 %v615
          %v652 = vunpack.c.l.b16 %v616
          %v653 = vunpack.c.l.b16 %v617
          %v654 = vunpack.c.l.b16 %v618
          %v655 = vunpack.c.l.b16 %v619
          %v656 = vunpack.c.l.b16 %v620
          %v657 = vunpack.c.l.b16 %v621
          %v658 = vunpack.c.l.b16 %v622
          %v659 = vunpack.c.l.b16 %v623
          %v660 = vunpack.c.l.b16 %v624
          %v661 = vunpack.c.l.b16 %v625
          %v662 = vunpack.c.l.b16 %v626
          %v663 = vunpack.c.l.b16 %v627
          %v664 = vunpack.c.l.b16 %v628
          %v665 = vunpack.c.l.b16 %v629
          %v666 = vunpack.c.l.b16 %v630
          %v667 = vpack.c.b16 %v652, %v651
          %v668 = vpack.c.b16 %v654, %v653
          %v669 = vpack.c.b16 %v656, %v655
          %v670 = vpack.c.b16 %v658, %v657
          %v671 = vpack.c.b16 %v660, %v659
          %v672 = vpack.c.b16 %v662, %v661
          %v673 = vpack.c.b16 %v664, %v663
          %v674 = vpack.c.b16 %v666, %v665
          %683 = vmatpush.bf16.msra.mxu0 %v674
          %684 = vmatpush.bf16.msra.mxu0 %v673
          %685 = vmatpush.bf16.msra.mxu0 %v672
          %686 = vmatpush.bf16.msra.mxu0 %v671
          %687 = vmatpush.bf16.msra.mxu0 %v670
          %688 = vmatpush.bf16.msra.mxu0 %v669
          %689 = vmatpush.bf16.msra.mxu0 %v668
          %690 = vmatpush.bf16.msra.mxu0 %v667
          %691 = vmatmul.bf16.gmra.mxu0 %v599
          %v692 = vpop.f32.mrf.mxu0
          %v693 = vadd.f32 %v633, %v692
          %v694 = vpop.f32.mrf.mxu0
          %v695 = vadd.f32 %v633, %v694
          %696 = vmatmul.bf16.gmra.mxu0 %v600
          %v697 = vpop.f32.mrf.mxu0
          %v698 = vadd.f32 %v633, %v697
          %v699 = vpop.f32.mrf.mxu0
          %v700 = vadd.f32 %v633, %v699
          %701 = vmatmul.bf16.gmra.mxu0 %v601
          %v702 = vpop.f32.mrf.mxu0
          %v703 = vadd.f32 %v633, %v702
          %v704 = vpop.f32.mrf.mxu0
          %v705 = vadd.f32 %v633, %v704
          %706 = vmatmul.bf16.gmra.mxu0 %v602
          %v707 = vpop.f32.mrf.mxu0
          %v708 = vadd.f32 %v633, %v707
          %v709 = vpop.f32.mrf.mxu0
          %v710 = vadd.f32 %v633, %v709
          %711 = vmatmul.bf16.gmra.mxu0 %v603
          %v712 = vpop.f32.mrf.mxu0
          %v713 = vadd.f32 %v633, %v712
          %v714 = vpop.f32.mrf.mxu0
          %v715 = vadd.f32 %v633, %v714
          %716 = vmatmul.bf16.gmra.mxu0 %v604
          %v717 = vpop.f32.mrf.mxu0
          %v718 = vadd.f32 %v633, %v717
          %v719 = vpop.f32.mrf.mxu0
          %v720 = vadd.f32 %v633, %v719
          %721 = vmatmul.bf16.gmra.mxu0 %v605
          %v722 = vpop.f32.mrf.mxu0
          %v723 = vadd.f32 %v633, %v722
          %v724 = vpop.f32.mrf.mxu0
          %v725 = vadd.f32 %v633, %v724
          %726 = vmatmul.bf16.gmra.mxu0 %v606
          %v727 = vpop.f32.mrf.mxu0
          %v728 = vadd.f32 %v633, %v727
          %v729 = vpop.f32.mrf.mxu0
          %v730 = vadd.f32 %v633, %v729
          %731 = vmatmul.bf16.gmra.mxu0 %v607
          %v732 = vpop.f32.mrf.mxu0
          %v733 = vadd.f32 %v633, %v732
          %v734 = vpop.f32.mrf.mxu0
          %v735 = vadd.f32 %v633, %v734
          %736 = vmatmul.bf16.gmra.mxu0 %v608
          %v737 = vpop.f32.mrf.mxu0
          %v738 = vadd.f32 %v633, %v737
          %v739 = vpop.f32.mrf.mxu0
          %v740 = vadd.f32 %v633, %v739
          %741 = vmatmul.bf16.gmra.mxu0 %v609
          %v742 = vpop.f32.mrf.mxu0
          %v743 = vadd.f32 %v633, %v742
          %v744 = vpop.f32.mrf.mxu0
          %v745 = vadd.f32 %v633, %v744
          %746 = vmatmul.bf16.gmra.mxu0 %v610
          %v747 = vpop.f32.mrf.mxu0
          %v748 = vadd.f32 %v633, %v747
          %v749 = vpop.f32.mrf.mxu0
          %v750 = vadd.f32 %v633, %v749
          %751 = vmatmul.bf16.gmra.mxu0 %v611
          %v752 = vpop.f32.mrf.mxu0
          %v753 = vadd.f32 %v633, %v752
          %v754 = vpop.f32.mrf.mxu0
          %v755 = vadd.f32 %v633, %v754
          %756 = vmatmul.bf16.gmra.mxu0 %v612
          %v757 = vpop.f32.mrf.mxu0
          %v758 = vadd.f32 %v633, %v757
          %v759 = vpop.f32.mrf.mxu0
          %v760 = vadd.f32 %v633, %v759
          %761 = vmatmul.bf16.gmra.mxu0 %v613
          %v762 = vpop.f32.mrf.mxu0
          %v763 = vadd.f32 %v633, %v762
          %v764 = vpop.f32.mrf.mxu0
          %v765 = vadd.f32 %v633, %v764
          %766 = vmatmul.bf16.gmra.mxu0 %v614
          %v767 = vpop.f32.mrf.mxu0
          %v768 = vadd.f32 %v633, %v767
          %v769 = vpop.f32.mrf.mxu0
          %v770 = vadd.f32 %v633, %v769
          %771 = vdwg.mxu0
          %v772 = vld [vmem:[%s8] sm:$0xf]
          %v773 = vld [vmem:[%s8 + $0x4] sm:$0xf]
          %v774 = vld [vmem:[%s8 + $0x8] sm:$0xf]
          %v775 = vld [vmem:[%s8 + $0xc] sm:$0xf]
          %v776 = vld [vmem:[%s8 + $0x10] sm:$0xf]
          %v777 = vld [vmem:[%s8 + $0x14] sm:$0xf]
          %v778 = vld [vmem:[%s8 + $0x18] sm:$0xf]
          %v779 = vld [vmem:[%s8 + $0x1c] sm:$0xf]
          %v780 = vld [vmem:[%s8 + $0x20] sm:$0xf]
          %v781 = vld [vmem:[%s8 + $0x24] sm:$0xf]
          %v782 = vld [vmem:[%s8 + $0x28] sm:$0xf]
          %v783 = vld [vmem:[%s8 + $0x2c] sm:$0xf]
          %v784 = vld [vmem:[%s8 + $0x30] sm:$0xf]
          %v785 = vld [vmem:[%s8 + $0x34] sm:$0xf]
          %v786 = vld [vmem:[%s8 + $0x38] sm:$0xf]
          %v787 = vld [vmem:[%s8 + $0x3c] sm:$0xf]
          %v788 = vld [vmem:[%s9] sm:$0x1]
          %v790 = vperm.slane %v788, 0
          %v808 = vunpack.c.l.b16 %v772
          %v809 = vunpack.c.l.b16 %v773
          %v810 = vunpack.c.l.b16 %v774
          %v811 = vunpack.c.l.b16 %v775
          %v812 = vunpack.c.l.b16 %v776
          %v813 = vunpack.c.l.b16 %v777
          %v814 = vunpack.c.l.b16 %v778
          %v815 = vunpack.c.l.b16 %v779
          %v816 = vunpack.c.l.b16 %v780
          %v817 = vunpack.c.l.b16 %v781
          %v818 = vunpack.c.l.b16 %v782
          %v819 = vunpack.c.l.b16 %v783
          %v820 = vunpack.c.l.b16 %v784
          %v821 = vunpack.c.l.b16 %v785
          %v822 = vunpack.c.l.b16 %v786
          %v823 = vunpack.c.l.b16 %v787
          %v824 = vpack.c.b16 %v809, %v808
          %v825 = vpack.c.b16 %v811, %v810
          %v826 = vpack.c.b16 %v813, %v812
          %v827 = vpack.c.b16 %v815, %v814
          %v828 = vpack.c.b16 %v817, %v816
          %v829 = vpack.c.b16 %v819, %v818
          %v830 = vpack.c.b16 %v821, %v820
          %v831 = vpack.c.b16 %v823, %v822
          %840 = vmatpush.bf16.msra.mxu0 %v831
          %841 = vmatpush.bf16.msra.mxu0 %v830
          %842 = vmatpush.bf16.msra.mxu0 %v829
          %843 = vmatpush.bf16.msra.mxu0 %v828
          %844 = vmatpush.bf16.msra.mxu0 %v827
          %845 = vmatpush.bf16.msra.mxu0 %v826
          %846 = vmatpush.bf16.msra.mxu0 %v825
          %847 = vmatpush.bf16.msra.mxu0 %v824
          %848 = vmatmul.bf16.gmra.mxu0 %v599
          %v849 = vpop.f32.mrf.mxu0
          %v850 = vadd.f32 %v790, %v849
          %v851 = vpop.f32.mrf.mxu0
          %v852 = vadd.f32 %v790, %v851
          %853 = vmatmul.bf16.gmra.mxu0 %v600
          %v854 = vpop.f32.mrf.mxu0
          %v855 = vadd.f32 %v790, %v854
          %v856 = vpop.f32.mrf.mxu0
          %v857 = vadd.f32 %v790, %v856
          %858 = vmatmul.bf16.gmra.mxu0 %v601
          %v859 = vpop.f32.mrf.mxu0
          %v860 = vadd.f32 %v790, %v859
          %v861 = vpop.f32.mrf.mxu0
          %v862 = vadd.f32 %v790, %v861
          %863 = vmatmul.bf16.gmra.mxu0 %v602
          %v864 = vpop.f32.mrf.mxu0
          %v865 = vadd.f32 %v790, %v864
          %v866 = vpop.f32.mrf.mxu0
          %v867 = vadd.f32 %v790, %v866
          %868 = vmatmul.bf16.gmra.mxu0 %v603
          %v869 = vpop.f32.mrf.mxu0
          %v870 = vadd.f32 %v790, %v869
          %v871 = vpop.f32.mrf.mxu0
          %v872 = vadd.f32 %v790, %v871
          %873 = vmatmul.bf16.gmra.mxu0 %v604
          %v874 = vpop.f32.mrf.mxu0
          %v875 = vadd.f32 %v790, %v874
          %v876 = vpop.f32.mrf.mxu0
          %v877 = vadd.f32 %v790, %v876
          %878 = vmatmul.bf16.gmra.mxu0 %v605
          %v879 = vpop.f32.mrf.mxu0
          %v880 = vadd.f32 %v790, %v879
          %v881 = vpop.f32.mrf.mxu0
          %v882 = vadd.f32 %v790, %v881
          %883 = vmatmul.bf16.gmra.mxu0 %v606
          %v884 = vpop.f32.mrf.mxu0
          %v885 = vadd.f32 %v790, %v884
          %v886 = vpop.f32.mrf.mxu0
          %v887 = vadd.f32 %v790, %v886
          %888 = vmatmul.bf16.gmra.mxu0 %v607
          %v889 = vpop.f32.mrf.mxu0
          %v890 = vadd.f32 %v790, %v889
          %v891 = vpop.f32.mrf.mxu0
          %v892 = vadd.f32 %v790, %v891
          %893 = vmatmul.bf16.gmra.mxu0 %v608
          %v894 = vpop.f32.mrf.mxu0
          %v895 = vadd.f32 %v790, %v894
          %v896 = vpop.f32.mrf.mxu0
          %v897 = vadd.f32 %v790, %v896
          %898 = vmatmul.bf16.gmra.mxu0 %v609
          %v899 = vpop.f32.mrf.mxu0
          %v900 = vadd.f32 %v790, %v899
          %v901 = vpop.f32.mrf.mxu0
          %v902 = vadd.f32 %v790, %v901
          %903 = vmatmul.bf16.gmra.mxu0 %v610
          %v904 = vpop.f32.mrf.mxu0
          %v905 = vadd.f32 %v790, %v904
          %v906 = vpop.f32.mrf.mxu0
          %v907 = vadd.f32 %v790, %v906
          %908 = vmatmul.bf16.gmra.mxu0 %v611
          %v909 = vpop.f32.mrf.mxu0
          %v910 = vadd.f32 %v790, %v909
          %v911 = vpop.f32.mrf.mxu0
          %v912 = vadd.f32 %v790, %v911
          %913 = vmatmul.bf16.gmra.mxu0 %v612
          %v914 = vpop.f32.mrf.mxu0
          %v915 = vadd.f32 %v790, %v914
          %v916 = vpop.f32.mrf.mxu0
          %v917 = vadd.f32 %v790, %v916
          %918 = vmatmul.bf16.gmra.mxu0 %v613
          %v919 = vpop.f32.mrf.mxu0
          %v920 = vadd.f32 %v790, %v919
          %v921 = vpop.f32.mrf.mxu0
          %v922 = vadd.f32 %v790, %v921
          %923 = vmatmul.bf16.gmra.mxu0 %v614
          %v924 = vpop.f32.mrf.mxu0
          %v925 = vadd.f32 %v790, %v924
          %v926 = vpop.f32.mrf.mxu0
          %v927 = vadd.f32 %v790, %v926
          %928 = vdwg.mxu0
          %v929 = vpack.c.bf16 %v693, %v693
          %v930 = vpack.c.bf16 %v695, %v695
          %v931 = vpack.c.bf16 %v698, %v698
          %v932 = vpack.c.bf16 %v700, %v700
          %v933 = vpack.c.bf16 %v703, %v703
          %v934 = vpack.c.bf16 %v705, %v705
          %v935 = vpack.c.bf16 %v708, %v708
          %v936 = vpack.c.bf16 %v710, %v710
          %v937 = vpack.c.bf16 %v713, %v713
          %v938 = vpack.c.bf16 %v715, %v715
          %v939 = vpack.c.bf16 %v718, %v718
          %v940 = vpack.c.bf16 %v720, %v720
          %v941 = vpack.c.bf16 %v723, %v723
          %v942 = vpack.c.bf16 %v725, %v725
          %v943 = vpack.c.bf16 %v728, %v728
          %v944 = vpack.c.bf16 %v730, %v730
          %v945 = vpack.c.bf16 %v733, %v733
          %v946 = vpack.c.bf16 %v735, %v735
          %v947 = vpack.c.bf16 %v738, %v738
          %v948 = vpack.c.bf16 %v740, %v740
          %v949 = vpack.c.bf16 %v743, %v743
          %v950 = vpack.c.bf16 %v745, %v745
          %v951 = vpack.c.bf16 %v748, %v748
          %v952 = vpack.c.bf16 %v750, %v750
          %v953 = vpack.c.bf16 %v753, %v753
          %v954 = vpack.c.bf16 %v755, %v755
          %v955 = vpack.c.bf16 %v758, %v758
          %v956 = vpack.c.bf16 %v760, %v760
          %v957 = vpack.c.bf16 %v763, %v763
          %v958 = vpack.c.bf16 %v765, %v765
          %v959 = vpack.c.bf16 %v768, %v768
          %v960 = vpack.c.bf16 %v770, %v770
          %961 = vst [vmem:[#allocation2] sm:$0xf] %v929
          %962 = vst [vmem:[#allocation2 + $0x4] sm:$0xf] %v930
          %963 = vst [vmem:[#allocation2 + $0x8] sm:$0xf] %v931
          %964 = vst [vmem:[#allocation2 + $0xc] sm:$0xf] %v932
          %965 = vst [vmem:[#allocation2 + $0x10] sm:$0xf] %v933
          %966 = vst [vmem:[#allocation2 + $0x14] sm:$0xf] %v934
          %967 = vst [vmem:[#allocation2 + $0x18] sm:$0xf] %v935
          %968 = vst [vmem:[#allocation2 + $0x1c] sm:$0xf] %v936
          %969 = vst [vmem:[#allocation2 + $0x20] sm:$0xf] %v937
          %970 = vst [vmem:[#allocation2 + $0x24] sm:$0xf] %v938
          %971 = vst [vmem:[#allocation2 + $0x28] sm:$0xf] %v939
          %972 = vst [vmem:[#allocation2 + $0x2c] sm:$0xf] %v940
          %973 = vst [vmem:[#allocation2 + $0x30] sm:$0xf] %v941
          %974 = vst [vmem:[#allocation2 + $0x34] sm:$0xf] %v942
          %975 = vst [vmem:[#allocation2 + $0x38] sm:$0xf] %v943
          %976 = vst [vmem:[#allocation2 + $0x3c] sm:$0xf] %v944
          %977 = vst [vmem:[#allocation2 + $0x40] sm:$0xf] %v945
          %978 = vst [vmem:[#allocation2 + $0x44] sm:$0xf] %v946
          %979 = vst [vmem:[#allocation2 + $0x48] sm:$0xf] %v947
          %980 = vst [vmem:[#allocation2 + $0x4c] sm:$0xf] %v948
          %981 = vst [vmem:[#allocation2 + $0x50] sm:$0xf] %v949
          %982 = vst [vmem:[#allocation2 + $0x54] sm:$0xf] %v950
          %983 = vst [vmem:[#allocation2 + $0x58] sm:$0xf] %v951
          %984 = vst [vmem:[#allocation2 + $0x5c] sm:$0xf] %v952
          %985 = vst [vmem:[#allocation2 + $0x60] sm:$0xf] %v953
          %986 = vst [vmem:[#allocation2 + $0x64] sm:$0xf] %v954
          %987 = vst [vmem:[#allocation2 + $0x68] sm:$0xf] %v955
          %988 = vst [vmem:[#allocation2 + $0x6c] sm:$0xf] %v956
          %989 = vst [vmem:[#allocation2 + $0x70] sm:$0xf] %v957
          %990 = vst [vmem:[#allocation2 + $0x74] sm:$0xf] %v958
          %991 = vst [vmem:[#allocation2 + $0x78] sm:$0xf] %v959
          %992 = vst [vmem:[#allocation2 + $0x7c] sm:$0xf] %v960
          %v993 = vpack.c.bf16 %v850, %v850
          %v994 = vpack.c.bf16 %v852, %v852
          %v995 = vpack.c.bf16 %v855, %v855
          %v996 = vpack.c.bf16 %v857, %v857
          %v997 = vpack.c.bf16 %v860, %v860
          %v998 = vpack.c.bf16 %v862, %v862
          %v999 = vpack.c.bf16 %v865, %v865
          %v1000 = vpack.c.bf16 %v867, %v867
          %v1001 = vpack.c.bf16 %v870, %v870
          %v1002 = vpack.c.bf16 %v872, %v872
          %v1003 = vpack.c.bf16 %v875, %v875
          %v1004 = vpack.c.bf16 %v877, %v877
          %v1005 = vpack.c.bf16 %v880, %v880
          %v1006 = vpack.c.bf16 %v882, %v882
          %v1007 = vpack.c.bf16 %v885, %v885
          %v1008 = vpack.c.bf16 %v887, %v887
          %v1009 = vpack.c.bf16 %v890, %v890
          %v1010 = vpack.c.bf16 %v892, %v892
          %v1011 = vpack.c.bf16 %v895, %v895
          %v1012 = vpack.c.bf16 %v897, %v897
          %v1013 = vpack.c.bf16 %v900, %v900
          %v1014 = vpack.c.bf16 %v902, %v902
          %v1015 = vpack.c.bf16 %v905, %v905
          %v1016 = vpack.c.bf16 %v907, %v907
          %v1017 = vpack.c.bf16 %v910, %v910
          %v1018 = vpack.c.bf16 %v912, %v912
          %v1019 = vpack.c.bf16 %v915, %v915
          %v1020 = vpack.c.bf16 %v917, %v917
          %v1021 = vpack.c.bf16 %v920, %v920
          %v1022 = vpack.c.bf16 %v922, %v922
          %v1023 = vpack.c.bf16 %v925, %v925
          %v1024 = vpack.c.bf16 %v927, %v927
          %1025 = vst [vmem:[#allocation3] sm:$0xf] %v993
          %1026 = vst [vmem:[#allocation3 + $0x4] sm:$0xf] %v994
          %1027 = vst [vmem:[#allocation3 + $0x8] sm:$0xf] %v995
          %1028 = vst [vmem:[#allocation3 + $0xc] sm:$0xf] %v996
          %1029 = vst [vmem:[#allocation3 + $0x10] sm:$0xf] %v997
          %1030 = vst [vmem:[#allocation3 + $0x14] sm:$0xf] %v998
          %1031 = vst [vmem:[#allocation3 + $0x18] sm:$0xf] %v999
          %1032 = vst [vmem:[#allocation3 + $0x1c] sm:$0xf] %v1000
          %1033 = vst [vmem:[#allocation3 + $0x20] sm:$0xf] %v1001
          %1034 = vst [vmem:[#allocation3 + $0x24] sm:$0xf] %v1002
          %1035 = vst [vmem:[#allocation3 + $0x28] sm:$0xf] %v1003
          %1036 = vst [vmem:[#allocation3 + $0x2c] sm:$0xf] %v1004
          %1037 = vst [vmem:[#allocation3 + $0x30] sm:$0xf] %v1005
          %1038 = vst [vmem:[#allocation3 + $0x34] sm:$0xf] %v1006
          %1039 = vst [vmem:[#allocation3 + $0x38] sm:$0xf] %v1007
          %1040 = vst [vmem:[#allocation3 + $0x3c] sm:$0xf] %v1008
          %1041 = vst [vmem:[#allocation3 + $0x40] sm:$0xf] %v1009
          %1042 = vst [vmem:[#allocation3 + $0x44] sm:$0xf] %v1010
          %1043 = vst [vmem:[#allocation3 + $0x48] sm:$0xf] %v1011
          %1044 = vst [vmem:[#allocation3 + $0x4c] sm:$0xf] %v1012
          %1045 = vst [vmem:[#allocation3 + $0x50] sm:$0xf] %v1013
          %1046 = vst [vmem:[#allocation3 + $0x54] sm:$0xf] %v1014
          %1047 = vst [vmem:[#allocation3 + $0x58] sm:$0xf] %v1015
          %1048 = vst [vmem:[#allocation3 + $0x5c] sm:$0xf] %v1016
          %1049 = vst [vmem:[#allocation3 + $0x60] sm:$0xf] %v1017
          %1050 = vst [vmem:[#allocation3 + $0x64] sm:$0xf] %v1018
          %1051 = vst [vmem:[#allocation3 + $0x68] sm:$0xf] %v1019
          %1052 = vst [vmem:[#allocation3 + $0x6c] sm:$0xf] %v1020
          %1053 = vst [vmem:[#allocation3 + $0x70] sm:$0xf] %v1021
          %1054 = vst [vmem:[#allocation3 + $0x74] sm:$0xf] %v1022
          %1055 = vst [vmem:[#allocation3 + $0x78] sm:$0xf] %v1023
          %1056 = vst [vmem:[#allocation3 + $0x7c] sm:$0xf] %v1024
        $region72: #{attn_block_pallas.3} parent=67 // pred_fallthru
          _
        %v1057 = vld [vmem:[%s482] sm:$0xff]
        %v1058 = vld [vmem:[%s482 + $0x8] sm:$0xff]
        %v1059 = vld [vmem:[%s482 + $0x10] sm:$0xff]
        %v1060 = vld [vmem:[%s482 + $0x18] sm:$0xff]
        %v1061 = vld [vmem:[%s482 + $0x20] sm:$0xff]
        %v1062 = vld [vmem:[%s482 + $0x28] sm:$0xff]
        %v1063 = vld [vmem:[%s482 + $0x30] sm:$0xff]
        %v1064 = vld [vmem:[%s482 + $0x38] sm:$0xff]
        %v1065 = vld [vmem:[%s482 + $0x40] sm:$0xff]
        %v1066 = vld [vmem:[%s482 + $0x48] sm:$0xff]
        %v1067 = vld [vmem:[%s482 + $0x50] sm:$0xff]
        %v1068 = vld [vmem:[%s482 + $0x58] sm:$0xff]
        %v1069 = vld [vmem:[%s482 + $0x60] sm:$0xff]
        %v1070 = vld [vmem:[%s482 + $0x68] sm:$0xff]
        %v1071 = vld [vmem:[%s482 + $0x70] sm:$0xff]
        %v1072 = vld [vmem:[%s482 + $0x78] sm:$0xff]
        %v1074 = vperm.slane %v491, 0
        %v1076 = vmul.f32 %v1057, %v1074
        %v1077 = vmul.f32 %v1058, %v1074
        %v1078 = vmul.f32 %v1059, %v1074
        %v1079 = vmul.f32 %v1060, %v1074
        %v1080 = vmul.f32 %v1061, %v1074
        %v1081 = vmul.f32 %v1062, %v1074
        %v1082 = vmul.f32 %v1063, %v1074
        %v1083 = vmul.f32 %v1064, %v1074
        %v1084 = vmul.f32 %v1065, %v1074
        %v1085 = vmul.f32 %v1066, %v1074
        %v1086 = vmul.f32 %v1067, %v1074
        %v1087 = vmul.f32 %v1068, %v1074
        %v1088 = vmul.f32 %v1069, %v1074
        %v1089 = vmul.f32 %v1070, %v1074
        %v1090 = vmul.f32 %v1071, %v1074
        %v1091 = vmul.f32 %v1072, %v1074
        %v1093 = vperm.slane %v492, 0
        %v1095 = vadd.f32 %v1076, %v1093
        %v1096 = vadd.f32 %v1077, %v1093
        %v1097 = vadd.f32 %v1078, %v1093
        %v1098 = vadd.f32 %v1079, %v1093
        %v1099 = vadd.f32 %v1080, %v1093
        %v1100 = vadd.f32 %v1081, %v1093
        %v1101 = vadd.f32 %v1082, %v1093
        %v1102 = vadd.f32 %v1083, %v1093
        %v1103 = vadd.f32 %v1084, %v1093
        %v1104 = vadd.f32 %v1085, %v1093
        %v1105 = vadd.f32 %v1086, %v1093
        %v1106 = vadd.f32 %v1087, %v1093
        %v1107 = vadd.f32 %v1088, %v1093
        %v1108 = vadd.f32 %v1089, %v1093
        %v1109 = vadd.f32 %v1090, %v1093
        %v1110 = vadd.f32 %v1091, %v1093
        %v1111 = vpack.c.bf16 %v1096, %v1095
        %v1112 = vpack.c.bf16 %v1098, %v1097
        %v1113 = vpack.c.bf16 %v1100, %v1099
        %v1114 = vpack.c.bf16 %v1102, %v1101
        %v1115 = vpack.c.bf16 %v1104, %v1103
        %v1116 = vpack.c.bf16 %v1106, %v1105
        %v1117 = vpack.c.bf16 %v1108, %v1107
        %v1118 = vpack.c.bf16 %v1110, %v1109
        %v1119 = vld [vmem:[%s4] sm:$0xf]
        %v1120 = vld [vmem:[%s4 + $0x4] sm:$0xf]
        %v1121 = vld [vmem:[%s4 + $0x8] sm:$0xf]
        %v1122 = vld [vmem:[%s4 + $0xc] sm:$0xf]
        %v1123 = vld [vmem:[%s4 + $0x10] sm:$0xf]
        %v1124 = vld [vmem:[%s4 + $0x14] sm:$0xf]
        %v1125 = vld [vmem:[%s4 + $0x18] sm:$0xf]
        %v1126 = vld [vmem:[%s4 + $0x1c] sm:$0xf]
        %v1127 = vld [vmem:[%s4 + $0x20] sm:$0xf]
        %v1128 = vld [vmem:[%s4 + $0x24] sm:$0xf]
        %v1129 = vld [vmem:[%s4 + $0x28] sm:$0xf]
        %v1130 = vld [vmem:[%s4 + $0x2c] sm:$0xf]
        %v1131 = vld [vmem:[%s4 + $0x30] sm:$0xf]
        %v1132 = vld [vmem:[%s4 + $0x34] sm:$0xf]
        %v1133 = vld [vmem:[%s4 + $0x38] sm:$0xf]
        %v1134 = vld [vmem:[%s4 + $0x3c] sm:$0xf]
        %v1135 = vld [vmem:[%s5] sm:$0x1]
        %v1137 = vperm.slane %v1135, 0
        %v1155 = vunpack.c.l.b16 %v1119
        %v1156 = vunpack.c.l.b16 %v1120
        %v1157 = vunpack.c.l.b16 %v1121
        %v1158 = vunpack.c.l.b16 %v1122
        %v1159 = vunpack.c.l.b16 %v1123
        %v1160 = vunpack.c.l.b16 %v1124
        %v1161 = vunpack.c.l.b16 %v1125
        %v1162 = vunpack.c.l.b16 %v1126
        %v1163 = vunpack.c.l.b16 %v1127
        %v1164 = vunpack.c.l.b16 %v1128
        %v1165 = vunpack.c.l.b16 %v1129
        %v1166 = vunpack.c.l.b16 %v1130
        %v1167 = vunpack.c.l.b16 %v1131
        %v1168 = vunpack.c.l.b16 %v1132
        %v1169 = vunpack.c.l.b16 %v1133
        %v1170 = vunpack.c.l.b16 %v1134
        %v1171 = vpack.c.b16 %v1156, %v1155
        %v1172 = vpack.c.b16 %v1158, %v1157
        %v1173 = vpack.c.b16 %v1160, %v1159
        %v1174 = vpack.c.b16 %v1162, %v1161
        %v1175 = vpack.c.b16 %v1164, %v1163
        %v1176 = vpack.c.b16 %v1166, %v1165
        %v1177 = vpack.c.b16 %v1168, %v1167
        %v1178 = vpack.c.b16 %v1170, %v1169
        %1187 = vmatpush.bf16.msra.mxu0 %v1178
        %1188 = vmatpush.bf16.msra.mxu0 %v1177
        %1189 = vmatpush.bf16.msra.mxu0 %v1176
        %1190 = vmatpush.bf16.msra.mxu0 %v1175
        %1191 = vmatpush.bf16.msra.mxu0 %v1174
        %1192 = vmatpush.bf16.msra.mxu0 %v1173
        %1193 = vmatpush.bf16.msra.mxu0 %v1172
        %1194 = vmatpush.bf16.msra.mxu0 %v1171
        %1195 = vmatmul.bf16.gmra.mxu0 %v1111
        %v1196 = vpop.f32.mrf.mxu0
        %v1197 = vadd.f32 %v1137, %v1196
        %v1198 = vpop.f32.mrf.mxu0
        %v1199 = vadd.f32 %v1137, %v1198
        %1200 = vmatmul.bf16.gmra.mxu0 %v1112
        %v1201 = vpop.f32.mrf.mxu0
        %v1202 = vadd.f32 %v1137, %v1201
        %v1203 = vpop.f32.mrf.mxu0
        %v1204 = vadd.f32 %v1137, %v1203
        %1205 = vmatmul.bf16.gmra.mxu0 %v1113
        %v1206 = vpop.f32.mrf.mxu0
        %v1207 = vadd.f32 %v1137, %v1206
        %v1208 = vpop.f32.mrf.mxu0
        %v1209 = vadd.f32 %v1137, %v1208
        %1210 = vmatmul.bf16.gmra.mxu0 %v1114
        %v1211 = vpop.f32.mrf.mxu0
        %v1212 = vadd.f32 %v1137, %v1211
        %v1213 = vpop.f32.mrf.mxu0
        %v1214 = vadd.f32 %v1137, %v1213
        %1215 = vmatmul.bf16.gmra.mxu0 %v1115
        %v1216 = vpop.f32.mrf.mxu0
        %v1217 = vadd.f32 %v1137, %v1216
        %v1218 = vpop.f32.mrf.mxu0
        %v1219 = vadd.f32 %v1137, %v1218
        %1220 = vmatmul.bf16.gmra.mxu0 %v1116
        %v1221 = vpop.f32.mrf.mxu0
        %v1222 = vadd.f32 %v1137, %v1221
        %v1223 = vpop.f32.mrf.mxu0
        %v1224 = vadd.f32 %v1137, %v1223
        %1225 = vmatmul.bf16.gmra.mxu0 %v1117
        %v1226 = vpop.f32.mrf.mxu0
        %v1227 = vadd.f32 %v1137, %v1226
        %v1228 = vpop.f32.mrf.mxu0
        %v1229 = vadd.f32 %v1137, %v1228
        %1230 = vmatmul.bf16.gmra.mxu0 %v1118
        %v1231 = vpop.f32.mrf.mxu0
        %v1232 = vadd.f32 %v1137, %v1231
        %v1233 = vpop.f32.mrf.mxu0
        %v1234 = vadd.f32 %v1137, %v1233
        %1235 = vdwg.mxu0
        %v1236 = vpack.c.bf16 %v1199, %v1197
        %v1237 = vpack.c.bf16 %v1204, %v1202
        %v1238 = vpack.c.bf16 %v1209, %v1207
        %v1239 = vpack.c.bf16 %v1214, %v1212
        %v1240 = vpack.c.bf16 %v1219, %v1217
        %v1241 = vpack.c.bf16 %v1224, %v1222
        %v1242 = vpack.c.bf16 %v1229, %v1227
        %v1243 = vpack.c.bf16 %v1234, %v1232
        %v1244 = vld [vmem:[#allocation2] sm:$0xf]
        %v1245 = vld [vmem:[#allocation2 + $0x4] sm:$0xf]
        %v1246 = vld [vmem:[#allocation2 + $0x8] sm:$0xf]
        %v1247 = vld [vmem:[#allocation2 + $0xc] sm:$0xf]
        %v1248 = vld [vmem:[#allocation2 + $0x10] sm:$0xf]
        %v1249 = vld [vmem:[#allocation2 + $0x14] sm:$0xf]
        %v1250 = vld [vmem:[#allocation2 + $0x18] sm:$0xf]
        %v1251 = vld [vmem:[#allocation2 + $0x1c] sm:$0xf]
        %v1252 = vld [vmem:[#allocation2 + $0x20] sm:$0xf]
        %v1253 = vld [vmem:[#allocation2 + $0x24] sm:$0xf]
        %v1254 = vld [vmem:[#allocation2 + $0x28] sm:$0xf]
        %v1255 = vld [vmem:[#allocation2 + $0x2c] sm:$0xf]
        %v1256 = vld [vmem:[#allocation2 + $0x30] sm:$0xf]
        %v1257 = vld [vmem:[#allocation2 + $0x34] sm:$0xf]
        %v1258 = vld [vmem:[#allocation2 + $0x38] sm:$0xf]
        %v1259 = vld [vmem:[#allocation2 + $0x3c] sm:$0xf]
        %v1260 = vld [vmem:[#allocation2 + $0x40] sm:$0xf]
        %v1261 = vld [vmem:[#allocation2 + $0x44] sm:$0xf]
        %v1262 = vld [vmem:[#allocation2 + $0x48] sm:$0xf]
        %v1263 = vld [vmem:[#allocation2 + $0x4c] sm:$0xf]
        %v1264 = vld [vmem:[#allocation2 + $0x50] sm:$0xf]
        %v1265 = vld [vmem:[#allocation2 + $0x54] sm:$0xf]
        %v1266 = vld [vmem:[#allocation2 + $0x58] sm:$0xf]
        %v1267 = vld [vmem:[#allocation2 + $0x5c] sm:$0xf]
        %v1268 = vld [vmem:[#allocation2 + $0x60] sm:$0xf]
        %v1269 = vld [vmem:[#allocation2 + $0x64] sm:$0xf]
        %v1270 = vld [vmem:[#allocation2 + $0x68] sm:$0xf]
        %v1271 = vld [vmem:[#allocation2 + $0x6c] sm:$0xf]
        %v1272 = vld [vmem:[#allocation2 + $0x70] sm:$0xf]
        %v1273 = vld [vmem:[#allocation2 + $0x74] sm:$0xf]
        %v1274 = vld [vmem:[#allocation2 + $0x78] sm:$0xf]
        %v1275 = vld [vmem:[#allocation2 + $0x7c] sm:$0xf]
        %v1308 = vunpack.c.l.b16 %v1244
        %v1309 = vunpack.c.l.b16 %v1245
        %v1310 = vunpack.c.l.b16 %v1246
        %v1311 = vunpack.c.l.b16 %v1247
        %v1312 = vunpack.c.l.b16 %v1248
        %v1313 = vunpack.c.l.b16 %v1249
        %v1314 = vunpack.c.l.b16 %v1250
        %v1315 = vunpack.c.l.b16 %v1251
        %v1316 = vunpack.c.l.b16 %v1252
        %v1317 = vunpack.c.l.b16 %v1253
        %v1318 = vunpack.c.l.b16 %v1254
        %v1319 = vunpack.c.l.b16 %v1255
        %v1320 = vunpack.c.l.b16 %v1256
        %v1321 = vunpack.c.l.b16 %v1257
        %v1322 = vunpack.c.l.b16 %v1258
        %v1323 = vunpack.c.l.b16 %v1259
        %v1324 = vunpack.c.l.b16 %v1260
        %v1325 = vunpack.c.l.b16 %v1261
        %v1326 = vunpack.c.l.b16 %v1262
        %v1327 = vunpack.c.l.b16 %v1263
        %v1328 = vunpack.c.l.b16 %v1264
        %v1329 = vunpack.c.l.b16 %v1265
        %v1330 = vunpack.c.l.b16 %v1266
        %v1331 = vunpack.c.l.b16 %v1267
        %v1332 = vunpack.c.l.b16 %v1268
        %v1333 = vunpack.c.l.b16 %v1269
        %v1334 = vunpack.c.l.b16 %v1270
        %v1335 = vunpack.c.l.b16 %v1271
        %v1336 = vunpack.c.l.b16 %v1272
        %v1337 = vunpack.c.l.b16 %v1273
        %v1338 = vunpack.c.l.b16 %v1274
        %v1339 = vunpack.c.l.b16 %v1275
        %v1340 = vpack.c.b16 %v1309, %v1308
        %v1341 = vpack.c.b16 %v1311, %v1310
        %v1342 = vpack.c.b16 %v1313, %v1312
        %v1343 = vpack.c.b16 %v1315, %v1314
        %v1344 = vpack.c.b16 %v1317, %v1316
        %v1345 = vpack.c.b16 %v1319, %v1318
        %v1346 = vpack.c.b16 %v1321, %v1320
        %v1347 = vpack.c.b16 %v1323, %v1322
        %v1348 = vpack.c.b16 %v1325, %v1324
        %v1349 = vpack.c.b16 %v1327, %v1326
        %v1350 = vpack.c.b16 %v1329, %v1328
        %v1351 = vpack.c.b16 %v1331, %v1330
        %v1352 = vpack.c.b16 %v1333, %v1332
        %v1353 = vpack.c.b16 %v1335, %v1334
        %v1354 = vpack.c.b16 %v1337, %v1336
        %v1355 = vpack.c.b16 %v1339, %v1338
        %1372 = vmatpush.bf16.xpose.msra.mxu0 %v1347
        %1373 = vmatpush.bf16.xpose.msra.mxu0 %v1346
        %1374 = vmatpush.bf16.xpose.msra.mxu0 %v1345
        %1375 = vmatpush.bf16.xpose.msra.mxu0 %v1344
        %1376 = vmatpush.bf16.xpose.msra.mxu0 %v1343
        %1377 = vmatpush.bf16.xpose.msra.mxu0 %v1342
        %1378 = vmatpush.bf16.xpose.msra.mxu0 %v1341
        %1379 = vmatpush.bf16.xpose.msra.mxu0 %v1340
        %1380 = vmatmul.bf16.gmra.mxu0 %v1236
        %v1381 = vpop.f32.mrf.mxu0
        %v1382 = vadd.f32 0.0, %v1381
        %v1383 = vpop.f32.mrf.mxu0
        %v1384 = vadd.f32 0.0, %v1383
        %1385 = vmatmul.bf16.gmra.mxu0 %v1237
        %v1386 = vpop.f32.mrf.mxu0
        %v1387 = vadd.f32 0.0, %v1386
        %v1388 = vpop.f32.mrf.mxu0
        %v1389 = vadd.f32 0.0, %v1388
        %1390 = vmatmul.bf16.gmra.mxu0 %v1238
        %v1391 = vpop.f32.mrf.mxu0
        %v1392 = vadd.f32 0.0, %v1391
        %v1393 = vpop.f32.mrf.mxu0
        %v1394 = vadd.f32 0.0, %v1393
        %1395 = vmatmul.bf16.gmra.mxu0 %v1239
        %v1396 = vpop.f32.mrf.mxu0
        %v1397 = vadd.f32 0.0, %v1396
        %v1398 = vpop.f32.mrf.mxu0
        %v1399 = vadd.f32 0.0, %v1398
        %1400 = vmatmul.bf16.gmra.mxu0 %v1240
        %v1401 = vpop.f32.mrf.mxu0
        %v1402 = vadd.f32 0.0, %v1401
        %v1403 = vpop.f32.mrf.mxu0
        %v1404 = vadd.f32 0.0, %v1403
        %1405 = vmatmul.bf16.gmra.mxu0 %v1241
        %v1406 = vpop.f32.mrf.mxu0
        %v1407 = vadd.f32 0.0, %v1406
        %v1408 = vpop.f32.mrf.mxu0
        %v1409 = vadd.f32 0.0, %v1408
        %1410 = vmatmul.bf16.gmra.mxu0 %v1242
        %v1411 = vpop.f32.mrf.mxu0
        %v1412 = vadd.f32 0.0, %v1411
        %v1413 = vpop.f32.mrf.mxu0
        %v1414 = vadd.f32 0.0, %v1413
        %1415 = vmatmul.bf16.gmra.mxu0 %v1243
        %v1416 = vpop.f32.mrf.mxu0
        %v1417 = vadd.f32 0.0, %v1416
        %v1418 = vpop.f32.mrf.mxu0
        %v1419 = vadd.f32 0.0, %v1418
        %1420 = vdwg.mxu0
        %1421 = vmatpush.bf16.xpose.msra.mxu0 %v1355
        %1422 = vmatpush.bf16.xpose.msra.mxu0 %v1354
        %1423 = vmatpush.bf16.xpose.msra.mxu0 %v1353
        %1424 = vmatpush.bf16.xpose.msra.mxu0 %v1352
        %1425 = vmatpush.bf16.xpose.msra.mxu0 %v1351
        %1426 = vmatpush.bf16.xpose.msra.mxu0 %v1350
        %1427 = vmatpush.bf16.xpose.msra.mxu0 %v1349
        %1428 = vmatpush.bf16.xpose.msra.mxu0 %v1348
        %1429 = vmatmul.bf16.gmra.mxu0 %v1236
        %v1430 = vpop.f32.mrf.mxu0
        %v1431 = vadd.f32 0.0, %v1430
        %v1432 = vpop.f32.mrf.mxu0
        %v1433 = vadd.f32 0.0, %v1432
        %1434 = vmatmul.bf16.gmra.mxu0 %v1237
        %v1435 = vpop.f32.mrf.mxu0
        %v1436 = vadd.f32 0.0, %v1435
        %v1437 = vpop.f32.mrf.mxu0
        %v1438 = vadd.f32 0.0, %v1437
        %1439 = vmatmul.bf16.gmra.mxu0 %v1238
        %v1440 = vpop.f32.mrf.mxu0
        %v1441 = vadd.f32 0.0, %v1440
        %v1442 = vpop.f32.mrf.mxu0
        %v1443 = vadd.f32 0.0, %v1442
        %1444 = vmatmul.bf16.gmra.mxu0 %v1239
        %v1445 = vpop.f32.mrf.mxu0
        %v1446 = vadd.f32 0.0, %v1445
        %v1447 = vpop.f32.mrf.mxu0
        %v1448 = vadd.f32 0.0, %v1447
        %1449 = vmatmul.bf16.gmra.mxu0 %v1240
        %v1450 = vpop.f32.mrf.mxu0
        %v1451 = vadd.f32 0.0, %v1450
        %v1452 = vpop.f32.mrf.mxu0
        %v1453 = vadd.f32 0.0, %v1452
        %1454 = vmatmul.bf16.gmra.mxu0 %v1241
        %v1455 = vpop.f32.mrf.mxu0
        %v1456 = vadd.f32 0.0, %v1455
        %v1457 = vpop.f32.mrf.mxu0
        %v1458 = vadd.f32 0.0, %v1457
        %1459 = vmatmul.bf16.gmra.mxu0 %v1242
        %v1460 = vpop.f32.mrf.mxu0
        %v1461 = vadd.f32 0.0, %v1460
        %v1462 = vpop.f32.mrf.mxu0
        %v1463 = vadd.f32 0.0, %v1462
        %1464 = vmatmul.bf16.gmra.mxu0 %v1243
        %v1465 = vpop.f32.mrf.mxu0
        %v1466 = vadd.f32 0.0, %v1465
        %v1467 = vpop.f32.mrf.mxu0
        %v1468 = vadd.f32 0.0, %v1467
        %1469 = vdwg.mxu0
        %v1470 = vmax.f32 %v1382, %v1431
        %1471 = vmax.xlane.f32.xlu0 %v1470
        %v1472 = vpop.xlane.xlu0 %1471
        %v1473 = vmax.f32 %v1384, %v1433
        %1474 = vmax.xlane.f32.xlu0 %v1473
        %v1475 = vpop.xlane.xlu0 %1474
        %v1476 = vmax.f32 %v1387, %v1436
        %1477 = vmax.xlane.f32.xlu0 %v1476
        %v1478 = vpop.xlane.xlu0 %1477
        %v1479 = vmax.f32 %v1389, %v1438
        %1480 = vmax.xlane.f32.xlu0 %v1479
        %v1481 = vpop.xlane.xlu0 %1480
        %v1482 = vmax.f32 %v1392, %v1441
        %1483 = vmax.xlane.f32.xlu0 %v1482
        %v1484 = vpop.xlane.xlu0 %1483
        %v1485 = vmax.f32 %v1394, %v1443
        %1486 = vmax.xlane.f32.xlu0 %v1485
        %v1487 = vpop.xlane.xlu0 %1486
        %v1488 = vmax.f32 %v1397, %v1446
        %1489 = vmax.xlane.f32.xlu0 %v1488
        %v1490 = vpop.xlane.xlu0 %1489
        %v1491 = vmax.f32 %v1399, %v1448
        %1492 = vmax.xlane.f32.xlu0 %v1491
        %v1493 = vpop.xlane.xlu0 %1492
        %v1494 = vmax.f32 %v1402, %v1451
        %1495 = vmax.xlane.f32.xlu0 %v1494
        %v1496 = vpop.xlane.xlu0 %1495
        %v1497 = vmax.f32 %v1404, %v1453
        %1498 = vmax.xlane.f32.xlu0 %v1497
        %v1499 = vpop.xlane.xlu0 %1498
        %v1500 = vmax.f32 %v1407, %v1456
        %1501 = vmax.xlane.f32.xlu0 %v1500
        %v1502 = vpop.xlane.xlu0 %1501
        %v1503 = vmax.f32 %v1409, %v1458
        %1504 = vmax.xlane.f32.xlu0 %v1503
        %v1505 = vpop.xlane.xlu0 %1504
        %v1506 = vmax.f32 %v1412, %v1461
        %1507 = vmax.xlane.f32.xlu0 %v1506
        %v1508 = vpop.xlane.xlu0 %1507
        %v1509 = vmax.f32 %v1414, %v1463
        %1510 = vmax.xlane.f32.xlu0 %v1509
        %v1511 = vpop.xlane.xlu0 %1510
        %v1512 = vmax.f32 %v1417, %v1466
        %1513 = vmax.xlane.f32.xlu0 %v1512
        %v1514 = vpop.xlane.xlu0 %1513
        %v1515 = vmax.f32 %v1419, %v1468
        %1516 = vmax.xlane.f32.xlu0 %v1515
        %v1517 = vpop.xlane.xlu0 %1516
        %v1518 = vsub.f32 %v1382, %v1472
        %v1519 = vsub.f32 %v1431, %v1472
        %v1520 = vsub.f32 %v1384, %v1475
        %v1521 = vsub.f32 %v1433, %v1475
        %v1522 = vsub.f32 %v1387, %v1478
        %v1523 = vsub.f32 %v1436, %v1478
        %v1524 = vsub.f32 %v1389, %v1481
        %v1525 = vsub.f32 %v1438, %v1481
        %v1526 = vsub.f32 %v1392, %v1484
        %v1527 = vsub.f32 %v1441, %v1484
        %v1528 = vsub.f32 %v1394, %v1487
        %v1529 = vsub.f32 %v1443, %v1487
        %v1530 = vsub.f32 %v1397, %v1490
        %v1531 = vsub.f32 %v1446, %v1490
        %v1532 = vsub.f32 %v1399, %v1493
        %v1533 = vsub.f32 %v1448, %v1493
        %v1534 = vsub.f32 %v1402, %v1496
        %v1535 = vsub.f32 %v1451, %v1496
        %v1536 = vsub.f32 %v1404, %v1499
        %v1537 = vsub.f32 %v1453, %v1499
        %v1538 = vsub.f32 %v1407, %v1502
        %v1539 = vsub.f32 %v1456, %v1502
        %v1540 = vsub.f32 %v1409, %v1505
        %v1541 = vsub.f32 %v1458, %v1505
        %v1542 = vsub.f32 %v1412, %v1508
        %v1543 = vsub.f32 %v1461, %v1508
        %v1544 = vsub.f32 %v1414, %v1511
        %v1545 = vsub.f32 %v1463, %v1511
        %v1546 = vsub.f32 %v1417, %v1514
        %v1547 = vsub.f32 %v1466, %v1514
        %v1548 = vsub.f32 %v1419, %v1517
        %v1549 = vsub.f32 %v1468, %v1517
        %v1550 = vmul.f32 %v1518, 1.442695
        %v1551 = vpow.pop %v1550
        %v1552 = vmul.f32 %v1519, 1.442695
        %v1553 = vpow.pop %v1552
        %v1554 = vmul.f32 %v1520, 1.442695
        %v1555 = vpow.pop %v1554
        %v1556 = vmul.f32 %v1521, 1.442695
        %v1557 = vpow.pop %v1556
        %v1558 = vmul.f32 %v1522, 1.442695
        %v1559 = vpow.pop %v1558
        %v1560 = vmul.f32 %v1523, 1.442695
        %v1561 = vpow.pop %v1560
        %v1562 = vmul.f32 %v1524, 1.442695
        %v1563 = vpow.pop %v1562
        %v1564 = vmul.f32 %v1525, 1.442695
        %v1565 = vpow.pop %v1564
        %v1566 = vmul.f32 %v1526, 1.442695
        %v1567 = vpow.pop %v1566
        %v1568 = vmul.f32 %v1527, 1.442695
        %v1569 = vpow.pop %v1568
        %v1570 = vmul.f32 %v1528, 1.442695
        %v1571 = vpow.pop %v1570
        %v1572 = vmul.f32 %v1529, 1.442695
        %v1573 = vpow.pop %v1572
        %v1574 = vmul.f32 %v1530, 1.442695
        %v1575 = vpow.pop %v1574
        %v1576 = vmul.f32 %v1531, 1.442695
        %v1577 = vpow.pop %v1576
        %v1578 = vmul.f32 %v1532, 1.442695
        %v1579 = vpow.pop %v1578
        %v1580 = vmul.f32 %v1533, 1.442695
        %v1581 = vpow.pop %v1580
        %v1582 = vmul.f32 %v1534, 1.442695
        %v1583 = vpow.pop %v1582
        %v1584 = vmul.f32 %v1535, 1.442695
        %v1585 = vpow.pop %v1584
        %v1586 = vmul.f32 %v1536, 1.442695
        %v1587 = vpow.pop %v1586
        %v1588 = vmul.f32 %v1537, 1.442695
        %v1589 = vpow.pop %v1588
        %v1590 = vmul.f32 %v1538, 1.442695
        %v1591 = vpow.pop %v1590
        %v1592 = vmul.f32 %v1539, 1.442695
        %v1593 = vpow.pop %v1592
        %v1594 = vmul.f32 %v1540, 1.442695
        %v1595 = vpow.pop %v1594
        %v1596 = vmul.f32 %v1541, 1.442695
        %v1597 = vpow.pop %v1596
        %v1598 = vmul.f32 %v1542, 1.442695
        %v1599 = vpow.pop %v1598
        %v1600 = vmul.f32 %v1543, 1.442695
        %v1601 = vpow.pop %v1600
        %v1602 = vmul.f32 %v1544, 1.442695
        %v1603 = vpow.pop %v1602
        %v1604 = vmul.f32 %v1545, 1.442695
        %v1605 = vpow.pop %v1604
        %v1606 = vmul.f32 %v1546, 1.442695
        %v1607 = vpow.pop %v1606
        %v1608 = vmul.f32 %v1547, 1.442695
        %v1609 = vpow.pop %v1608
        %v1610 = vmul.f32 %v1548, 1.442695
        %v1611 = vpow.pop %v1610
        %v1612 = vmul.f32 %v1549, 1.442695
        %v1613 = vpow.pop %v1612
        %v1614 = vadd.f32 %v1551, %v1553
        %1615 = vadd.xlane.f32.xlu0 %v1614
        %v1616 = vpop.xlane.xlu0 %1615
        %v1617 = vadd.f32 %v1555, %v1557
        %1618 = vadd.xlane.f32.xlu0 %v1617
        %v1619 = vpop.xlane.xlu0 %1618
        %v1620 = vadd.f32 %v1559, %v1561
        %1621 = vadd.xlane.f32.xlu0 %v1620
        %v1622 = vpop.xlane.xlu0 %1621
        %v1623 = vadd.f32 %v1563, %v1565
        %1624 = vadd.xlane.f32.xlu0 %v1623
        %v1625 = vpop.xlane.xlu0 %1624
        %v1626 = vadd.f32 %v1567, %v1569
        %1627 = vadd.xlane.f32.xlu0 %v1626
        %v1628 = vpop.xlane.xlu0 %1627
        %v1629 = vadd.f32 %v1571, %v1573
        %1630 = vadd.xlane.f32.xlu0 %v1629
        %v1631 = vpop.xlane.xlu0 %1630
        %v1632 = vadd.f32 %v1575, %v1577
        %1633 = vadd.xlane.f32.xlu0 %v1632
        %v1634 = vpop.xlane.xlu0 %1633
        %v1635 = vadd.f32 %v1579, %v1581
        %1636 = vadd.xlane.f32.xlu0 %v1635
        %v1637 = vpop.xlane.xlu0 %1636
        %v1638 = vadd.f32 %v1583, %v1585
        %1639 = vadd.xlane.f32.xlu0 %v1638
        %v1640 = vpop.xlane.xlu0 %1639
        %v1641 = vadd.f32 %v1587, %v1589
        %1642 = vadd.xlane.f32.xlu0 %v1641
        %v1643 = vpop.xlane.xlu0 %1642
        %v1644 = vadd.f32 %v1591, %v1593
        %1645 = vadd.xlane.f32.xlu0 %v1644
        %v1646 = vpop.xlane.xlu0 %1645
        %v1647 = vadd.f32 %v1595, %v1597
        %1648 = vadd.xlane.f32.xlu0 %v1647
        %v1649 = vpop.xlane.xlu0 %1648
        %v1650 = vadd.f32 %v1599, %v1601
        %1651 = vadd.xlane.f32.xlu0 %v1650
        %v1652 = vpop.xlane.xlu0 %1651
        %v1653 = vadd.f32 %v1603, %v1605
        %1654 = vadd.xlane.f32.xlu0 %v1653
        %v1655 = vpop.xlane.xlu0 %1654
        %v1656 = vadd.f32 %v1607, %v1609
        %1657 = vadd.xlane.f32.xlu0 %v1656
        %v1658 = vpop.xlane.xlu0 %1657
        %v1659 = vadd.f32 %v1611, %v1613
        %1660 = vadd.xlane.f32.xlu0 %v1659
        %v1661 = vpop.xlane.xlu0 %1660
        %v1662 = vrcp.pop %v1616
        %v1663 = vrcp.pop %v1619
        %v1664 = vrcp.pop %v1622
        %v1665 = vrcp.pop %v1625
        %v1666 = vrcp.pop %v1628
        %v1667 = vrcp.pop %v1631
        %v1668 = vrcp.pop %v1634
        %v1669 = vrcp.pop %v1637
        %v1670 = vrcp.pop %v1640
        %v1671 = vrcp.pop %v1643
        %v1672 = vrcp.pop %v1646
        %v1673 = vrcp.pop %v1649
        %v1674 = vrcp.pop %v1652
        %v1675 = vrcp.pop %v1655
        %v1676 = vrcp.pop %v1658
        %v1677 = vrcp.pop %v1661
        %v1678 = vmul.f32 %v1551, %v1662
        %v1679 = vmul.f32 %v1553, %v1662
        %v1680 = vmul.f32 %v1555, %v1663
        %v1681 = vmul.f32 %v1557, %v1663
        %v1682 = vmul.f32 %v1559, %v1664
        %v1683 = vmul.f32 %v1561, %v1664
        %v1684 = vmul.f32 %v1563, %v1665
        %v1685 = vmul.f32 %v1565, %v1665
        %v1686 = vmul.f32 %v1567, %v1666
        %v1687 = vmul.f32 %v1569, %v1666
        %v1688 = vmul.f32 %v1571, %v1667
        %v1689 = vmul.f32 %v1573, %v1667
        %v1690 = vmul.f32 %v1575, %v1668
        %v1691 = vmul.f32 %v1577, %v1668
        %v1692 = vmul.f32 %v1579, %v1669
        %v1693 = vmul.f32 %v1581, %v1669
        %v1694 = vmul.f32 %v1583, %v1670
        %v1695 = vmul.f32 %v1585, %v1670
        %v1696 = vmul.f32 %v1587, %v1671
        %v1697 = vmul.f32 %v1589, %v1671
        %v1698 = vmul.f32 %v1591, %v1672
        %v1699 = vmul.f32 %v1593, %v1672
        %v1700 = vmul.f32 %v1595, %v1673
        %v1701 = vmul.f32 %v1597, %v1673
        %v1702 = vmul.f32 %v1599, %v1674
        %v1703 = vmul.f32 %v1601, %v1674
        %v1704 = vmul.f32 %v1603, %v1675
        %v1705 = vmul.f32 %v1605, %v1675
        %v1706 = vmul.f32 %v1607, %v1676
        %v1707 = vmul.f32 %v1609, %v1676
        %v1708 = vmul.f32 %v1611, %v1677
        %v1709 = vmul.f32 %v1613, %v1677
        %v1710 = vpack.c.bf16 %v1680, %v1678
        %v1711 = vpack.c.bf16 %v1681, %v1679
        %v1712 = vpack.c.bf16 %v1684, %v1682
        %v1713 = vpack.c.bf16 %v1685, %v1683
        %v1714 = vpack.c.bf16 %v1688, %v1686
        %v1715 = vpack.c.bf16 %v1689, %v1687
        %v1716 = vpack.c.bf16 %v1692, %v1690
        %v1717 = vpack.c.bf16 %v1693, %v1691
        %v1718 = vpack.c.bf16 %v1696, %v1694
        %v1719 = vpack.c.bf16 %v1697, %v1695
        %v1720 = vpack.c.bf16 %v1700, %v1698
        %v1721 = vpack.c.bf16 %v1701, %v1699
        %v1722 = vpack.c.bf16 %v1704, %v1702
        %v1723 = vpack.c.bf16 %v1705, %v1703
        %v1724 = vpack.c.bf16 %v1708, %v1706
        %v1725 = vpack.c.bf16 %v1709, %v1707
        %v1726 = vld [vmem:[#allocation3] sm:$0xf]
        %v1727 = vld [vmem:[#allocation3 + $0x4] sm:$0xf]
        %v1728 = vld [vmem:[#allocation3 + $0x8] sm:$0xf]
        %v1729 = vld [vmem:[#allocation3 + $0xc] sm:$0xf]
        %v1730 = vld [vmem:[#allocation3 + $0x10] sm:$0xf]
        %v1731 = vld [vmem:[#allocation3 + $0x14] sm:$0xf]
        %v1732 = vld [vmem:[#allocation3 + $0x18] sm:$0xf]
        %v1733 = vld [vmem:[#allocation3 + $0x1c] sm:$0xf]
        %v1734 = vld [vmem:[#allocation3 + $0x20] sm:$0xf]
        %v1735 = vld [vmem:[#allocation3 + $0x24] sm:$0xf]
        %v1736 = vld [vmem:[#allocation3 + $0x28] sm:$0xf]
        %v1737 = vld [vmem:[#allocation3 + $0x2c] sm:$0xf]
        %v1738 = vld [vmem:[#allocation3 + $0x30] sm:$0xf]
        %v1739 = vld [vmem:[#allocation3 + $0x34] sm:$0xf]
        %v1740 = vld [vmem:[#allocation3 + $0x38] sm:$0xf]
        %v1741 = vld [vmem:[#allocation3 + $0x3c] sm:$0xf]
        %v1742 = vld [vmem:[#allocation3 + $0x40] sm:$0xf]
        %v1743 = vld [vmem:[#allocation3 + $0x44] sm:$0xf]
        %v1744 = vld [vmem:[#allocation3 + $0x48] sm:$0xf]
        %v1745 = vld [vmem:[#allocation3 + $0x4c] sm:$0xf]
        %v1746 = vld [vmem:[#allocation3 + $0x50] sm:$0xf]
        %v1747 = vld [vmem:[#allocation3 + $0x54] sm:$0xf]
        %v1748 = vld [vmem:[#allocation3 + $0x58] sm:$0xf]
        %v1749 = vld [vmem:[#allocation3 + $0x5c] sm:$0xf]
        %v1750 = vld [vmem:[#allocation3 + $0x60] sm:$0xf]
        %v1751 = vld [vmem:[#allocation3 + $0x64] sm:$0xf]
        %v1752 = vld [vmem:[#allocation3 + $0x68] sm:$0xf]
        %v1753 = vld [vmem:[#allocation3 + $0x6c] sm:$0xf]
        %v1754 = vld [vmem:[#allocation3 + $0x70] sm:$0xf]
        %v1755 = vld [vmem:[#allocation3 + $0x74] sm:$0xf]
        %v1756 = vld [vmem:[#allocation3 + $0x78] sm:$0xf]
        %v1757 = vld [vmem:[#allocation3 + $0x7c] sm:$0xf]
        %v1790 = vunpack.c.l.b16 %v1726
        %v1791 = vunpack.c.l.b16 %v1727
        %v1792 = vunpack.c.l.b16 %v1728
        %v1793 = vunpack.c.l.b16 %v1729
        %v1794 = vunpack.c.l.b16 %v1730
        %v1795 = vunpack.c.l.b16 %v1731
        %v1796 = vunpack.c.l.b16 %v1732
        %v1797 = vunpack.c.l.b16 %v1733
        %v1798 = vunpack.c.l.b16 %v1734
        %v1799 = vunpack.c.l.b16 %v1735
        %v1800 = vunpack.c.l.b16 %v1736
        %v1801 = vunpack.c.l.b16 %v1737
        %v1802 = vunpack.c.l.b16 %v1738
        %v1803 = vunpack.c.l.b16 %v1739
        %v1804 = vunpack.c.l.b16 %v1740
        %v1805 = vunpack.c.l.b16 %v1741
        %v1806 = vunpack.c.l.b16 %v1742
        %v1807 = vunpack.c.l.b16 %v1743
        %v1808 = vunpack.c.l.b16 %v1744
        %v1809 = vunpack.c.l.b16 %v1745
        %v1810 = vunpack.c.l.b16 %v1746
        %v1811 = vunpack.c.l.b16 %v1747
        %v1812 = vunpack.c.l.b16 %v1748
        %v1813 = vunpack.c.l.b16 %v1749
        %v1814 = vunpack.c.l.b16 %v1750
        %v1815 = vunpack.c.l.b16 %v1751
        %v1816 = vunpack.c.l.b16 %v1752
        %v1817 = vunpack.c.l.b16 %v1753
        %v1818 = vunpack.c.l.b16 %v1754
        %v1819 = vunpack.c.l.b16 %v1755
        %v1820 = vunpack.c.l.b16 %v1756
        %v1821 = vunpack.c.l.b16 %v1757
        %v1822 = vpack.c.b16 %v1791, %v1790
        %v1823 = vpack.c.b16 %v1793, %v1792
        %v1824 = vpack.c.b16 %v1795, %v1794
        %v1825 = vpack.c.b16 %v1797, %v1796
        %v1826 = vpack.c.b16 %v1799, %v1798
        %v1827 = vpack.c.b16 %v1801, %v1800
        %v1828 = vpack.c.b16 %v1803, %v1802
        %v1829 = vpack.c.b16 %v1805, %v1804
        %v1830 = vpack.c.b16 %v1807, %v1806
        %v1831 = vpack.c.b16 %v1809, %v1808
        %v1832 = vpack.c.b16 %v1811, %v1810
        %v1833 = vpack.c.b16 %v1813, %v1812
        %v1834 = vpack.c.b16 %v1815, %v1814
        %v1835 = vpack.c.b16 %v1817, %v1816
        %v1836 = vpack.c.b16 %v1819, %v1818
        %v1837 = vpack.c.b16 %v1821, %v1820
        %1854 = vmatpush.bf16.msra.mxu0 %v1829
        %1855 = vmatpush.bf16.msra.mxu0 %v1828
        %1856 = vmatpush.bf16.msra.mxu0 %v1827
        %1857 = vmatpush.bf16.msra.mxu0 %v1826
        %1858 = vmatpush.bf16.msra.mxu0 %v1825
        %1859 = vmatpush.bf16.msra.mxu0 %v1824
        %1860 = vmatpush.bf16.msra.mxu0 %v1823
        %1861 = vmatpush.bf16.msra.mxu0 %v1822
        %1862 = vmatmul.bf16.gmra.mxu0 %v1710
        %v1863 = vpop.f32.mrf.mxu0
        %v1864 = vadd.f32 0.0, %v1863
        %v1865 = vpop.f32.mrf.mxu0
        %v1866 = vadd.f32 0.0, %v1865
        %1867 = vmatmul.bf16.gmra.mxu0 %v1712
        %v1868 = vpop.f32.mrf.mxu0
        %v1869 = vadd.f32 0.0, %v1868
        %v1870 = vpop.f32.mrf.mxu0
        %v1871 = vadd.f32 0.0, %v1870
        %1872 = vmatmul.bf16.gmra.mxu0 %v1714
        %v1873 = vpop.f32.mrf.mxu0
        %v1874 = vadd.f32 0.0, %v1873
        %v1875 = vpop.f32.mrf.mxu0
        %v1876 = vadd.f32 0.0, %v1875
        %1877 = vmatmul.bf16.gmra.mxu0 %v1716
        %v1878 = vpop.f32.mrf.mxu0
        %v1879 = vadd.f32 0.0, %v1878
        %v1880 = vpop.f32.mrf.mxu0
        %v1881 = vadd.f32 0.0, %v1880
        %1882 = vmatmul.bf16.gmra.mxu0 %v1718
        %v1883 = vpop.f32.mrf.mxu0
        %v1884 = vadd.f32 0.0, %v1883
        %v1885 = vpop.f32.mrf.mxu0
        %v1886 = vadd.f32 0.0, %v1885
        %1887 = vmatmul.bf16.gmra.mxu0 %v1720
        %v1888 = vpop.f32.mrf.mxu0
        %v1889 = vadd.f32 0.0, %v1888
        %v1890 = vpop.f32.mrf.mxu0
        %v1891 = vadd.f32 0.0, %v1890
        %1892 = vmatmul.bf16.gmra.mxu0 %v1722
        %v1893 = vpop.f32.mrf.mxu0
        %v1894 = vadd.f32 0.0, %v1893
        %v1895 = vpop.f32.mrf.mxu0
        %v1896 = vadd.f32 0.0, %v1895
        %1897 = vmatmul.bf16.gmra.mxu0 %v1724
        %v1898 = vpop.f32.mrf.mxu0
        %v1899 = vadd.f32 0.0, %v1898
        %v1900 = vpop.f32.mrf.mxu0
        %v1901 = vadd.f32 0.0, %v1900
        %1902 = vdwg.mxu0
        %1903 = vmatpush.bf16.msra.mxu0 %v1837
        %1904 = vmatpush.bf16.msra.mxu0 %v1836
        %1905 = vmatpush.bf16.msra.mxu0 %v1835
        %1906 = vmatpush.bf16.msra.mxu0 %v1834
        %1907 = vmatpush.bf16.msra.mxu0 %v1833
        %1908 = vmatpush.bf16.msra.mxu0 %v1832
        %1909 = vmatpush.bf16.msra.mxu0 %v1831
        %1910 = vmatpush.bf16.msra.mxu0 %v1830
        %1911 = vmatmul.bf16.gmra.mxu0 %v1711
        %v1912 = vpop.f32.mrf.mxu0
        %v1913 = vadd.f32 %v1864, %v1912
        %v1914 = vpop.f32.mrf.mxu0
        %v1915 = vadd.f32 %v1866, %v1914
        %1916 = vmatmul.bf16.gmra.mxu0 %v1713
        %v1917 = vpop.f32.mrf.mxu0
        %v1918 = vadd.f32 %v1869, %v1917
        %v1919 = vpop.f32.mrf.mxu0
        %v1920 = vadd.f32 %v1871, %v1919
        %1921 = vmatmul.bf16.gmra.mxu0 %v1715
        %v1922 = vpop.f32.mrf.mxu0
        %v1923 = vadd.f32 %v1874, %v1922
        %v1924 = vpop.f32.mrf.mxu0
        %v1925 = vadd.f32 %v1876, %v1924
        %1926 = vmatmul.bf16.gmra.mxu0 %v1717
        %v1927 = vpop.f32.mrf.mxu0
        %v1928 = vadd.f32 %v1879, %v1927
        %v1929 = vpop.f32.mrf.mxu0
        %v1930 = vadd.f32 %v1881, %v1929
        %1931 = vmatmul.bf16.gmra.mxu0 %v1719
        %v1932 = vpop.f32.mrf.mxu0
        %v1933 = vadd.f32 %v1884, %v1932
        %v1934 = vpop.f32.mrf.mxu0
        %v1935 = vadd.f32 %v1886, %v1934
        %1936 = vmatmul.bf16.gmra.mxu0 %v1721
        %v1937 = vpop.f32.mrf.mxu0
        %v1938 = vadd.f32 %v1889, %v1937
        %v1939 = vpop.f32.mrf.mxu0
        %v1940 = vadd.f32 %v1891, %v1939
        %1941 = vmatmul.bf16.gmra.mxu0 %v1723
        %v1942 = vpop.f32.mrf.mxu0
        %v1943 = vadd.f32 %v1894, %v1942
        %v1944 = vpop.f32.mrf.mxu0
        %v1945 = vadd.f32 %v1896, %v1944
        %1946 = vmatmul.bf16.gmra.mxu0 %v1725
        %v1947 = vpop.f32.mrf.mxu0
        %v1948 = vadd.f32 %v1899, %v1947
        %v1949 = vpop.f32.mrf.mxu0
        %v1950 = vadd.f32 %v1901, %v1949
        %1951 = vdwg.mxu0
        %v1952 = vpack.c.bf16 %v1915, %v1913
        %v1953 = vpack.c.bf16 %v1920, %v1918
        %v1954 = vpack.c.bf16 %v1925, %v1923
        %v1955 = vpack.c.bf16 %v1930, %v1928
        %v1956 = vpack.c.bf16 %v1935, %v1933
        %v1957 = vpack.c.bf16 %v1940, %v1938
        %v1958 = vpack.c.bf16 %v1945, %v1943
        %v1959 = vpack.c.bf16 %v1950, %v1948
        %v1960 = vld [vmem:[%s10] sm:$0xf]
        %v1961 = vld [vmem:[%s10 + $0x4] sm:$0xf]
        %v1962 = vld [vmem:[%s10 + $0x8] sm:$0xf]
        %v1963 = vld [vmem:[%s10 + $0xc] sm:$0xf]
        %v1964 = vld [vmem:[%s10 + $0x10] sm:$0xf]
        %v1965 = vld [vmem:[%s10 + $0x14] sm:$0xf]
        %v1966 = vld [vmem:[%s10 + $0x18] sm:$0xf]
        %v1967 = vld [vmem:[%s10 + $0x1c] sm:$0xf]
        %v1968 = vld [vmem:[%s10 + $0x20] sm:$0xf]
        %v1969 = vld [vmem:[%s10 + $0x24] sm:$0xf]
        %v1970 = vld [vmem:[%s10 + $0x28] sm:$0xf]
        %v1971 = vld [vmem:[%s10 + $0x2c] sm:$0xf]
        %v1972 = vld [vmem:[%s10 + $0x30] sm:$0xf]
        %v1973 = vld [vmem:[%s10 + $0x34] sm:$0xf]
        %v1974 = vld [vmem:[%s10 + $0x38] sm:$0xf]
        %v1975 = vld [vmem:[%s10 + $0x3c] sm:$0xf]
        %v1976 = vld [vmem:[%s11] sm:$0x1]
        %v1978 = vperm.slane %v1976, 0
        %v1996 = vunpack.c.l.b16 %v1960
        %v1997 = vunpack.c.l.b16 %v1961
        %v1998 = vunpack.c.l.b16 %v1962
        %v1999 = vunpack.c.l.b16 %v1963
        %v2000 = vunpack.c.l.b16 %v1964
        %v2001 = vunpack.c.l.b16 %v1965
        %v2002 = vunpack.c.l.b16 %v1966
        %v2003 = vunpack.c.l.b16 %v1967
        %v2004 = vunpack.c.l.b16 %v1968
        %v2005 = vunpack.c.l.b16 %v1969
        %v2006 = vunpack.c.l.b16 %v1970
        %v2007 = vunpack.c.l.b16 %v1971
        %v2008 = vunpack.c.l.b16 %v1972
        %v2009 = vunpack.c.l.b16 %v1973
        %v2010 = vunpack.c.l.b16 %v1974
        %v2011 = vunpack.c.l.b16 %v1975
        %v2012 = vpack.c.b16 %v1997, %v1996
        %v2013 = vpack.c.b16 %v1999, %v1998
        %v2014 = vpack.c.b16 %v2001, %v2000
        %v2015 = vpack.c.b16 %v2003, %v2002
        %v2016 = vpack.c.b16 %v2005, %v2004
        %v2017 = vpack.c.b16 %v2007, %v2006
        %v2018 = vpack.c.b16 %v2009, %v2008
        %v2019 = vpack.c.b16 %v2011, %v2010
        %2028 = vmatpush.bf16.msra.mxu0 %v2019
        %2029 = vmatpush.bf16.msra.mxu0 %v2018
        %2030 = vmatpush.bf16.msra.mxu0 %v2017
        %2031 = vmatpush.bf16.msra.mxu0 %v2016
        %2032 = vmatpush.bf16.msra.mxu0 %v2015
        %2033 = vmatpush.bf16.msra.mxu0 %v2014
        %2034 = vmatpush.bf16.msra.mxu0 %v2013
        %2035 = vmatpush.bf16.msra.mxu0 %v2012
        %2036 = vmatmul.bf16.gmra.mxu0 %v1952
        %v2037 = vpop.f32.mrf.mxu0
        %v2038 = vadd.f32 %v1978, %v2037
        %v2039 = vpop.f32.mrf.mxu0
        %v2040 = vadd.f32 %v1978, %v2039
        %2041 = vmatmul.bf16.gmra.mxu0 %v1953
        %v2042 = vpop.f32.mrf.mxu0
        %v2043 = vadd.f32 %v1978, %v2042
        %v2044 = vpop.f32.mrf.mxu0
        %v2045 = vadd.f32 %v1978, %v2044
        %2046 = vmatmul.bf16.gmra.mxu0 %v1954
        %v2047 = vpop.f32.mrf.mxu0
        %v2048 = vadd.f32 %v1978, %v2047
        %v2049 = vpop.f32.mrf.mxu0
        %v2050 = vadd.f32 %v1978, %v2049
        %2051 = vmatmul.bf16.gmra.mxu0 %v1955
        %v2052 = vpop.f32.mrf.mxu0
        %v2053 = vadd.f32 %v1978, %v2052
        %v2054 = vpop.f32.mrf.mxu0
        %v2055 = vadd.f32 %v1978, %v2054
        %2056 = vmatmul.bf16.gmra.mxu0 %v1956
        %v2057 = vpop.f32.mrf.mxu0
        %v2058 = vadd.f32 %v1978, %v2057
        %v2059 = vpop.f32.mrf.mxu0
        %v2060 = vadd.f32 %v1978, %v2059
        %2061 = vmatmul.bf16.gmra.mxu0 %v1957
        %v2062 = vpop.f32.mrf.mxu0
        %v2063 = vadd.f32 %v1978, %v2062
        %v2064 = vpop.f32.mrf.mxu0
        %v2065 = vadd.f32 %v1978, %v2064
        %2066 = vmatmul.bf16.gmra.mxu0 %v1958
        %v2067 = vpop.f32.mrf.mxu0
        %v2068 = vadd.f32 %v1978, %v2067
        %v2069 = vpop.f32.mrf.mxu0
        %v2070 = vadd.f32 %v1978, %v2069
        %2071 = vmatmul.bf16.gmra.mxu0 %v1959
        %v2072 = vpop.f32.mrf.mxu0
        %v2073 = vadd.f32 %v1978, %v2072
        %v2074 = vpop.f32.mrf.mxu0
        %v2075 = vadd.f32 %v1978, %v2074
        %2076 = vdwg.mxu0
        %v2077 = vadd.f32 %v1057, %v2038
        %v2078 = vadd.f32 %v1058, %v2040
        %v2079 = vadd.f32 %v1059, %v2043
        %v2080 = vadd.f32 %v1060, %v2045
        %v2081 = vadd.f32 %v1061, %v2048
        %v2082 = vadd.f32 %v1062, %v2050
        %v2083 = vadd.f32 %v1063, %v2053
        %v2084 = vadd.f32 %v1064, %v2055
        %v2085 = vadd.f32 %v1065, %v2058
        %v2086 = vadd.f32 %v1066, %v2060
        %v2087 = vadd.f32 %v1067, %v2063
        %v2088 = vadd.f32 %v1068, %v2065
        %v2089 = vadd.f32 %v1069, %v2068
        %v2090 = vadd.f32 %v1070, %v2070
        %v2091 = vadd.f32 %v1071, %v2073
        %v2092 = vadd.f32 %v1072, %v2075
        %2093 = vst [vmem:[%s468] sm:$0xff] %v2077
        %2094 = vst [vmem:[%s468 + $0x8] sm:$0xff] %v2078
        %2095 = vst [vmem:[%s468 + $0x10] sm:$0xff] %v2079
        %2096 = vst [vmem:[%s468 + $0x18] sm:$0xff] %v2080
        %2097 = vst [vmem:[%s468 + $0x20] sm:$0xff] %v2081
        %2098 = vst [vmem:[%s468 + $0x28] sm:$0xff] %v2082
        %2099 = vst [vmem:[%s468 + $0x30] sm:$0xff] %v2083
        %2100 = vst [vmem:[%s468 + $0x38] sm:$0xff] %v2084
        %2101 = vst [vmem:[%s468 + $0x40] sm:$0xff] %v2085
        %2102 = vst [vmem:[%s468 + $0x48] sm:$0xff] %v2086
        %2103 = vst [vmem:[%s468 + $0x50] sm:$0xff] %v2087
        %2104 = vst [vmem:[%s468 + $0x58] sm:$0xff] %v2088
        %2105 = vst [vmem:[%s468 + $0x60] sm:$0xff] %v2089
        %2106 = vst [vmem:[%s468 + $0x68] sm:$0xff] %v2090
        %2107 = vst [vmem:[%s468 + $0x70] sm:$0xff] %v2091
        %2108 = vst [vmem:[%s468 + $0x78] sm:$0xff] %v2092
        %s2109 = sand.u32 %s322, 1
        %s2110 = scalar_lea.sflag [#allocation5], %s2109
        %s2111 = sand.u32 %s322, 1
        %s2112 = smul.addr %s2111, 128
        %s2113 = scalar_lea.vmem [#allocation4], %s2112
        // Predicated region
        $region73: #{attn_block_pallas.3} parent=67 // pred_check
          %p2114 = pneg %p332
        $region74: #{attn_block_pallas.3} parent=67 // pred_check_branch
          %2116 = sbr.rel (%p2114) target = $region76
        $region75: #{attn_block_pallas.3} parent=67 // pred_region
          %s2117 = smul.u32 16, %s31
          %2119 = vsyncadd %s2110, 0
          %s2120 = smul.addr %s30, 32
          %s2121 = sadd.s32 %s2117, %s2120
          %s2122 = smul.addr %s2121, 8
          %s2123 = scalar_lea.hbm %s12, %s2122
          %s2124 = sshll.u32 %s2113, 4
          %s2125 = int_to_ptr.vmem [resolvable:$true] %s2124
          %s2126 = sshll.u32 %s2123, 4
          %s2127 = int_to_ptr.hbm [resolvable:$true] %s2126
          %2132 = dma.vmem_to_hbm [thread:$0]  %s2125, 2048, %s2127, %s2110, 128, 128, 8
        $region76: #{attn_block_pallas.3} parent=67 // pred_fallthru
          _
      $region68: #{attn_block_pallas.3} parent=5 // pred_fallthru
        _
      %p2133 = scmp.le.s32.totalorder 2, %s21
      // Predicated region
      $region77: #{attn_block_pallas.3} parent=5 // pred_check
        %p2134 = pneg %p2133
      $region78: #{attn_block_pallas.3} parent=5 // pred_check_branch
        %2136 = sbr.rel (%p2134) target = $region80
      $region79: #{attn_block_pallas.3} parent=5 // pred_region
        %s2137 = ssub.s32 %s21, 2
        // Predicated region
        $region81: #{attn_block_pallas.3} parent=79 // pred_check
          %p2138 = pneg %p338
        $region82: #{attn_block_pallas.3} parent=79 // pred_check_branch
          %2140 = sbr.rel (%p2138) target = $region84
        $region83: #{attn_block_pallas.3} parent=79 // pred_region
          %s2141 = sand.u32 %s323, 1
          %s2142 = scalar_lea.sflag [#allocation5], %s2141
          %s2143 = sand.u32 %s323, 1
          %s2144 = smul.addr %s2143, 128
          %s2145 = scalar_lea.vmem [#allocation4], %s2144
          %2147 = dma.done %s2142, 2048
        $region84: #{attn_block_pallas.3} parent=79 // pred_fallthru
          _
      $region80: #{attn_block_pallas.3} parent=5 // pred_fallthru
        _
    $region6: #{attn_block_pallas.3} parent=1 // loop_footer
      %s25 = sadd.s32 1, %s21
    $region7: #{attn_block_pallas.3} parent=1 // loop_footer_branch
      %20 = sbr.rel target = $region3
    $region8: #{attn_block_pallas.3} parent=1 // loop_exit
      _
    %2148 = vsyncpa [#allocation5], 1
    %s2149 = scalar_lea.sflag [#allocation5], 1
    %2150 = vsyncpa %s2149, 1

</llo_original>
